<compile_context>
chip_gen: v7x
topology: tpu7x:2x2x1
jax: 0.10.0
libtpu: 0.0.40
codegen_flags: <defaults>
</compile_context>

<pallas_src>
import math

import jax
import jax.numpy as jnp
from jax.experimental import pallas as pl
from jax.experimental.pallas import tpu as pltpu


# ------------------------------- pass 1 kernel -------------------------------
# tile layout (C, TB, L): channels on the outer axis, slabs on sublanes,
# sequence length on lanes.
def s4_pass1_kernel(x_ref, tl_ref, vec_ref, aconv_ref, h_ref):
    x = x_ref[0]                           # (C, TB, L) f32
    t_lin = tl_ref[0]                      # (C, TB, 1) f32  (hoisted time_linear)
    gamma = vec_ref[0]                     # (C, 1, 1)
    beta = vec_ref[1]                      # (C, 1, 1)
    dskip = vec_ref[2]                     # (C, 1, 1)

    # s4_in = x + rearrange(time_linear(t), 'b 1 c -> b c 1 1')
    s4_in = x + t_lin

    # LayerNorm over the channel axis (eps = 1e-5), f32 math.
    mean = jnp.mean(s4_in, axis=0, keepdims=True)
    var = jnp.mean((s4_in - mean) ** 2, axis=0, keepdims=True)
    z = (s4_in - mean) * jax.lax.rsqrt(var + 1e-5) * gamma + beta

    # Bidirectional depthwise SSM conv on the MXU: batch dim = channel,
    # contracting dim = s (time-domain equivalent of the rfft/irfft conv).
    y = jnp.einsum(
        "cbs,cls->cbl",
        z.astype(jnp.bfloat16),
        aconv_ref[...],                    # (C, L, L) bf16 Toeplitz
        preferred_element_type=jnp.float32,
    )
    y = y + z * dskip                      # + D * u skip
    # S4 activation; tanh-approx GELU pushes work to the EUP slot.
    h = jax.nn.gelu(y, approximate=True)
    h_ref[0] = h.astype(h_ref.dtype)


# ------------------------------- pass 2 kernel -------------------------------
# tile layout (C, P) with P = TB*L: channels on sublanes, all positions dense
# on lanes -> lane-dense matmuls and unmasked output stores.
def s4_pass2_kernel(x_ref, tl_ref, e_ref, h_ref, wout_ref, w12_ref, vec_ref,
                    o1_ref, o2_ref):
    C = wout_ref.shape[0]
    x = x_ref[0]                                               # (C, P) f32

    # Broadcast the per-slab time embedding to its L lane positions with one
    # tiny MXU matmul against the 0/1 expansion matrix E (TB, P).
    t_b = jnp.dot(tl_ref[0], e_ref[...], preferred_element_type=jnp.float32)
    s4_in = x + t_b

    b_out = vec_ref[:, 0:1]                                    # packed biases
    b1 = vec_ref[:, 1:2]
    b2 = vec_ref[:, 2:3]

    # S4 output_linear + S4Layer residual (dropout = identity).
    out_s4 = (
        jnp.dot(wout_ref[...], h_ref[0], preferred_element_type=jnp.float32)
        + b_out
        + s4_in
    )

    # gate, then the fused out_linear1 / out_linear2 1x1 convs (one matmul).
    g = jnp.tanh(out_s4) * jax.nn.sigmoid(out_s4)
    o12 = jnp.dot(w12_ref[...], g.astype(jnp.bfloat16),
                  preferred_element_type=jnp.float32)          # (2C, P)
    o1_ref[0] = (o12[:C] + b1 + x).astype(o1_ref.dtype)
    o2_ref[0] = (o12[C:] + b2).astype(o2_ref.dtype)


# ------------------------ parameter / kernel setup (glue) ------------------------

def ssm_conv_kernels(key, H, N, L):
    """Generate the (2, H, L) bidirectional SSM conv kernels.

    TODO(synk): the original S4 uses the NPLR/HiPPO SSKernel (Cauchy-kernel
    based, source not provided); we generate a same-shape kernel with a
    diagonal (S4D-Lin, ZOH-discretized) parameterization, deterministically.
    """
    n = N // 2
    k_dt, k_c = jax.random.split(key)
    log_dt = jax.random.uniform(k_dt, (H,)) * (math.log(0.1) - math.log(0.001)) + math.log(0.001)
    dt = jnp.exp(log_dt)                                       # (H,)
    A = -0.5 + 1j * math.pi * jnp.arange(n)                    # (n,)
    Craw = jax.random.normal(k_c, (2, H, n, 2))
    C = (Craw[..., 0] + 1j * Craw[..., 1]) * (0.5 ** 0.5)      # (2, H, n)
    dtA = dt[:, None] * A[None, :]                             # (H, n)
    Ct = C * (jnp.exp(dtA) - 1.0) / A                          # ZOH
    vand = jnp.exp(dtA[..., None] * jnp.arange(L))             # (H, n, L)
    K = 2.0 * jnp.einsum("chn,hnl->chl", Ct, vand).real        # (2, H, L)
    return K[0].astype(jnp.float32), K[1].astype(jnp.float32)


def make_s4_conv_matrix(k_fwd, k_bwd, L):
    # Time-domain equivalent of: pad(k0,(0,L)) + pad(flip(k1),(L,0)); rfft conv; [:L]
    # A[c, l, s] = k_fwd[c, l-s] if s <= l else k_bwd[c, s-l-1]
    li = jnp.arange(L)[:, None]
    si = jnp.arange(L)[None, :]
    diff = li - si                                             # (L, L)
    fwd = jnp.take(k_fwd, jnp.clip(diff, 0, L - 1), axis=1)    # (C, L, L)
    bwd = jnp.take(k_bwd, jnp.clip(-diff - 1, 0, L - 1), axis=1)
    return jnp.where(diff[None] >= 0, fwd, bwd)                # (C, L, L)


def init_params(key, d_model, d_state, L):
    C = d_model
    ks = jax.random.split(key, 10)

    def lin(k, shape, fan_in):
        bound = 1.0 / math.sqrt(fan_in)
        return jax.random.uniform(k, shape, minval=-bound, maxval=bound, dtype=jnp.float32)

    params = dict(
        W_t=lin(ks[0], (C, C), C), b_t=lin(ks[1], (C,), C),                    # nn.Linear
        gamma=jnp.ones((C,), jnp.float32), beta=jnp.zeros((C,), jnp.float32),  # LayerNorm
        D=jax.random.normal(ks[2], (C,), dtype=jnp.float32),                   # S4 skip
        W_out=lin(ks[3], (C, C), C), b_out=lin(ks[4], (C,), C),                # S4 output_linear
        W1=lin(ks[5], (C, C), C), b1=lin(ks[6], (C,), C),                      # out_linear1
        W2=lin(ks[7], (C, C), C), b2=lin(ks[8], (C,), C),                      # out_linear2
    )
    k0, k1 = ssm_conv_kernels(ks[9], C, d_state, L)
    # Toeplitz conv matrix is built ONCE here (not per forward call) and stored
    # in bf16 to halve its HBM/VMEM footprint (v7x has only 64 MiB VMEM/TC).
    params["aconv"] = make_s4_conv_matrix(k0, k1, L).astype(jnp.bfloat16)
    return params


def _choose_tb(bk, L):
    """Slabs per grid step: make the lane dim TB*L >= 256 when possible while
    keeping >= 2 grid steps (v7x megacore) and a bounded VMEM tile."""
    divisors = [d for d in range(1, bk + 1) if bk % d == 0]
    for min_lanes, need_multi in ((256, True), (128, True), (256, False), (128, False)):
        cands = [d for d in divisors
                 if min_lanes <= d * L <= 4096 and (bk // d >= 2 or not need_multi)]
        if cands:
            return min(cands)
    return 1 if L >= 4096 else bk


# ---------------------------------- wrapper ----------------------------------

def s4block_forward(x, t, params):
    """x: (B, C=d_model, K, L); t: (B, 1, C) time embedding."""
    B, C, K, L = x.shape
    BK = B * K
    TB = _choose_tb(BK, L)
    G = BK // TB
    P = TB * L

    f32, bf16 = jnp.float32, jnp.bfloat16

    # ---- wrapper-side layout plumbing (pure XLA, one-time) ----
    # '(b k) c l' slabs, grouped TB per grid step, channels leading per tile.
    x_bk = jnp.transpose(x.astype(f32), (0, 2, 1, 3)).reshape(BK, C, L)
    x4 = jnp.transpose(x_bk.reshape(G, TB, C, L), (0, 2, 1, 3))     # (G, C, TB, L)
    x2 = x4.reshape(G, C, P)                                        # same bytes, 2D view

    # Hoisted time_linear: t_lin = t @ W_t^T + b_t, replicated per k-slab.
    t_lin = t.astype(f32)[:, 0, :] @ params["W_t"].T + params["b_t"]   # (B, C)
    tl_bk = jnp.repeat(t_lin, K, axis=0)                                # (BK, C)
    tl = jnp.transpose(tl_bk.reshape(G, TB, C), (0, 2, 1))              # (G, C, TB)
    tl4 = tl[..., None]                                                 # (G, C, TB, 1)

    # Packed per-channel vectors (one DMA each instead of seven tiny ones).
    vec1 = jnp.stack([params["gamma"], params["beta"], params["D"]]
                     ).astype(f32).reshape(3, C, 1, 1)
    vec2 = jnp.zeros((C, 8), f32)
    vec2 = (vec2.at[:, 0].set(params["b_out"])
                .at[:, 1].set(params["b1"])
                .at[:, 2].set(params["b2"]))

    # bf16 matmul weights; out_linear1/out_linear2 fused into one (2C, C) matmul.
    w_out = params["W_out"].astype(bf16)
    w12 = jnp.concatenate([params["W1"], params["W2"]], axis=0).astype(bf16)
    aconv = params["aconv"]                                             # (C, L, L) bf16

    # 0/1 expansion matrix: slab index -> its L lane positions of the (C, P) tile.
    pidx = jnp.arange(P)[None, :]
    jidx = jnp.arange(TB)[:, None]
    e_mat = ((pidx >= jidx * L) & (pidx < (jidx + 1) * L)).astype(f32)  # (TB, P)

    cparams = pltpu.CompilerParams(
        dimension_semantics=("parallel",),
        vmem_limit_bytes=64 * 1024 * 1024,
    )
    # TODO(synk): on v7x also consider pipeline_mode=pl.Buffered(1) for the
    # constant aconv spec and/or an L-block grid axis if C*L*L no longer fits.

    # ---- pass 1: +t, LayerNorm(C), SSM conv on MXU, D-skip, GELU ----
    h4 = pl.pallas_call(
        s4_pass1_kernel,
        out_shape=jax.ShapeDtypeStruct((G, C, TB, L), bf16),
        grid=(G,),
        in_specs=[
            pl.BlockSpec((1, C, TB, L), lambda g: (g, 0, 0, 0)),   # x slabs
            pl.BlockSpec((1, C, TB, 1), lambda g: (g, 0, 0, 0)),   # hoisted t_lin
            pl.BlockSpec((3, C, 1, 1), lambda g: (0, 0, 0, 0)),    # gamma/beta/D
            pl.BlockSpec((C, L, L), lambda g: (0, 0, 0)),          # Toeplitz (resident)
        ],
        out_specs=pl.BlockSpec((1, C, TB, L), lambda g: (g, 0, 0, 0)),
        compiler_params=cparams,
    )(x4, tl4, vec1, aconv)

    h2 = h4.reshape(G, C, P)   # free change of view in HBM between the passes

    # ---- pass 2: output_linear, residual, gate, fused out_linear1/2 ----
    o1_2, o2_2 = pl.pallas_call(
        s4_pass2_kernel,
        out_shape=(jax.ShapeDtypeStruct((G, C, P), f32),
                   jax.ShapeDtypeStruct((G, C, P), f32)),
        grid=(G,),
        in_specs=[
            pl.BlockSpec((1, C, P), lambda g: (g, 0, 0)),          # x (2D view)
            pl.BlockSpec((1, C, TB), lambda g: (g, 0, 0)),         # hoisted t_lin
            pl.BlockSpec((TB, P), lambda g: (0, 0)),               # expansion matrix
            pl.BlockSpec((1, C, P), lambda g: (g, 0, 0)),          # h from pass 1
            pl.BlockSpec((C, C), lambda g: (0, 0)),                # W_out (bf16)
            pl.BlockSpec((2 * C, C), lambda g: (0, 0)),            # fused W1|W2 (bf16)
            pl.BlockSpec((C, 8), lambda g: (0, 0)),                # packed biases
        ],
        out_specs=(pl.BlockSpec((1, C, P), lambda g: (g, 0, 0)),
                   pl.BlockSpec((1, C, P), lambda g: (g, 0, 0))),
        compiler_params=cparams,
    )(x2, tl, e_mat, h2, w_out, w12, vec2)

    # Back to (B, C, K, L).
    def unview(o):
        o = jnp.transpose(o.reshape(G, C, TB, L), (0, 2, 1, 3)).reshape(B, K, C, L)
        return jnp.transpose(o, (0, 2, 1, 3))

    return unview(o1_2), unview(o2_2)


if __name__ == "__main__":
    d_model = 32          # C
    d_state = 128         # S4 d_state
    B, K, L = 2, 4, 128   # -> 8 slabs, TB=2, grid of 4 parallel steps, 256 lanes

    key = jax.random.PRNGKey(0)
    kx, kt, kp = jax.random.split(key, 3)
    x = jax.random.normal(kx, (B, d_model, K, L), dtype=jnp.float32)   # (b, c, k, l)
    t = jax.random.normal(kt, (B, 1, d_model), dtype=jnp.float32)      # (b, 1, c)
    params = init_params(kp, d_model, d_state, L)

    fwd = jax.jit(s4block_forward)
    out1, out2 = fwd(x, t, params)
    jax.block_until_ready((out1, out2))
    assert out1.shape == (B, d_model, K, L)
    assert out2.shape == (B, d_model, K, L)
    assert bool(jnp.isfinite(out1).all()) and bool(jnp.isfinite(out2).all())
    print("KERNEL_OK")
</pallas_src>

<mosaic_0001>
module attributes {stable_mosaic.version = 11 : i64} {
  func.func @s4_pass1_kernel(%arg0: i32, %arg1: memref<1x32x2x128xf32, #tpu.memory_space<vmem>>, %arg2: memref<1x32x2x1xf32, #tpu.memory_space<vmem>>, %arg3: memref<3x32x1x1xf32, #tpu.memory_space<vmem>>, %arg4: memref<32x128x128xbf16, #tpu.memory_space<vmem>>, %arg5: memref<1x32x2x128xbf16, #tpu.memory_space<vmem>>) attributes {dimension_semantics = [#tpu.dimension_semantics<parallel>], iteration_bounds = array<i64: 4>, scalar_prefetch = 0 : i64, scratch_operands = 0 : i64, tpu.core_type = #tpu.core_type<tc>, window_params = [{transform_indices = @transform_0, window_bounds = array<i64: 1, 32, 2, 128>}, {transform_indices = @transform_1, window_bounds = array<i64: 1, 32, 2, 1>}, {pipeline_mode = #tpu.pipeline_mode<synchronous>, transform_indices = @transform_2, window_bounds = array<i64: 3, 32, 1, 1>}, {pipeline_mode = #tpu.pipeline_mode<synchronous>, transform_indices = @transform_3, window_bounds = array<i64: 32, 128, 128>}, {transform_indices = @transform_4, window_bounds = array<i64: 1, 32, 2, 128>}]} {
    %c0 = arith.constant 0 : index
    %c0_0 = arith.constant 0 : index
    %c0_1 = arith.constant 0 : index
    %c0_2 = arith.constant 0 : index
    %0 = vector.load %arg1[%c0, %c0_0, %c0_1, %c0_2] : memref<1x32x2x128xf32, #tpu.memory_space<vmem>>, vector<1x32x2x128xf32>
    %1 = vector.shape_cast %0 : vector<1x32x2x128xf32> to vector<32x2x128xf32>
    %c0_3 = arith.constant 0 : index
    %c0_4 = arith.constant 0 : index
    %c0_5 = arith.constant 0 : index
    %c0_6 = arith.constant 0 : index
    %2 = vector.load %arg2[%c0_3, %c0_4, %c0_5, %c0_6] : memref<1x32x2x1xf32, #tpu.memory_space<vmem>>, vector<1x32x2x1xf32>
    %3 = vector.shape_cast %2 : vector<1x32x2x1xf32> to vector<32x2x1xf32>
    %c0_7 = arith.constant 0 : index
    %c0_8 = arith.constant 0 : index
    %c0_9 = arith.constant 0 : index
    %c0_10 = arith.constant 0 : index
    %4 = vector.load %arg3[%c0_7, %c0_8, %c0_9, %c0_10] : memref<3x32x1x1xf32, #tpu.memory_space<vmem>>, vector<1x32x1x1xf32>
    %5 = vector.shape_cast %4 : vector<1x32x1x1xf32> to vector<32x1x1xf32>
    %c1 = arith.constant 1 : index
    %c0_11 = arith.constant 0 : index
    %c0_12 = arith.constant 0 : index
    %c0_13 = arith.constant 0 : index
    %6 = vector.load %arg3[%c1, %c0_11, %c0_12, %c0_13] : memref<3x32x1x1xf32, #tpu.memory_space<vmem>>, vector<1x32x1x1xf32>
    %7 = vector.shape_cast %6 : vector<1x32x1x1xf32> to vector<32x1x1xf32>
    %c2 = arith.constant 2 : index
    %c0_14 = arith.constant 0 : index
    %c0_15 = arith.constant 0 : index
    %c0_16 = arith.constant 0 : index
    %8 = vector.load %arg3[%c2, %c0_14, %c0_15, %c0_16] : memref<3x32x1x1xf32, #tpu.memory_space<vmem>>, vector<1x32x1x1xf32>
    %9 = vector.shape_cast %8 : vector<1x32x1x1xf32> to vector<32x1x1xf32>
    %10 = vector.broadcast %3 : vector<32x2x1xf32> to vector<32x2x128xf32>
    %11 = arith.addf %1, %10 : vector<32x2x128xf32>
    %cst = arith.constant dense<0.000000e+00> : vector<2x128xf32>
    %12 = vector.multi_reduction <add>, %11, %cst [0] : vector<32x2x128xf32> to vector<2x128xf32>
    %13 = vector.shape_cast %12 : vector<2x128xf32> to vector<1x2x128xf32>
    %cst_17 = arith.constant 3.200000e+01 : f32
    %14 = vector.broadcast %cst_17 : f32 to vector<1x2x128xf32>
    %15 = arith.divf %13, %14 : vector<1x2x128xf32>
    %16 = vector.broadcast %15 : vector<1x2x128xf32> to vector<32x2x128xf32>
    %17 = arith.subf %11, %16 : vector<32x2x128xf32>
    %18 = arith.mulf %17, %17 : vector<32x2x128xf32>
    %cst_18 = arith.constant dense<0.000000e+00> : vector<2x128xf32>
    %19 = vector.multi_reduction <add>, %18, %cst_18 [0] : vector<32x2x128xf32> to vector<2x128xf32>
    %20 = vector.shape_cast %19 : vector<2x128xf32> to vector<1x2x128xf32>
    %cst_19 = arith.constant 3.200000e+01 : f32
    %21 = vector.broadcast %cst_19 : f32 to vector<1x2x128xf32>
    %22 = arith.divf %20, %21 : vector<1x2x128xf32>
    %23 = vector.broadcast %15 : vector<1x2x128xf32> to vector<32x2x128xf32>
    %24 = arith.subf %11, %23 : vector<32x2x128xf32>
    %cst_20 = arith.constant 9.99999974E-6 : f32
    %25 = vector.broadcast %cst_20 : f32 to vector<1x2x128xf32>
    %26 = arith.addf %22, %25 : vector<1x2x128xf32>
    %27 = math.rsqrt %26 : vector<1x2x128xf32>
    %28 = vector.broadcast %27 : vector<1x2x128xf32> to vector<32x2x128xf32>
    %29 = arith.mulf %24, %28 : vector<32x2x128xf32>
    %30 = vector.broadcast %5 : vector<32x1x1xf32> to vector<32x2x128xf32>
    %31 = arith.mulf %29, %30 : vector<32x2x128xf32>
    %32 = vector.broadcast %7 : vector<32x1x1xf32> to vector<32x2x128xf32>
    %33 = arith.addf %31, %32 : vector<32x2x128xf32>
    %34 = arith.truncf %33 : vector<32x2x128xf32> to vector<32x2x128xbf16>
    %c0_21 = arith.constant 0 : index
    %c0_22 = arith.constant 0 : index
    %c0_23 = arith.constant 0 : index
    %35 = vector.load %arg4[%c0_21, %c0_22, %c0_23] : memref<32x128x128xbf16, #tpu.memory_space<vmem>>, vector<32x128x128xbf16>
    "tpu.trace_start"() <{level = 10 : i32, message = "cbs,cls->cbl"}> : () -> ()
    %cst_24 = arith.constant dense<0.000000e+00> : vector<32x2x128xf32>
    %36 = tpu.matmul %34, %35, %cst_24 {dimension_numbers = #tpu.dot_dimension_numbers<[2], [2], [1], [1], [0, 0, 0, 1, 1, 1], [0], [0]>} : vector<32x2x128xbf16>, vector<32x128x128xbf16>, vector<32x2x128xf32> -> vector<32x2x128xf32>
    "tpu.trace_stop"() : () -> ()
    %37 = vector.broadcast %9 : vector<32x1x1xf32> to vector<32x2x128xf32>
    %38 = arith.mulf %33, %37 : vector<32x2x128xf32>
    %39 = arith.addf %36, %38 : vector<32x2x128xf32>
    %40 = arith.mulf %39, %39 : vector<32x2x128xf32>
    %41 = arith.mulf %39, %40 : vector<32x2x128xf32>
    %cst_25 = arith.constant 4.471500e-02 : f32
    %42 = vector.broadcast %cst_25 : f32 to vector<32x2x128xf32>
    %43 = arith.mulf %42, %41 : vector<32x2x128xf32>
    %44 = arith.addf %39, %43 : vector<32x2x128xf32>
    %cst_26 = arith.constant 0.797884583 : f32
    %45 = vector.broadcast %cst_26 : f32 to vector<32x2x128xf32>
    %46 = arith.mulf %45, %44 : vector<32x2x128xf32>
    %47 = math.tanh %46 : vector<32x2x128xf32>
    %cst_27 = arith.constant 1.000000e+00 : f32
    %48 = vector.broadcast %cst_27 : f32 to vector<32x2x128xf32>
    %49 = arith.addf %48, %47 : vector<32x2x128xf32>
    %cst_28 = arith.constant 5.000000e-01 : f32
    %50 = vector.broadcast %cst_28 : f32 to vector<32x2x128xf32>
    %51 = arith.mulf %50, %49 : vector<32x2x128xf32>
    %52 = arith.mulf %39, %51 : vector<32x2x128xf32>
    %53 = arith.truncf %52 : vector<32x2x128xf32> to vector<32x2x128xbf16>
    %c0_29 = arith.constant 0 : index
    %c0_30 = arith.constant 0 : index
    %c0_31 = arith.constant 0 : index
    %c0_32 = arith.constant 0 : index
    %54 = vector.load %arg5[%c0_29, %c0_30, %c0_31, %c0_32] : memref<1x32x2x128xbf16, #tpu.memory_space<vmem>>, vector<1x32x2x128xbf16>
    %55 = vector.shape_cast %54 : vector<1x32x2x128xbf16> to vector<32x2x128xbf16>
    %56 = vector.shape_cast %53 : vector<32x2x128xbf16> to vector<1x32x2x128xbf16>
    tpu.vector_store %arg5[%c0_29, %c0_30, %c0_31, %c0_32], %56 {strides = array<i32>} : memref<1x32x2x128xbf16, #tpu.memory_space<vmem>>, vector<1x32x2x128xbf16>,
    return
  }
  func.func @transform_0(%arg0: i32) -> (i32, i32, i32, i32) {
    %c0_i32 = arith.constant 0 : i32
    %c0_i32_0 = arith.constant 0 : i32
    %c0_i32_1 = arith.constant 0 : i32
    %c0_i32_2 = arith.constant 0 : i32
    return %arg0, %c0_i32, %c0_i32_0, %c0_i32_1 : i32, i32, i32, i32
  }
  func.func @transform_1(%arg0: i32) -> (i32, i32, i32, i32) {
    %c0_i32 = arith.constant 0 : i32
    %c0_i32_0 = arith.constant 0 : i32
    %c0_i32_1 = arith.constant 0 : i32
    %c0_i32_2 = arith.constant 0 : i32
    return %arg0, %c0_i32, %c0_i32_0, %c0_i32_1 : i32, i32, i32, i32
  }
  func.func @transform_2(%arg0: i32) -> (i32, i32, i32, i32) {
    %c0_i32 = arith.constant 0 : i32
    %c0_i32_0 = arith.constant 0 : i32
    %c0_i32_1 = arith.constant 0 : i32
    %c0_i32_2 = arith.constant 0 : i32
    %c0_i32_3 = arith.constant 0 : i32
    return %c0_i32, %c0_i32_0, %c0_i32_1, %c0_i32_2 : i32, i32, i32, i32
  }
  func.func @transform_3(%arg0: i32) -> (i32, i32, i32) {
    %c0_i32 = arith.constant 0 : i32
    %c0_i32_0 = arith.constant 0 : i32
    %c0_i32_1 = arith.constant 0 : i32
    %c0_i32_2 = arith.constant 0 : i32
    return %c0_i32, %c0_i32_0, %c0_i32_1 : i32, i32, i32
  }
  func.func @transform_4(%arg0: i32) -> (i32, i32, i32, i32) {
    %c0_i32 = arith.constant 0 : i32
    %c0_i32_0 = arith.constant 0 : i32
    %c0_i32_1 = arith.constant 0 : i32
    %c0_i32_2 = arith.constant 0 : i32
    return %arg0, %c0_i32, %c0_i32_0, %c0_i32_1 : i32, i32, i32, i32
  }
}

module attributes {stable_mosaic.version = 11 : i64} {
  func.func @s4_pass2_kernel(%arg0: i32, %arg1: memref<1x32x256xf32, #tpu.memory_space<vmem>>, %arg2: memref<1x32x2xf32, #tpu.memory_space<vmem>>, %arg3: memref<2x256xf32, #tpu.memory_space<vmem>>, %arg4: memref<1x32x256xbf16, #tpu.memory_space<vmem>>, %arg5: memref<32x32xbf16, #tpu.memory_space<vmem>>, %arg6: memref<64x32xbf16, #tpu.memory_space<vmem>>, %arg7: memref<32x8xf32, #tpu.memory_space<vmem>>, %arg8: memref<1x32x256xf32, #tpu.memory_space<vmem>>, %arg9: memref<1x32x256xf32, #tpu.memory_space<vmem>>) attributes {dimension_semantics = [#tpu.dimension_semantics<parallel>], iteration_bounds = array<i64: 4>, scalar_prefetch = 0 : i64, scratch_operands = 0 : i64, tpu.core_type = #tpu.core_type<tc>, window_params = [{transform_indices = @transform_0, window_bounds = array<i64: 1, 32, 256>}, {transform_indices = @transform_1, window_bounds = array<i64: 1, 32, 2>}, {pipeline_mode = #tpu.pipeline_mode<synchronous>, transform_indices = @transform_2, window_bounds = array<i64: 2, 256>}, {transform_indices = @transform_3, window_bounds = array<i64: 1, 32, 256>}, {pipeline_mode = #tpu.pipeline_mode<synchronous>, transform_indices = @transform_4, window_bounds = array<i64: 32, 32>}, {pipeline_mode = #tpu.pipeline_mode<synchronous>, transform_indices = @transform_5, window_bounds = array<i64: 64, 32>}, {pipeline_mode = #tpu.pipeline_mode<synchronous>, transform_indices = @transform_6, window_bounds = array<i64: 32, 8>}, {transform_indices = @transform_7, window_bounds = array<i64: 1, 32, 256>}, {transform_indices = @transform_8, window_bounds = array<i64: 1, 32, 256>}]} {
    %c0 = arith.constant 0 : index
    %c0_0 = arith.constant 0 : index
    %c0_1 = arith.constant 0 : index
    %0 = vector.load %arg1[%c0, %c0_0, %c0_1] : memref<1x32x256xf32, #tpu.memory_space<vmem>>, vector<1x32x256xf32>
    %1 = vector.shape_cast %0 : vector<1x32x256xf32> to vector<32x256xf32>
    %c0_2 = arith.constant 0 : index
    %c0_3 = arith.constant 0 : index
    %c0_4 = arith.constant 0 : index
    %2 = vector.load %arg2[%c0_2, %c0_3, %c0_4] : memref<1x32x2xf32, #tpu.memory_space<vmem>>, vector<1x32x2xf32>
    %3 = vector.shape_cast %2 : vector<1x32x2xf32> to vector<32x2xf32>
    %c0_5 = arith.constant 0 : index
    %c0_6 = arith.constant 0 : index
    %4 = vector.load %arg3[%c0_5, %c0_6] : memref<2x256xf32, #tpu.memory_space<vmem>>, vector<2x256xf32>
    %cst = arith.constant dense<0.000000e+00> : vector<32x256xf32>
    %5 = tpu.matmul %3, %4, %cst {dimension_numbers = #tpu.dot_dimension_numbers<[1], [0], [0], [1], [0, 0, 1, 1], [], []>} : vector<32x2xf32>, vector<2x256xf32>, vector<32x256xf32> -> vector<32x256xf32>
    %6 = arith.addf %1, %5 : vector<32x256xf32>
    %c0_7 = arith.constant 0 : index
    %c0_8 = arith.constant 0 : index
    %7 = vector.load %arg7[%c0_7, %c0_8] : memref<32x8xf32, #tpu.memory_space<vmem>>, vector<32x1xf32>
    %c0_9 = arith.constant 0 : index
    %c1 = arith.constant 1 : index
    %8 = vector.load %arg7[%c0_9, %c1] : memref<32x8xf32, #tpu.memory_space<vmem>>, vector<32x1xf32>
    %c0_10 = arith.constant 0 : index
    %c2 = arith.constant 2 : index
    %9 = vector.load %arg7[%c0_10, %c2] : memref<32x8xf32, #tpu.memory_space<vmem>>, vector<32x1xf32>
    %c0_11 = arith.constant 0 : index
    %c0_12 = arith.constant 0 : index
    %10 = vector.load %arg5[%c0_11, %c0_12] : memref<32x32xbf16, #tpu.memory_space<vmem>>, vector<32x32xbf16>
    %c0_13 = arith.constant 0 : index
    %c0_14 = arith.constant 0 : index
    %c0_15 = arith.constant 0 : index
    %11 = vector.load %arg4[%c0_13, %c0_14, %c0_15] : memref<1x32x256xbf16, #tpu.memory_space<vmem>>, vector<1x32x256xbf16>
    %12 = vector.shape_cast %11 : vector<1x32x256xbf16> to vector<32x256xbf16>
    %cst_16 = arith.constant dense<0.000000e+00> : vector<32x256xf32>
    %13 = tpu.matmul %10, %12, %cst_16 {dimension_numbers = #tpu.dot_dimension_numbers<[1], [0], [0], [1], [0, 0, 1, 1], [], []>} : vector<32x32xbf16>, vector<32x256xbf16>, vector<32x256xf32> -> vector<32x256xf32>
    %14 = vector.broadcast %7 : vector<32x1xf32> to vector<32x256xf32>
    %15 = arith.addf %13, %14 : vector<32x256xf32>
    %16 = arith.addf %15, %6 : vector<32x256xf32>
    %17 = math.tanh %16 : vector<32x256xf32>
    %18 = arith.negf %16 : vector<32x256xf32>
    %19 = math.exp %18 : vector<32x256xf32>
    %cst_17 = arith.constant 1.000000e+00 : f32
    %20 = vector.broadcast %cst_17 : f32 to vector<32x256xf32>
    %21 = arith.addf %20, %19 : vector<32x256xf32>
    %22 = arith.divf %20, %21 : vector<32x256xf32>
    %23 = arith.mulf %17, %22 : vector<32x256xf32>
    %c0_18 = arith.constant 0 : index
    %c0_19 = arith.constant 0 : index
    %24 = vector.load %arg6[%c0_18, %c0_19] : memref<64x32xbf16, #tpu.memory_space<vmem>>, vector<64x32xbf16>
    %25 = arith.truncf %23 : vector<32x256xf32> to vector<32x256xbf16>
    %cst_20 = arith.constant dense<0.000000e+00> : vector<64x256xf32>
    %26 = tpu.matmul %24, %25, %cst_20 {dimension_numbers = #tpu.dot_dimension_numbers<[1], [0], [0], [1], [0, 0, 1, 1], [], []>} : vector<64x32xbf16>, vector<32x256xbf16>, vector<64x256xf32> -> vector<64x256xf32>
    %27 = vector.extract_strided_slice %26 {offsets = [0, 0], sizes = [32, 256], strides = [1, 1]} : vector<64x256xf32> to vector<32x256xf32>
    %28 = vector.broadcast %8 : vector<32x1xf32> to vector<32x256xf32>
    %29 = arith.addf %27, %28 : vector<32x256xf32>
    %30 = arith.addf %29, %1 : vector<32x256xf32>
    %c0_21 = arith.constant 0 : index
    %c0_22 = arith.constant 0 : index
    %c0_23 = arith.constant 0 : index
    %31 = vector.load %arg8[%c0_21, %c0_22, %c0_23] : memref<1x32x256xf32, #tpu.memory_space<vmem>>, vector<1x32x256xf32>
    %32 = vector.shape_cast %31 : vector<1x32x256xf32> to vector<32x256xf32>
    %33 = vector.shape_cast %30 : vector<32x256xf32> to vector<1x32x256xf32>
    tpu.vector_store %arg8[%c0_21, %c0_22, %c0_23], %33 {strides = array<i32>} : memref<1x32x256xf32, #tpu.memory_space<vmem>>, vector<1x32x256xf32>,
    %34 = vector.extract_strided_slice %26 {offsets = [32, 0], sizes = [32, 256], strides = [1, 1]} : vector<64x256xf32> to vector<32x256xf32>
    %35 = vector.broadcast %9 : vector<32x1xf32> to vector<32x256xf32>
    %36 = arith.addf %34, %35 : vector<32x256xf32>
    %c0_24 = arith.constant 0 : index
    %c0_25 = arith.constant 0 : index
    %c0_26 = arith.constant 0 : index
    %37 = vector.load %arg9[%c0_24, %c0_25, %c0_26] : memref<1x32x256xf32, #tpu.memory_space<vmem>>, vector<1x32x256xf32>
    %38 = vector.shape_cast %37 : vector<1x32x256xf32> to vector<32x256xf32>
    %39 = vector.shape_cast %36 : vector<32x256xf32> to vector<1x32x256xf32>
    tpu.vector_store %arg9[%c0_24, %c0_25, %c0_26], %39 {strides = array<i32>} : memref<1x32x256xf32, #tpu.memory_space<vmem>>, vector<1x32x256xf32>,
    return
  }
  func.func @transform_0(%arg0: i32) -> (i32, i32, i32) {
    %c0_i32 = arith.constant 0 : i32
    %c0_i32_0 = arith.constant 0 : i32
    %c0_i32_1 = arith.constant 0 : i32
    return %arg0, %c0_i32, %c0_i32_0 : i32, i32, i32
  }
  func.func @transform_1(%arg0: i32) -> (i32, i32, i32) {
    %c0_i32 = arith.constant 0 : i32
    %c0_i32_0 = arith.constant 0 : i32
    %c0_i32_1 = arith.constant 0 : i32
    return %arg0, %c0_i32, %c0_i32_0 : i32, i32, i32
  }
  func.func @transform_2(%arg0: i32) -> (i32, i32) {
    %c0_i32 = arith.constant 0 : i32
    %c0_i32_0 = arith.constant 0 : i32
    %c0_i32_1 = arith.constant 0 : i32
    return %c0_i32, %c0_i32_0 : i32, i32
  }
  func.func @transform_3(%arg0: i32) -> (i32, i32, i32) {
    %c0_i32 = arith.constant 0 : i32
    %c0_i32_0 = arith.constant 0 : i32
    %c0_i32_1 = arith.constant 0 : i32
    return %arg0, %c0_i32, %c0_i32_0 : i32, i32, i32
  }
  func.func @transform_4(%arg0: i32) -> (i32, i32) {
    %c0_i32 = arith.constant 0 : i32
    %c0_i32_0 = arith.constant 0 : i32
    %c0_i32_1 = arith.constant 0 : i32
    return %c0_i32, %c0_i32_0 : i32, i32
  }
  func.func @transform_5(%arg0: i32) -> (i32, i32) {
    %c0_i32 = arith.constant 0 : i32
    %c0_i32_0 = arith.constant 0 : i32
    %c0_i32_1 = arith.constant 0 : i32
    return %c0_i32, %c0_i32_0 : i32, i32
  }
  func.func @transform_6(%arg0: i32) -> (i32, i32) {
    %c0_i32 = arith.constant 0 : i32
    %c0_i32_0 = arith.constant 0 : i32
    %c0_i32_1 = arith.constant 0 : i32
    return %c0_i32, %c0_i32_0 : i32, i32
  }
  func.func @transform_7(%arg0: i32) -> (i32, i32, i32) {
    %c0_i32 = arith.constant 0 : i32
    %c0_i32_0 = arith.constant 0 : i32
    %c0_i32_1 = arith.constant 0 : i32
    return %arg0, %c0_i32, %c0_i32_0 : i32, i32, i32
  }
  func.func @transform_8(%arg0: i32) -> (i32, i32, i32) {
    %c0_i32 = arith.constant 0 : i32
    %c0_i32_0 = arith.constant 0 : i32
    %c0_i32_1 = arith.constant 0 : i32
    return %arg0, %c0_i32, %c0_i32_0 : i32, i32, i32
  }
}

</mosaic_0001>

<llo_original>
// kernel: s4block_forward.3
$region0: #{s4block_forward.3}
  #allocation0 [shape = 'u32[]', space=smem, size = 0x4, offset = 0x4, fixed_abs, tag = 'smem constant byte address 0x4 - core index']
  #allocation1 [shape = 'u32[144,128]{1,0:T(1,128)}', space=vmem, size = 0x12000, scoped, tag = 'internal scratch']
  %s0 = inlined_call_operand.hbm [shape: f32[4,32,256], index: 0, kind: input, shape index: {}]
  %s1 = inlined_call_operand.hbm [shape: f32[4,32,2], index: 1, kind: input, shape index: {}]
  %s2 = inlined_call_operand.hbm [shape: f32[2,256], index: 2, kind: input, shape index: {}]
  %s3 = inlined_call_operand.hbm [shape: bf16[4,32,256], index: 3, kind: input, shape index: {}]
  %s4 = inlined_call_operand.hbm [shape: bf16[32,32], index: 4, kind: input, shape index: {}]
  %s5 = inlined_call_operand.hbm [shape: bf16[64,32], index: 5, kind: input, shape index: {}]
  %s6 = inlined_call_operand.hbm [shape: f32[32,8], index: 6, kind: input, shape index: {}]
  %s7 = inlined_call_operand.hbm [shape: f32[4,32,256], index: 7, kind: output, shape index: {0}]
  %s8 = inlined_call_operand.hbm [shape: f32[4,32,256], index: 8, kind: output, shape index: {1}]
  %9 = xla_tuple %s7, %s8
  %s10 = sld [smem:[#allocation0]]
  $region97: #{s4block_forward.3} parent=0
    _
  %s12 = ssub.s32 1, %s10
  %s13 = scalar_select 0, %s12, %s10
  $region1: #{s4block_forward.3} parent=0
    #allocation2 [shape = 'u8[65536]{0}', space=vmem, size = 0x10000, scoped, tag = 'input window, operand 0']
    #allocation3 [shape = 's32[2]{0}', space=sflag, size = 0x8, scoped, tag = 'scoped memory for s4block_forward.3']
    #allocation4 [shape = 's32[2]{0}', space=sflag, size = 0x8, scoped, tag = 'scoped memory for s4block_forward.3']
    #allocation5 [shape = 'u8[32768]{0}', space=vmem, size = 0x8000, scoped, tag = 'input window, operand 1']
    #allocation6 [shape = 's32[2]{0}', space=sflag, size = 0x8, scoped, tag = 'scoped memory for s4block_forward.3']
    #allocation7 [shape = 'u8[2048]{0}', space=vmem, size = 0x800, scoped, tag = 'input window, operand 2, single buffered']
    #allocation8 [shape = 'u8[32768]{0}', space=vmem, size = 0x8000, scoped, tag = 'input window, operand 3']
    #allocation9 [shape = 's32[2]{0}', space=sflag, size = 0x8, scoped, tag = 'scoped memory for s4block_forward.3']
    #allocation10 [shape = 'u8[8192]{0}', space=vmem, size = 0x2000, scoped, tag = 'input window, operand 4, single buffered']
    #allocation11 [shape = 'u8[16384]{0}', space=vmem, size = 0x4000, scoped, tag = 'input window, operand 5, single buffered']
    #allocation12 [shape = 's32[1]{0}', space=sflag, size = 0x4, scoped, tag = 'scoped memory for s4block_forward.3']
    #allocation13 [shape = 'u8[16384]{0}', space=vmem, size = 0x4000, scoped, tag = 'input window, operand 6, single buffered']
    #allocation14 [shape = 'u8[65536]{0}', space=vmem, size = 0x10000, scoped, tag = 'output window, operand 0']
    #allocation15 [shape = 'u8[65536]{0}', space=vmem, size = 0x10000, scoped, tag = 'output window, operand 1']
    #allocation16 [shape = 's32[2]{0}', space=sflag, size = 0x8, scoped, tag = 'scoped memory for s4block_forward.3']
    %14 = vsyncpa [#allocation3], 0
    %s15 = scalar_lea.sflag [#allocation3], 1
    %16 = vsyncpa %s15, 0
    %17 = vsyncpa [#allocation6], 0
    %s18 = scalar_lea.sflag [#allocation6], 1
    %19 = vsyncpa %s18, 0
    %20 = vsyncpa [#allocation9], 0
    %s21 = scalar_lea.sflag [#allocation9], 1
    %22 = vsyncpa %s21, 0
    %23 = vsyncpa [#allocation12], 0
    %24 = vsyncpa [#allocation4], 0
    %s25 = scalar_lea.sflag [#allocation4], 1
    %26 = vsyncpa %s25, 0
    %27 = vsyncpa [#allocation16], 0
    %s28 = scalar_lea.sflag [#allocation16], 1
    %29 = vsyncpa %s28, 0
    loop: start=0, step=1, limit=6
    $region2: #{s4block_forward.3} parent=1 // loop_pre_header
      _
    $region3: #{s4block_forward.3} parent=1 // loop_header
      %s31 = sphi 0, %s35
      %p32 = scmp.ge.s32.totalorder %s31, 6
      %s41 = sphi 0, %s43
      %s44 = sphi 0, %s41
      %s45 = sphi 0, %s44
      %s61 = sphi 0, %s45
      %s67 = sphi 0, %s69
      %s70 = sphi 0, %s67
      %s71 = sphi 0, %s70
      %s87 = sphi 0, %s71
      %s91 = sphi 0, %s91
      %s93 = sphi 0, %s91
      %s94 = sphi 0, %s93
      %s108 = sphi 0, %s94
      %s114 = sphi 0, %s116
      %s117 = sphi 0, %s114
      %s118 = sphi 0, %s117
      %s134 = sphi 0, %s118
      %s138 = sphi 0, %s138
      %s140 = sphi 0, %s138
      %s141 = sphi 0, %s140
      %s155 = sphi 0, %s141
      %s159 = sphi 0, %s159
      %s161 = sphi 0, %s159
      %s162 = sphi 0, %s161
      %s176 = sphi 0, %s162
      %s180 = sphi 0, %s180
      %s182 = sphi 0, %s180
      %s183 = sphi 0, %s182
      %s197 = sphi 0, %s183
      %s203 = sphi 0, %s205
      %s206 = sphi 0, %s203
      %s207 = sphi 0, %s206
      %s223 = sphi 0, %s207
      %s229 = sphi 0, %s231
      %s232 = sphi 0, %s229
      %s233 = sphi 0, %s232
      %s249 = sphi 0, %s233
    $region4: #{s4block_forward.3} parent=1 // loop_header_branch
      %34 = sbr.rel (%p32) target = $region8
    $region5: #{s4block_forward.3} parent=1 // loop_body
      %s36 = ssub.s32 %s31, 1
      %s37 = ssub.s32 %s31, 2
      %s38 = sadd.s32 %s31, 1
      %s39 = ssub.s32 %s31, %s38
      %p40 = scmp.eq.s32.totalorder %s39, 0
      %s42 = sadd.s32 %s41, 1
      %s43 = scalar_select %p40, %s41, %s42
      %p46 = pneg %p40
      %p47 = scmp.eq.s32.totalorder %s31, 3
      %p48 = por %p46, %p47
      %p49 = scmp.ne.s32.totalorder %s41, %s44
      %p50 = scmp.eq.s32.totalorder %s31, 0
      %p51 = por %p49, %p50
      %p52 = scmp.ne.s32.totalorder %s41, %s44
      %p53 = scmp.eq.s32.totalorder %s36, 3
      %p54 = por %p52, %p53
      %p55 = scmp.ne.s32.totalorder %s44, %s45
      %p56 = scmp.eq.s32.totalorder %s36, 0
      %p57 = por %p55, %p56
      %p58 = scmp.ne.s32.totalorder %s44, %s45
      %p59 = scmp.eq.s32.totalorder %s37, 3
      %p60 = por %p58, %p59
      %p62 = scmp.ne.s32.totalorder %s45, %s61
      %p63 = scmp.eq.s32.totalorder %s37, 0
      %p64 = por %p62, %p63
      %s65 = ssub.s32 %s31, %s38
      %p66 = scmp.eq.s32.totalorder %s65, 0
      %s68 = sadd.s32 %s67, 1
      %s69 = scalar_select %p66, %s67, %s68
      %p72 = pneg %p66
      %p73 = scmp.eq.s32.totalorder %s31, 3
      %p74 = por %p72, %p73
      %p75 = scmp.ne.s32.totalorder %s67, %s70
      %p76 = scmp.eq.s32.totalorder %s31, 0
      %p77 = por %p75, %p76
      %p78 = scmp.ne.s32.totalorder %s67, %s70
      %p79 = scmp.eq.s32.totalorder %s36, 3
      %p80 = por %p78, %p79
      %p81 = scmp.ne.s32.totalorder %s70, %s71
      %p82 = scmp.eq.s32.totalorder %s36, 0
      %p83 = por %p81, %p82
      %p84 = scmp.ne.s32.totalorder %s70, %s71
      %p85 = scmp.eq.s32.totalorder %s37, 3
      %p86 = por %p84, %p85
      %p88 = scmp.ne.s32.totalorder %s71, %s87
      %p89 = scmp.eq.s32.totalorder %s37, 0
      %p90 = por %p88, %p89
      %s92 = sadd.s32 %s91, 1
      %p95 = scmp.eq.s32.totalorder %s31, 3
      %p96 = scmp.ne.s32.totalorder %s91, %s93
      %p97 = scmp.eq.s32.totalorder %s31, 0
      %p98 = por %p96, %p97
      %p99 = scmp.ne.s32.totalorder %s91, %s93
      %p100 = scmp.eq.s32.totalorder %s36, 3
      %p101 = por %p99, %p100
      %p102 = scmp.ne.s32.totalorder %s93, %s94
      %p103 = scmp.eq.s32.totalorder %s36, 0
      %p104 = por %p102, %p103
      %p105 = scmp.ne.s32.totalorder %s93, %s94
      %p106 = scmp.eq.s32.totalorder %s37, 3
      %p107 = por %p105, %p106
      %p109 = scmp.ne.s32.totalorder %s94, %s108
      %p110 = scmp.eq.s32.totalorder %s37, 0
      %p111 = por %p109, %p110
      %s112 = ssub.s32 %s31, %s38
      %p113 = scmp.eq.s32.totalorder %s112, 0
      %s115 = sadd.s32 %s114, 1
      %s116 = scalar_select %p113, %s114, %s115
      %p119 = pneg %p113
      %p120 = scmp.eq.s32.totalorder %s31, 3
      %p121 = por %p119, %p120
      %p122 = scmp.ne.s32.totalorder %s114, %s117
      %p123 = scmp.eq.s32.totalorder %s31, 0
      %p124 = por %p122, %p123
      %p125 = scmp.ne.s32.totalorder %s114, %s117
      %p126 = scmp.eq.s32.totalorder %s36, 3
      %p127 = por %p125, %p126
      %p128 = scmp.ne.s32.totalorder %s117, %s118
      %p129 = scmp.eq.s32.totalorder %s36, 0
      %p130 = por %p128, %p129
      %p131 = scmp.ne.s32.totalorder %s117, %s118
      %p132 = scmp.eq.s32.totalorder %s37, 3
      %p133 = por %p131, %p132
      %p135 = scmp.ne.s32.totalorder %s118, %s134
      %p136 = scmp.eq.s32.totalorder %s37, 0
      %p137 = por %p135, %p136
      %s139 = sadd.s32 %s138, 1
      %p142 = scmp.eq.s32.totalorder %s31, 3
      %p143 = scmp.ne.s32.totalorder %s138, %s140
      %p144 = scmp.eq.s32.totalorder %s31, 0
      %p145 = por %p143, %p144
      %p146 = scmp.ne.s32.totalorder %s138, %s140
      %p147 = scmp.eq.s32.totalorder %s36, 3
      %p148 = por %p146, %p147
      %p149 = scmp.ne.s32.totalorder %s140, %s141
      %p150 = scmp.eq.s32.totalorder %s36, 0
      %p151 = por %p149, %p150
      %p152 = scmp.ne.s32.totalorder %s140, %s141
      %p153 = scmp.eq.s32.totalorder %s37, 3
      %p154 = por %p152, %p153
      %p156 = scmp.ne.s32.totalorder %s141, %s155
      %p157 = scmp.eq.s32.totalorder %s37, 0
      %p158 = por %p156, %p157
      %s160 = sadd.s32 %s159, 1
      %p163 = scmp.eq.s32.totalorder %s31, 3
      %p164 = scmp.ne.s32.totalorder %s159, %s161
      %p165 = scmp.eq.s32.totalorder %s31, 0
      %p166 = por %p164, %p165
      %p167 = scmp.ne.s32.totalorder %s159, %s161
      %p168 = scmp.eq.s32.totalorder %s36, 3
      %p169 = por %p167, %p168
      %p170 = scmp.ne.s32.totalorder %s161, %s162
      %p171 = scmp.eq.s32.totalorder %s36, 0
      %p172 = por %p170, %p171
      %p173 = scmp.ne.s32.totalorder %s161, %s162
      %p174 = scmp.eq.s32.totalorder %s37, 3
      %p175 = por %p173, %p174
      %p177 = scmp.ne.s32.totalorder %s162, %s176
      %p178 = scmp.eq.s32.totalorder %s37, 0
      %p179 = por %p177, %p178
      %s181 = sadd.s32 %s180, 1
      %p184 = scmp.eq.s32.totalorder %s31, 3
      %p185 = scmp.ne.s32.totalorder %s180, %s182
      %p186 = scmp.eq.s32.totalorder %s31, 0
      %p187 = por %p185, %p186
      %p188 = scmp.ne.s32.totalorder %s180, %s182
      %p189 = scmp.eq.s32.totalorder %s36, 3
      %p190 = por %p188, %p189
      %p191 = scmp.ne.s32.totalorder %s182, %s183
      %p192 = scmp.eq.s32.totalorder %s36, 0
      %p193 = por %p191, %p192
      %p194 = scmp.ne.s32.totalorder %s182, %s183
      %p195 = scmp.eq.s32.totalorder %s37, 3
      %p196 = por %p194, %p195
      %p198 = scmp.ne.s32.totalorder %s183, %s197
      %p199 = scmp.eq.s32.totalorder %s37, 0
      %p200 = por %p198, %p199
      %s201 = ssub.s32 %s31, %s38
      %p202 = scmp.eq.s32.totalorder %s201, 0
      %s204 = sadd.s32 %s203, 1
      %s205 = scalar_select %p202, %s203, %s204
      %p208 = pneg %p202
      %p209 = scmp.eq.s32.totalorder %s31, 3
      %p210 = por %p208, %p209
      %p211 = scmp.ne.s32.totalorder %s203, %s206
      %p212 = scmp.eq.s32.totalorder %s31, 0
      %p213 = por %p211, %p212
      %p214 = scmp.ne.s32.totalorder %s203, %s206
      %p215 = scmp.eq.s32.totalorder %s36, 3
      %p216 = por %p214, %p215
      %p217 = scmp.ne.s32.totalorder %s206, %s207
      %p218 = scmp.eq.s32.totalorder %s36, 0
      %p219 = por %p217, %p218
      %p220 = scmp.ne.s32.totalorder %s206, %s207
      %p221 = scmp.eq.s32.totalorder %s37, 3
      %p222 = por %p220, %p221
      %p224 = scmp.ne.s32.totalorder %s207, %s223
      %p225 = scmp.eq.s32.totalorder %s37, 0
      %p226 = por %p224, %p225
      %s227 = ssub.s32 %s31, %s38
      %p228 = scmp.eq.s32.totalorder %s227, 0
      %s230 = sadd.s32 %s229, 1
      %s231 = scalar_select %p228, %s229, %s230
      %p234 = pneg %p228
      %p235 = scmp.eq.s32.totalorder %s31, 3
      %p236 = por %p234, %p235
      %p237 = scmp.ne.s32.totalorder %s229, %s232
      %p238 = scmp.eq.s32.totalorder %s31, 0
      %p239 = por %p237, %p238
      %p240 = scmp.ne.s32.totalorder %s229, %s232
      %p241 = scmp.eq.s32.totalorder %s36, 3
      %p242 = por %p240, %p241
      %p243 = scmp.ne.s32.totalorder %s232, %s233
      %p244 = scmp.eq.s32.totalorder %s36, 0
      %p245 = por %p243, %p244
      %p246 = scmp.ne.s32.totalorder %s232, %s233
      %p247 = scmp.eq.s32.totalorder %s37, 3
      %p248 = por %p246, %p247
      %p250 = scmp.ne.s32.totalorder %s233, %s249
      %p251 = scmp.eq.s32.totalorder %s37, 0
      %p252 = por %p250, %p251
      %p253 = scmp.le.s32.totalorder 1, %s31
      %p254 = scmp.lt.s32.totalorder %s31, 5
      %p255 = pnand %p253, %p254
      %p256 = pneg %p255
      // Predicated region
      $region9: #{s4block_forward.3} parent=5 // pred_check
        _
      $region10: #{s4block_forward.3} parent=5 // pred_check_branch
        %258 = sbr.rel (%p255) target = $region12
      $region11: #{s4block_forward.3} parent=5 // pred_region
        %s259 = ssub.s32 %s31, 1
        // Predicated region
        $region13: #{s4block_forward.3} parent=11 // pred_check
          %p260 = pneg %p104
        $region14: #{s4block_forward.3} parent=11 // pred_check_branch
          %262 = sbr.rel (%p260) target = $region16
        $region15: #{s4block_forward.3} parent=11 // pred_region
          %s264 = ssub.s32 64, 64
          %265 = vsyncadd [#allocation6], %s264
          %s267 = sshll.u32 [#allocation7], 4
          %s268 = int_to_ptr.vmem [resolvable:$true] %s267
          %270 = dma.hbm_to_vmem [thread:$0]  %s2, 64, %s268, [#allocation6]
        $region16: #{s4block_forward.3} parent=11 // pred_fallthru
          _
        // Predicated region
        $region17: #{s4block_forward.3} parent=11 // pred_check
          %p271 = pneg %p151
        $region18: #{s4block_forward.3} parent=11 // pred_check_branch
          %273 = sbr.rel (%p271) target = $region20
        $region19: #{s4block_forward.3} parent=11 // pred_region
          %s275 = ssub.s32 256, 256
          %276 = vsyncadd [#allocation9], %s275
          %s277 = sshll.u32 [#allocation10], 4
          %s278 = int_to_ptr.vmem [resolvable:$true] %s277
          %283 = dma.hbm_to_vmem [thread:$0]  %s4, 256, %s278, [#allocation9], 64, 64, 4
        $region20: #{s4block_forward.3} parent=11 // pred_fallthru
          _
        // Predicated region
        $region21: #{s4block_forward.3} parent=11 // pred_check
          %p284 = pneg %p172
        $region22: #{s4block_forward.3} parent=11 // pred_check_branch
          %286 = sbr.rel (%p284) target = $region24
        $region23: #{s4block_forward.3} parent=11 // pred_region
          %s288 = ssub.s32 512, 512
          %289 = vsyncadd [#allocation12], %s288
          %s290 = sshll.u32 [#allocation11], 4
          %s291 = int_to_ptr.vmem [resolvable:$true] %s290
          %296 = dma.hbm_to_vmem [thread:$0]  %s5, 512, %s291, [#allocation12], 64, 64, 4
        $region24: #{s4block_forward.3} parent=11 // pred_fallthru
          _
        // Predicated region
        $region25: #{s4block_forward.3} parent=11 // pred_check
          %p297 = pneg %p193
        $region26: #{s4block_forward.3} parent=11 // pred_check_branch
          %299 = sbr.rel (%p297) target = $region28
        $region27: #{s4block_forward.3} parent=11 // pred_region
          %s301 = ssub.s32 512, 512
          %302 = vsyncadd [#allocation12], %s301
          %s303 = sshll.u32 [#allocation13], 4
          %s304 = int_to_ptr.vmem [resolvable:$true] %s303
          %309 = dma.hbm_to_vmem [thread:$0]  %s6, 512, %s304, [#allocation12], 128, 128, 8
        $region28: #{s4block_forward.3} parent=11 // pred_fallthru
          _
      $region12: #{s4block_forward.3} parent=5 // pred_fallthru
        _
      %p310 = scmp.lt.s32.totalorder %s31, 4
      // Predicated region
      $region29: #{s4block_forward.3} parent=5 // pred_check
        %p311 = pneg %p310
      $region30: #{s4block_forward.3} parent=5 // pred_check_branch
        %313 = sbr.rel (%p311) target = $region32
      $region31: #{s4block_forward.3} parent=5 // pred_region
        // Predicated region
        $region33: #{s4block_forward.3} parent=31 // pred_check
          %p314 = pneg %p51
        $region34: #{s4block_forward.3} parent=31 // pred_check_branch
          %316 = sbr.rel (%p314) target = $region36
        $region35: #{s4block_forward.3} parent=31 // pred_region
          %s317 = sand.u32 %s41, 1
          %s318 = scalar_lea.sflag [#allocation3], %s317
          %s319 = sand.u32 %s41, 1
          %s320 = smul.addr %s319, 64
          %s321 = scalar_lea.vmem [#allocation2], %s320
          %s323 = ssub.s32 1024, 1024
          %324 = vsyncadd %s318, %s323
          %s325 = smul.addr %s31, 8
          %s326 = smul.addr %s325, 128
          %s327 = scalar_lea.hbm %s0, %s326
          %s328 = sshll.u32 %s321, 4
          %s329 = int_to_ptr.vmem [resolvable:$true] %s328
          %334 = dma.hbm_to_vmem [thread:$0]  %s327, 1024, %s329, %s318, 256, 256, 16
        $region36: #{s4block_forward.3} parent=31 // pred_fallthru
          _
        // Predicated region
        $region37: #{s4block_forward.3} parent=31 // pred_check
          %p335 = pneg %p77
        $region38: #{s4block_forward.3} parent=31 // pred_check_branch
          %337 = sbr.rel (%p335) target = $region40
        $region39: #{s4block_forward.3} parent=31 // pred_region
          %s338 = sand.u32 %s31, 1
          %s339 = scalar_lea.sflag [#allocation6], %s338
          %s340 = sand.u32 %s67, 1
          %s341 = smul.addr %s340, 32
          %s342 = scalar_lea.vmem [#allocation5], %s341
          %s344 = ssub.s32 512, 512
          %345 = vsyncadd %s339, %s344
          %s346 = smul.addr %s31, 4
          %s347 = smul.addr %s346, 128
          %s348 = scalar_lea.hbm %s1, %s347
          %s349 = sshll.u32 %s342, 4
          %s350 = int_to_ptr.vmem [resolvable:$true] %s349
          %355 = dma.hbm_to_vmem [thread:$0]  %s348, 512, %s350, %s339, 128, 128, 8
        $region40: #{s4block_forward.3} parent=31 // pred_fallthru
          _
        // Predicated region
        $region41: #{s4block_forward.3} parent=31 // pred_check
          %p356 = pneg %p124
        $region42: #{s4block_forward.3} parent=31 // pred_check_branch
          %358 = sbr.rel (%p356) target = $region44
        $region43: #{s4block_forward.3} parent=31 // pred_region
          %s359 = sand.u32 %s31, 1
          %s360 = scalar_lea.sflag [#allocation9], %s359
          %s361 = sand.u32 %s114, 1
          %s362 = smul.addr %s361, 32
          %s363 = scalar_lea.vmem [#allocation8], %s362
          %s365 = ssub.s32 512, 512
          %366 = vsyncadd %s360, %s365
          %s367 = smul.addr %s31, 8
          %s368 = smul.addr %s367, 64
          %s369 = scalar_lea.hbm %s3, %s368
          %s370 = sshll.u32 %s363, 4
          %s371 = int_to_ptr.vmem [resolvable:$true] %s370
          %376 = dma.hbm_to_vmem [thread:$0]  %s369, 512, %s371, %s360, 128, 128, 8
        $region44: #{s4block_forward.3} parent=31 // pred_fallthru
          _
      $region32: #{s4block_forward.3} parent=5 // pred_fallthru
        _
      %p377 = scmp.le.s32.totalorder 1, %s31
      %p378 = scmp.lt.s32.totalorder %s31, 5
      %p379 = pnand %p377, %p378
      %p380 = pneg %p379
      // Predicated region
      $region45: #{s4block_forward.3} parent=5 // pred_check
        _
      $region46: #{s4block_forward.3} parent=5 // pred_check_branch
        %382 = sbr.rel (%p379) target = $region48
      $region47: #{s4block_forward.3} parent=5 // pred_region
        %s383 = ssub.s32 %s31, 1
        %s384 = sand.u32 %s44, 1
        %s385 = scalar_lea.sflag [#allocation3], %s384
        %s386 = sand.u32 %s44, 1
        %s387 = smul.addr %s386, 64
        %s388 = scalar_lea.vmem [#allocation2], %s387
        // Predicated region
        $region49: #{s4block_forward.3} parent=47 // pred_check
          %p389 = pneg %p57
        $region50: #{s4block_forward.3} parent=47 // pred_check_branch
          %391 = sbr.rel (%p389) target = $region52
        $region51: #{s4block_forward.3} parent=47 // pred_region
          %392 = dma.done %s385, 1024
        $region52: #{s4block_forward.3} parent=47 // pred_fallthru
          _
        %s393 = sand.u32 %s36, 1
        %s394 = scalar_lea.sflag [#allocation6], %s393
        %s395 = sand.u32 %s70, 1
        %s396 = smul.addr %s395, 32
        %s397 = scalar_lea.vmem [#allocation5], %s396
        // Predicated region
        $region53: #{s4block_forward.3} parent=47 // pred_check
          %p398 = pneg %p83
        $region54: #{s4block_forward.3} parent=47 // pred_check_branch
          %400 = sbr.rel (%p398) target = $region56
        $region55: #{s4block_forward.3} parent=47 // pred_region
          %401 = dma.done %s394, 512
        $region56: #{s4block_forward.3} parent=47 // pred_fallthru
          _
        // Predicated region
        $region57: #{s4block_forward.3} parent=47 // pred_check
          %p402 = pneg %p104
        $region58: #{s4block_forward.3} parent=47 // pred_check_branch
          %404 = sbr.rel (%p402) target = $region60
        $region59: #{s4block_forward.3} parent=47 // pred_region
          %405 = dma.done [#allocation6], 64
        $region60: #{s4block_forward.3} parent=47 // pred_fallthru
          _
        %s406 = sand.u32 %s36, 1
        %s407 = scalar_lea.sflag [#allocation9], %s406
        %s408 = sand.u32 %s117, 1
        %s409 = smul.addr %s408, 32
        %s410 = scalar_lea.vmem [#allocation8], %s409
        // Predicated region
        $region61: #{s4block_forward.3} parent=47 // pred_check
          %p411 = pneg %p130
        $region62: #{s4block_forward.3} parent=47 // pred_check_branch
          %413 = sbr.rel (%p411) target = $region64
        $region63: #{s4block_forward.3} parent=47 // pred_region
          %414 = dma.done %s407, 512
        $region64: #{s4block_forward.3} parent=47 // pred_fallthru
          _
        // Predicated region
        $region65: #{s4block_forward.3} parent=47 // pred_check
          %p415 = pneg %p151
        $region66: #{s4block_forward.3} parent=47 // pred_check_branch
          %417 = sbr.rel (%p415) target = $region68
        $region67: #{s4block_forward.3} parent=47 // pred_region
          %418 = dma.done [#allocation9], 256
        $region68: #{s4block_forward.3} parent=47 // pred_fallthru
          _
        // Predicated region
        $region69: #{s4block_forward.3} parent=47 // pred_check
          %p419 = pneg %p172
        $region70: #{s4block_forward.3} parent=47 // pred_check_branch
          %421 = sbr.rel (%p419) target = $region72
        $region71: #{s4block_forward.3} parent=47 // pred_region
          %422 = dma.done [#allocation12], 512
        $region72: #{s4block_forward.3} parent=47 // pred_fallthru
          _
        // Predicated region
        $region73: #{s4block_forward.3} parent=47 // pred_check
          %p423 = pneg %p193
        $region74: #{s4block_forward.3} parent=47 // pred_check_branch
          %425 = sbr.rel (%p423) target = $region76
        $region75: #{s4block_forward.3} parent=47 // pred_region
          %426 = dma.done [#allocation12], 512
        $region76: #{s4block_forward.3} parent=47 // pred_fallthru
          _
        %s427 = sand.u32 %s44, 1
        %s428 = scalar_lea.sflag [#allocation3], %s427
        %s429 = sand.u32 %s44, 1
        %s430 = smul.addr %s429, 64
        %s431 = scalar_lea.vmem [#allocation2], %s430
        %p432 = pneg %p57
        %p433 = pneg %p54
        %s434 = sand.u32 %s36, 1
        %s435 = scalar_lea.sflag [#allocation6], %s434
        %s436 = sand.u32 %s70, 1
        %s437 = smul.addr %s436, 32
        %s438 = scalar_lea.vmem [#allocation5], %s437
        %p439 = pneg %p83
        %p440 = pneg %p80
        %p441 = pneg %p104
        %p442 = pneg %p101
        %s443 = sand.u32 %s36, 1
        %s444 = scalar_lea.sflag [#allocation9], %s443
        %s445 = sand.u32 %s117, 1
        %s446 = smul.addr %s445, 32
        %s447 = scalar_lea.vmem [#allocation8], %s446
        %p448 = pneg %p130
        %p449 = pneg %p127
        %p450 = pneg %p151
        %p451 = pneg %p148
        %p452 = pneg %p172
        %p453 = pneg %p169
        %p454 = pneg %p193
        %p455 = pneg %p190
        %p456 = pneg %p219
        %p457 = pneg %p216
        %s458 = sand.u32 %s206, 1
        %s459 = scalar_lea.sflag [#allocation4], %s458
        %s460 = sand.u32 %s206, 1
        %s461 = smul.addr %s460, 64
        %s462 = scalar_lea.vmem [#allocation14], %s461
        %p463 = pneg %p245
        %p464 = pneg %p242
        %s465 = sand.u32 %s232, 1
        %s466 = scalar_lea.sflag [#allocation16], %s465
        %s467 = sand.u32 %s232, 1
        %s468 = smul.addr %s467, 64
        %s469 = scalar_lea.vmem [#allocation15], %s468
        %v471 = vld [vmem:[%s388] sm:$0xff]
        %v472 = vld [vmem:[%s388 + $0x8] sm:$0xff]
        %v473 = vld [vmem:[%s388 + $0x10] sm:$0xff]
        %v474 = vld [vmem:[%s388 + $0x18] sm:$0xff]
        %v475 = vld [vmem:[%s388 + $0x20] sm:$0xff]
        %v476 = vld [vmem:[%s388 + $0x28] sm:$0xff]
        %v477 = vld [vmem:[%s388 + $0x30] sm:$0xff]
        %v478 = vld [vmem:[%s388 + $0x38] sm:$0xff]
        %v479 = vld [vmem:[%s397] sm:$0xff]
        %v480 = vld [vmem:[%s397 + $0x8] sm:$0xff]
        %v481 = vld [vmem:[%s397 + $0x10] sm:$0xff]
        %v482 = vld [vmem:[%s397 + $0x18] sm:$0xff]
        %v483 = vld [vmem:[#allocation7] sm:$0xf]
        %v486 = vunpack.c.l.s4 1983009808
        %v487 = vunpack.c.0.s8 %v486
        %v488 = vlaneseq
        %v489 = vshrl.u32 %v488, 7
        %v490 = vsub.s32 %v487, %v489
        %v491 = vrot.slane %v483, %v490
        %v492 = vcombine.high %v491, %v491
        %vm493 = vcmask 15360
        %v495 = vsel %vm493, %v479, 0
        %v498 = vsel %vm493, %v480, 0
        %v501 = vsel %vm493, %v481, 0
        %v504 = vsel %vm493, %v482, 0
        %vm506 = vcmask 1041408
        %v507 = vsel %vm506, %v491, 0
        %v509 = vsel %vm506, %v492, 0
        %511 = vmatprep.subr.mxu0 %v509
        %512 = vmatpush1.msra.mxu0 %v507
        %513 = vmatprep.subr.mxu0 0.0
        %514 = vmatpush1.msra.mxu0 0.0
        %515 = vmatprep.subr.mxu0 0.0
        %516 = vmatpush1.msra.mxu0 0.0
        %517 = vmatprep.subr.mxu0 0.0
        %518 = vmatpush1.msra.mxu0 0.0
        %519 = vmatprep.subr.mxu0 0.0
        %520 = vmatpush1.msra.mxu0 0.0
        %521 = vmatprep.subr.mxu0 0.0
        %522 = vmatpush1.msra.mxu0 0.0
        %523 = vmatprep.subr.mxu0 0.0
        %524 = vmatpush1.msra.mxu0 0.0
        %525 = vmatprep.subr.mxu0 0.0
        %526 = vmatpush1.msra.mxu0 0.0
        %527 = vmatprep.subr.mxu0 0.0
        %528 = vmatpush1.msra.mxu0 0.0
        %529 = vmatprep.subr.mxu0 0.0
        %530 = vmatpush1.msra.mxu0 0.0
        %531 = vmatprep.subr.mxu0 0.0
        %532 = vmatpush1.msra.mxu0 0.0
        %533 = vmatprep.subr.mxu0 0.0
        %534 = vmatpush1.msra.mxu0 0.0
        %535 = vmatprep.subr.mxu0 0.0
        %536 = vmatpush1.msra.mxu0 0.0
        %537 = vmatprep.subr.mxu0 0.0
        %538 = vmatpush1.msra.mxu0 0.0
        %539 = vmatprep.subr.mxu0 0.0
        %540 = vmatpush1.msra.mxu0 0.0
        %541 = vmatprep.subr.mxu0 0.0
        %542 = vmatpush1.msra.mxu0 0.0
        %543 = vmatprep.subr.mxu0 0.0
        %544 = vmatpush1.msra.mxu0 0.0
        %545 = vmatprep.subr.mxu0 0.0
        %546 = vmatpush1.msra.mxu0 0.0
        %547 = vmatprep.subr.mxu0 0.0
        %548 = vmatpush1.msra.mxu0 0.0
        %549 = vmatprep.subr.mxu0 0.0
        %550 = vmatpush1.msra.mxu0 0.0
        %551 = vmatprep.subr.mxu0 0.0
        %552 = vmatpush1.msra.mxu0 0.0
        %553 = vmatprep.subr.mxu0 0.0
        %554 = vmatpush1.msra.mxu0 0.0
        %555 = vmatprep.subr.mxu0 0.0
        %556 = vmatpush1.msra.mxu0 0.0
        %557 = vmatprep.subr.mxu0 0.0
        %558 = vmatpush1.msra.mxu0 0.0
        %559 = vmatprep.subr.mxu0 0.0
        %560 = vmatpush1.msra.mxu0 0.0
        %561 = vmatprep.subr.mxu0 0.0
        %562 = vmatpush1.msra.mxu0 0.0
        %563 = vmatprep.subr.mxu0 0.0
        %564 = vmatpush1.msra.mxu0 0.0
        %565 = vmatprep.subr.mxu0 0.0
        %566 = vmatpush1.msra.mxu0 0.0
        %567 = vmatprep.subr.mxu0 0.0
        %568 = vmatpush1.msra.mxu0 0.0
        %569 = vmatprep.subr.mxu0 0.0
        %570 = vmatpush1.msra.mxu0 0.0
        %571 = vmatprep.subr.mxu0 0.0
        %572 = vmatpush1.msra.mxu0 0.0
        %573 = vmatprep.subr.mxu0 0.0
        %574 = vmatpush1.msra.mxu0 0.0
        %575 = vmatprep.mubr.f32.mxu0 0.0
        %576 = vmatmul.mubr.f32.gmra.mrb[0].mxu0 %v495
        %v577 = vpop.f32.mrb[0].mxu0
        %v578 = vadd.f32 0.0, %v577
        %v579 = vpop.f32.mrb[0].mxu0
        %v580 = vadd.f32 0.0, %v579
        %581 = vmatprep.mubr.f32.mxu0 0.0
        %582 = vmatmul.mubr.f32.gmra.mrb[0].mxu0 %v498
        %v583 = vpop.f32.mrb[0].mxu0
        %v584 = vadd.f32 0.0, %v583
        %v585 = vpop.f32.mrb[0].mxu0
        %v586 = vadd.f32 0.0, %v585
        %587 = vmatprep.mubr.f32.mxu0 0.0
        %588 = vmatmul.mubr.f32.gmra.mrb[0].mxu0 %v501
        %v589 = vpop.f32.mrb[0].mxu0
        %v590 = vadd.f32 0.0, %v589
        %v591 = vpop.f32.mrb[0].mxu0
        %v592 = vadd.f32 0.0, %v591
        %593 = vmatprep.mubr.f32.mxu0 0.0
        %594 = vmatmul.mubr.f32.gmra.mrb[0].mxu0 %v504
        %v595 = vpop.f32.mrb[0].mxu0
        %v596 = vadd.f32 0.0, %v595
        %v597 = vpop.f32.mrb[0].mxu0
        %v598 = vadd.f32 0.0, %v597
        %599 = vdwg.mxu0
        %v600 = vadd.f32 %v471, %v578
        %v601 = vadd.f32 %v472, %v580
        %v602 = vadd.f32 %v473, %v584
        %v603 = vadd.f32 %v474, %v586
        %v604 = vadd.f32 %v475, %v590
        %v605 = vadd.f32 %v476, %v592
        %v606 = vadd.f32 %v477, %v596
        %v607 = vadd.f32 %v478, %v598
        %v608 = vld [vmem:[#allocation13] sm:$0xff]
        %v609 = vld [vmem:[#allocation13 + $0x8] sm:$0xff]
        %v610 = vld [vmem:[#allocation13 + $0x10] sm:$0xff]
        %v611 = vld [vmem:[#allocation13 + $0x18] sm:$0xff]
        %v612 = vld [vmem:[#allocation10] sm:$0xf]
        %v613 = vld [vmem:[#allocation10 + $0x4] sm:$0xf]
        %v614 = vld [vmem:[#allocation10 + $0x8] sm:$0xf]
        %v615 = vld [vmem:[#allocation10 + $0xc] sm:$0xf]
        %v616 = vld [vmem:[%s410] sm:$0xff]
        %v617 = vld [vmem:[%s410 + $0x8] sm:$0xff]
        %v618 = vld [vmem:[%s410 + $0x10] sm:$0xff]
        %v619 = vld [vmem:[%s410 + $0x18] sm:$0xff]
        %621 = vset.pattern.permute.xlu0 0
        %622 = vperm.xlu0 %621, %v608
        %v623 = vpop.permute.xlu0 %622
        %626 = vset.pattern.permute.xlu0 0
        %627 = vperm.xlu0 %626, %v609
        %v628 = vpop.permute.xlu0 %627
        %631 = vset.pattern.permute.xlu0 0
        %632 = vperm.xlu0 %631, %v610
        %v633 = vpop.permute.xlu0 %632
        %636 = vset.pattern.permute.xlu0 0
        %637 = vperm.xlu0 %636, %v611
        %v638 = vpop.permute.xlu0 %637
        %v644 = vunpack.c.l.b16 %v612
        %v645 = vunpack.c.l.b16 %v613
        %v646 = vunpack.c.l.b16 %v614
        %v647 = vunpack.c.l.b16 %v615
        %v648 = vpack.c.b16 %v645, %v644
        %v649 = vpack.c.b16 %v647, %v646
        %v654 = vunpack.c.l.b16 %v616
        %v655 = vunpack.c.h.b16 %v616
        %v656 = vunpack.c.l.b16 %v617
        %v657 = vunpack.c.h.b16 %v617
        %v658 = vunpack.c.l.b16 %v618
        %v659 = vunpack.c.h.b16 %v618
        %v660 = vunpack.c.l.b16 %v619
        %v661 = vunpack.c.h.b16 %v619
        %v662 = vpack.c.b16 %v656, %v654
        %v663 = vpack.c.b16 %v657, %v655
        %v664 = vpack.c.b16 %v660, %v658
        %v665 = vpack.c.b16 %v661, %v659
        %vm670 = vcmask 261120
        %v672 = vsel %vm670, %v648, 0
        %v675 = vsel %vm670, %v649, 0
        %677 = vmatprep.subr.bf16.mxu0 %v663
        %678 = vmatpush1.bf16.msra.mxu0 %v662
        %679 = vmatprep.subr.bf16.mxu0 %v665
        %680 = vmatpush1.bf16.msra.mxu0 %v664
        %681 = vmatprep.subr.bf16.mxu0 0
        %682 = vmatpush1.bf16.msra.mxu0 0
        %683 = vmatprep.subr.bf16.mxu0 0
        %684 = vmatpush1.bf16.msra.mxu0 0
        %685 = vmatprep.subr.bf16.mxu0 0
        %686 = vmatpush1.bf16.msra.mxu0 0
        %687 = vmatprep.subr.bf16.mxu0 0
        %688 = vmatpush1.bf16.msra.mxu0 0
        %689 = vmatprep.subr.bf16.mxu0 0
        %690 = vmatpush1.bf16.msra.mxu0 0
        %691 = vmatprep.subr.bf16.mxu0 0
        %692 = vmatpush1.bf16.msra.mxu0 0
        %693 = vmatprep.subr.bf16.mxu0 0
        %694 = vmatpush1.bf16.msra.mxu0 0
        %695 = vmatprep.subr.bf16.mxu0 0
        %696 = vmatpush1.bf16.msra.mxu0 0
        %697 = vmatprep.subr.bf16.mxu0 0
        %698 = vmatpush1.bf16.msra.mxu0 0
        %699 = vmatprep.subr.bf16.mxu0 0
        %700 = vmatpush1.bf16.msra.mxu0 0
        %701 = vmatprep.subr.bf16.mxu0 0
        %702 = vmatpush1.bf16.msra.mxu0 0
        %703 = vmatprep.subr.bf16.mxu0 0
        %704 = vmatpush1.bf16.msra.mxu0 0
        %705 = vmatprep.subr.bf16.mxu0 0
        %706 = vmatpush1.bf16.msra.mxu0 0
        %707 = vmatprep.subr.bf16.mxu0 0
        %708 = vmatpush1.bf16.msra.mxu0 0
        %709 = vmatprep.mubr.bf16.mxu0 0
        %710 = vmatmul.mubr.bf16.gmra.mrb[0].mxu0 %v672
        %v711 = vpop.f32.mrb[0].mxu0
        %v712 = vadd.f32 %v623, %v711
        %v713 = vpop.f32.mrb[0].mxu0
        %v714 = vadd.f32 %v623, %v713
        %v715 = vpop.f32.mrb[0].mxu0
        %v716 = vadd.f32 %v628, %v715
        %v717 = vpop.f32.mrb[0].mxu0
        %v718 = vadd.f32 %v628, %v717
        %719 = vmatprep.mubr.bf16.mxu0 0
        %720 = vmatmul.mubr.bf16.gmra.mrb[0].mxu0 %v675
        %v721 = vpop.f32.mrb[0].mxu0
        %v722 = vadd.f32 %v633, %v721
        %v723 = vpop.f32.mrb[0].mxu0
        %v724 = vadd.f32 %v633, %v723
        %v725 = vpop.f32.mrb[0].mxu0
        %v726 = vadd.f32 %v638, %v725
        %v727 = vpop.f32.mrb[0].mxu0
        %v728 = vadd.f32 %v638, %v727
        %729 = vdwg.mxu0
        %v730 = vadd.f32 %v712, %v600
        %v731 = vadd.f32 %v714, %v601
        %v732 = vadd.f32 %v716, %v602
        %v733 = vadd.f32 %v718, %v603
        %v734 = vadd.f32 %v722, %v604
        %v735 = vadd.f32 %v724, %v605
        %v736 = vadd.f32 %v726, %v606
        %v737 = vadd.f32 %v728, %v607
        %v738 = vtanh.pop %v730
        %v739 = vtanh.pop %v731
        %v740 = vtanh.pop %v732
        %v741 = vtanh.pop %v733
        %v742 = vtanh.pop %v734
        %v743 = vtanh.pop %v735
        %v744 = vtanh.pop %v736
        %v745 = vtanh.pop %v737
        %v746 = vxor.u32 %v730, 2147483648
        %v747 = vxor.u32 %v731, 2147483648
        %v748 = vxor.u32 %v732, 2147483648
        %v749 = vxor.u32 %v733, 2147483648
        %v750 = vxor.u32 %v734, 2147483648
        %v751 = vxor.u32 %v735, 2147483648
        %v752 = vxor.u32 %v736, 2147483648
        %v753 = vxor.u32 %v737, 2147483648
        %v754 = vmul.f32 %v746, 1.442695
        %v755 = vpow.pop %v754
        %v756 = vmul.f32 %v747, 1.442695
        %v757 = vpow.pop %v756
        %v758 = vmul.f32 %v748, 1.442695
        %v759 = vpow.pop %v758
        %v760 = vmul.f32 %v749, 1.442695
        %v761 = vpow.pop %v760
        %v762 = vmul.f32 %v750, 1.442695
        %v763 = vpow.pop %v762
        %v764 = vmul.f32 %v751, 1.442695
        %v765 = vpow.pop %v764
        %v766 = vmul.f32 %v752, 1.442695
        %v767 = vpow.pop %v766
        %v768 = vmul.f32 %v753, 1.442695
        %v769 = vpow.pop %v768
        %v770 = vadd.f32 %v755, 1.0
        %v771 = vadd.f32 %v757, 1.0
        %v772 = vadd.f32 %v759, 1.0
        %v773 = vadd.f32 %v761, 1.0
        %v774 = vadd.f32 %v763, 1.0
        %v775 = vadd.f32 %v765, 1.0
        %v776 = vadd.f32 %v767, 1.0
        %v777 = vadd.f32 %v769, 1.0
        %v778 = vrcp.pop %v770
        %v779 = vmul.f32 1.0, %v778
        %v780 = vrcp.pop %v771
        %v781 = vmul.f32 1.0, %v780
        %v782 = vrcp.pop %v772
        %v783 = vmul.f32 1.0, %v782
        %v784 = vrcp.pop %v773
        %v785 = vmul.f32 1.0, %v784
        %v786 = vrcp.pop %v774
        %v787 = vmul.f32 1.0, %v786
        %v788 = vrcp.pop %v775
        %v789 = vmul.f32 1.0, %v788
        %v790 = vrcp.pop %v776
        %v791 = vmul.f32 1.0, %v790
        %v792 = vrcp.pop %v777
        %v793 = vmul.f32 1.0, %v792
        %v794 = vmul.f32 %v738, %v779
        %v795 = vmul.f32 %v739, %v781
        %v796 = vmul.f32 %v740, %v783
        %v797 = vmul.f32 %v741, %v785
        %v798 = vmul.f32 %v742, %v787
        %v799 = vmul.f32 %v743, %v789
        %v800 = vmul.f32 %v744, %v791
        %v801 = vmul.f32 %v745, %v793
        %v802 = vld [vmem:[#allocation11] sm:$0xf]
        %v803 = vld [vmem:[#allocation11 + $0x4] sm:$0xf]
        %v804 = vld [vmem:[#allocation11 + $0x8] sm:$0xf]
        %v805 = vld [vmem:[#allocation11 + $0xc] sm:$0xf]
        %v806 = vld [vmem:[#allocation11 + $0x10] sm:$0xf]
        %v807 = vld [vmem:[#allocation11 + $0x14] sm:$0xf]
        %v808 = vld [vmem:[#allocation11 + $0x18] sm:$0xf]
        %v809 = vld [vmem:[#allocation11 + $0x1c] sm:$0xf]
        %v810 = vpack.c.bf16 %v796, %v794
        %v811 = vpack.c.bf16 %v797, %v795
        %v812 = vpack.c.bf16 %v800, %v798
        %v813 = vpack.c.bf16 %v801, %v799
        %v822 = vunpack.c.l.b16 %v802
        %v823 = vunpack.c.l.b16 %v803
        %v824 = vunpack.c.l.b16 %v804
        %v825 = vunpack.c.l.b16 %v805
        %v826 = vunpack.c.l.b16 %v806
        %v827 = vunpack.c.l.b16 %v807
        %v828 = vunpack.c.l.b16 %v808
        %v829 = vunpack.c.l.b16 %v809
        %v830 = vpack.c.b16 %v823, %v822
        %v831 = vpack.c.b16 %v825, %v824
        %v832 = vpack.c.b16 %v827, %v826
        %v833 = vpack.c.b16 %v829, %v828
        %v835 = vsel %vm670, %v830, 0
        %v838 = vsel %vm670, %v831, 0
        %v841 = vsel %vm670, %v832, 0
        %v844 = vsel %vm670, %v833, 0
        %846 = vmatprep.subr.bf16.mxu0 %v811
        %847 = vmatpush1.bf16.msra.mxu0 %v810
        %848 = vmatprep.subr.bf16.mxu0 %v813
        %849 = vmatpush1.bf16.msra.mxu0 %v812
        %850 = vmatprep.subr.bf16.mxu0 0
        %851 = vmatpush1.bf16.msra.mxu0 0
        %852 = vmatprep.subr.bf16.mxu0 0
        %853 = vmatpush1.bf16.msra.mxu0 0
        %854 = vmatprep.subr.bf16.mxu0 0
        %855 = vmatpush1.bf16.msra.mxu0 0
        %856 = vmatprep.subr.bf16.mxu0 0
        %857 = vmatpush1.bf16.msra.mxu0 0
        %858 = vmatprep.subr.bf16.mxu0 0
        %859 = vmatpush1.bf16.msra.mxu0 0
        %860 = vmatprep.subr.bf16.mxu0 0
        %861 = vmatpush1.bf16.msra.mxu0 0
        %862 = vmatprep.subr.bf16.mxu0 0
        %863 = vmatpush1.bf16.msra.mxu0 0
        %864 = vmatprep.subr.bf16.mxu0 0
        %865 = vmatpush1.bf16.msra.mxu0 0
        %866 = vmatprep.subr.bf16.mxu0 0
        %867 = vmatpush1.bf16.msra.mxu0 0
        %868 = vmatprep.subr.bf16.mxu0 0
        %869 = vmatpush1.bf16.msra.mxu0 0
        %870 = vmatprep.subr.bf16.mxu0 0
        %871 = vmatpush1.bf16.msra.mxu0 0
        %872 = vmatprep.subr.bf16.mxu0 0
        %873 = vmatpush1.bf16.msra.mxu0 0
        %874 = vmatprep.subr.bf16.mxu0 0
        %875 = vmatpush1.bf16.msra.mxu0 0
        %876 = vmatprep.subr.bf16.mxu0 0
        %877 = vmatpush1.bf16.msra.mxu0 0
        %878 = vmatprep.mubr.bf16.mxu0 0
        %879 = vmatmul.mubr.bf16.gmra.mrb[0].mxu0 %v835
        %v880 = vpop.f32.mrb[0].mxu0
        %v881 = vadd.f32 0.0, %v880
        %v882 = vpop.f32.mrb[0].mxu0
        %v883 = vadd.f32 0.0, %v882
        %v884 = vpop.f32.mrb[0].mxu0
        %v885 = vadd.f32 0.0, %v884
        %v886 = vpop.f32.mrb[0].mxu0
        %v887 = vadd.f32 0.0, %v886
        %888 = vmatprep.mubr.bf16.mxu0 0
        %889 = vmatmul.mubr.bf16.gmra.mrb[0].mxu0 %v838
        %v890 = vpop.f32.mrb[0].mxu0
        %v891 = vadd.f32 0.0, %v890
        %v892 = vpop.f32.mrb[0].mxu0
        %v893 = vadd.f32 0.0, %v892
        %v894 = vpop.f32.mrb[0].mxu0
        %v895 = vadd.f32 0.0, %v894
        %v896 = vpop.f32.mrb[0].mxu0
        %v897 = vadd.f32 0.0, %v896
        %898 = vmatprep.mubr.bf16.mxu0 0
        %899 = vmatmul.mubr.bf16.gmra.mrb[0].mxu0 %v841
        %v900 = vpop.f32.mrb[0].mxu0
        %v901 = vadd.f32 0.0, %v900
        %v902 = vpop.f32.mrb[0].mxu0
        %v903 = vadd.f32 0.0, %v902
        %v904 = vpop.f32.mrb[0].mxu0
        %v905 = vadd.f32 0.0, %v904
        %v906 = vpop.f32.mrb[0].mxu0
        %v907 = vadd.f32 0.0, %v906
        %908 = vmatprep.mubr.bf16.mxu0 0
        %909 = vmatmul.mubr.bf16.gmra.mrb[0].mxu0 %v844
        %v910 = vpop.f32.mrb[0].mxu0
        %v911 = vadd.f32 0.0, %v910
        %v912 = vpop.f32.mrb[0].mxu0
        %v913 = vadd.f32 0.0, %v912
        %v914 = vpop.f32.mrb[0].mxu0
        %v915 = vadd.f32 0.0, %v914
        %v916 = vpop.f32.mrb[0].mxu0
        %v917 = vadd.f32 0.0, %v916
        %918 = vdwg.mxu0
        %919 = vset.pattern.permute.xlu0 1
        %920 = vperm.xlu0 %919, %v608
        %v921 = vpop.permute.xlu0 %920
        %923 = vset.pattern.permute.xlu0 1
        %924 = vperm.xlu0 %923, %v609
        %v925 = vpop.permute.xlu0 %924
        %927 = vset.pattern.permute.xlu0 1
        %928 = vperm.xlu0 %927, %v610
        %v929 = vpop.permute.xlu0 %928
        %931 = vset.pattern.permute.xlu0 1
        %932 = vperm.xlu0 %931, %v611
        %v933 = vpop.permute.xlu0 %932
        %v935 = vadd.f32 %v881, %v921
        %v936 = vadd.f32 %v883, %v921
        %v937 = vadd.f32 %v885, %v925
        %v938 = vadd.f32 %v887, %v925
        %v939 = vadd.f32 %v891, %v929
        %v940 = vadd.f32 %v893, %v929
        %v941 = vadd.f32 %v895, %v933
        %v942 = vadd.f32 %v897, %v933
        %v943 = vadd.f32 %v935, %v471
        %v944 = vadd.f32 %v936, %v472
        %v945 = vadd.f32 %v937, %v473
        %v946 = vadd.f32 %v938, %v474
        %v947 = vadd.f32 %v939, %v475
        %v948 = vadd.f32 %v940, %v476
        %v949 = vadd.f32 %v941, %v477
        %v950 = vadd.f32 %v942, %v478
        %951 = vst [vmem:[%s462] sm:$0xff] %v943
        %952 = vst [vmem:[%s462 + $0x8] sm:$0xff] %v944
        %953 = vst [vmem:[%s462 + $0x10] sm:$0xff] %v945
        %954 = vst [vmem:[%s462 + $0x18] sm:$0xff] %v946
        %955 = vst [vmem:[%s462 + $0x20] sm:$0xff] %v947
        %956 = vst [vmem:[%s462 + $0x28] sm:$0xff] %v948
        %957 = vst [vmem:[%s462 + $0x30] sm:$0xff] %v949
        %958 = vst [vmem:[%s462 + $0x38] sm:$0xff] %v950
        %959 = vset.pattern.permute.xlu0 2
        %960 = vperm.xlu0 %959, %v608
        %v961 = vpop.permute.xlu0 %960
        %963 = vset.pattern.permute.xlu0 2
        %964 = vperm.xlu0 %963, %v609
        %v965 = vpop.permute.xlu0 %964
        %967 = vset.pattern.permute.xlu0 2
        %968 = vperm.xlu0 %967, %v610
        %v969 = vpop.permute.xlu0 %968
        %971 = vset.pattern.permute.xlu0 2
        %972 = vperm.xlu0 %971, %v611
        %v973 = vpop.permute.xlu0 %972
        %v975 = vadd.f32 %v901, %v961
        %v976 = vadd.f32 %v903, %v961
        %v977 = vadd.f32 %v905, %v965
        %v978 = vadd.f32 %v907, %v965
        %v979 = vadd.f32 %v911, %v969
        %v980 = vadd.f32 %v913, %v969
        %v981 = vadd.f32 %v915, %v973
        %v982 = vadd.f32 %v917, %v973
        %983 = vst [vmem:[%s469] sm:$0xff] %v975
        %984 = vst [vmem:[%s469 + $0x8] sm:$0xff] %v976
        %985 = vst [vmem:[%s469 + $0x10] sm:$0xff] %v977
        %986 = vst [vmem:[%s469 + $0x18] sm:$0xff] %v978
        %987 = vst [vmem:[%s469 + $0x20] sm:$0xff] %v979
        %988 = vst [vmem:[%s469 + $0x28] sm:$0xff] %v980
        %989 = vst [vmem:[%s469 + $0x30] sm:$0xff] %v981
        %990 = vst [vmem:[%s469 + $0x38] sm:$0xff] %v982
        %s991 = sand.u32 %s206, 1
        %s992 = scalar_lea.sflag [#allocation4], %s991
        %s993 = sand.u32 %s206, 1
        %s994 = smul.addr %s993, 64
        %s995 = scalar_lea.vmem [#allocation14], %s994
        %s996 = sand.u32 %s232, 1
        %s997 = scalar_lea.sflag [#allocation16], %s996
        %s998 = sand.u32 %s232, 1
        %s999 = smul.addr %s998, 64
        %s1000 = scalar_lea.vmem [#allocation15], %s999
        // Predicated region
        $region77: #{s4block_forward.3} parent=47 // pred_check
          %p1001 = pneg %p216
        $region78: #{s4block_forward.3} parent=47 // pred_check_branch
          %1003 = sbr.rel (%p1001) target = $region80
        $region79: #{s4block_forward.3} parent=47 // pred_region
          %s1005 = ssub.s32 1024, 1024
          %1006 = vsyncadd %s992, %s1005
          %s1007 = smul.addr %s36, 8
          %s1008 = smul.addr %s1007, 128
          %s1009 = scalar_lea.hbm %s7, %s1008
          %s1010 = sshll.u32 %s995, 4
          %s1011 = int_to_ptr.vmem [resolvable:$true] %s1010
          %1016 = dma.vmem_to_hbm [thread:$0]  %s1011, 1024, %s1009, %s992, 256, 256, 16
        $region80: #{s4block_forward.3} parent=47 // pred_fallthru
          _
        // Predicated region
        $region81: #{s4block_forward.3} parent=47 // pred_check
          %p1017 = pneg %p242
        $region82: #{s4block_forward.3} parent=47 // pred_check_branch
          %1019 = sbr.rel (%p1017) target = $region84
        $region83: #{s4block_forward.3} parent=47 // pred_region
          %s1021 = ssub.s32 1024, 1024
          %1022 = vsyncadd %s997, %s1021
          %s1023 = smul.addr %s36, 8
          %s1024 = smul.addr %s1023, 128
          %s1025 = scalar_lea.hbm %s8, %s1024
          %s1026 = sshll.u32 %s1000, 4
          %s1027 = int_to_ptr.vmem [resolvable:$true] %s1026
          %1032 = dma.vmem_to_hbm [thread:$0]  %s1027, 1024, %s1025, %s997, 256, 256, 16
        $region84: #{s4block_forward.3} parent=47 // pred_fallthru
          _
      $region48: #{s4block_forward.3} parent=5 // pred_fallthru
        _
      %p1033 = scmp.le.s32.totalorder 2, %s31
      // Predicated region
      $region85: #{s4block_forward.3} parent=5 // pred_check
        %p1034 = pneg %p1033
      $region86: #{s4block_forward.3} parent=5 // pred_check_branch
        %1036 = sbr.rel (%p1034) target = $region88
      $region87: #{s4block_forward.3} parent=5 // pred_region
        %s1037 = ssub.s32 %s31, 2
        // Predicated region
        $region89: #{s4block_forward.3} parent=87 // pred_check
          %p1038 = pneg %p222
        $region90: #{s4block_forward.3} parent=87 // pred_check_branch
          %1040 = sbr.rel (%p1038) target = $region92
        $region91: #{s4block_forward.3} parent=87 // pred_region
          %s1041 = sand.u32 %s207, 1
          %s1042 = scalar_lea.sflag [#allocation4], %s1041
          %s1043 = sand.u32 %s207, 1
          %s1044 = smul.addr %s1043, 64
          %s1045 = scalar_lea.vmem [#allocation14], %s1044
          %1046 = dma.done %s1042, 1024
        $region92: #{s4block_forward.3} parent=87 // pred_fallthru
          _
        // Predicated region
        $region93: #{s4block_forward.3} parent=87 // pred_check
          %p1047 = pneg %p248
        $region94: #{s4block_forward.3} parent=87 // pred_check_branch
          %1049 = sbr.rel (%p1047) target = $region96
        $region95: #{s4block_forward.3} parent=87 // pred_region
          %s1050 = sand.u32 %s233, 1
          %s1051 = scalar_lea.sflag [#allocation16], %s1050
          %s1052 = sand.u32 %s233, 1
          %s1053 = smul.addr %s1052, 64
          %s1054 = scalar_lea.vmem [#allocation15], %s1053
          %1055 = dma.done %s1051, 1024
        $region96: #{s4block_forward.3} parent=87 // pred_fallthru
          _
      $region88: #{s4block_forward.3} parent=5 // pred_fallthru
        _
    $region6: #{s4block_forward.3} parent=1 // loop_footer
      %s35 = sadd.s32 1, %s31
    $region7: #{s4block_forward.3} parent=1 // loop_footer_branch
      %30 = sbr.rel target = $region3
    $region8: #{s4block_forward.3} parent=1 // loop_exit
      _
    %1056 = vsyncpa [#allocation3], 1
    %s1057 = scalar_lea.sflag [#allocation3], 1
    %1058 = vsyncpa %s1057, 1
    %1059 = vsyncpa [#allocation6], 1
    %s1060 = scalar_lea.sflag [#allocation6], 1
    %1061 = vsyncpa %s1060, 1
    %1062 = vsyncpa [#allocation9], 1
    %s1063 = scalar_lea.sflag [#allocation9], 1
    %1064 = vsyncpa %s1063, 1
    %1065 = vsyncpa [#allocation12], 1
    %1066 = vsyncpa [#allocation4], 1
    %s1067 = scalar_lea.sflag [#allocation4], 1
    %1068 = vsyncpa %s1067, 1
    %1069 = vsyncpa [#allocation16], 1
    %s1070 = scalar_lea.sflag [#allocation16], 1
    %1071 = vsyncpa %s1070, 1

// kernel: s4block_forward.2
$region0: #{s4block_forward.2}
  #allocation0 [shape = 'u32[]', space=smem, size = 0x4, offset = 0x4, fixed_abs, tag = 'smem constant byte address 0x4 - core index']
  #allocation1 [shape = 'u32[144,128]{1,0:T(1,128)}', space=vmem, size = 0x12000, scoped, tag = 'internal scratch']
  %s0 = inlined_call_operand.hbm [shape: f32[4,32,2,128], index: 0, kind: input, shape index: {}]
  %s1 = inlined_call_operand.hbm [shape: f32[4,32,2,1], index: 1, kind: input, shape index: {}]
  %s2 = inlined_call_operand.hbm [shape: f32[3,32,1,1], index: 2, kind: input, shape index: {}]
  %s3 = inlined_call_operand.hbm [shape: bf16[32,128,128], index: 3, kind: input, shape index: {}]
  %s4 = inlined_call_operand.hbm [shape: bf16[4,32,2,128], index: 4, kind: output, shape index: {}]
  %s5 = sld [smem:[#allocation0]]
  $region65: #{s4block_forward.2} parent=0
    _
  %s7 = ssub.s32 1, %s5
  %s8 = scalar_select 0, %s7, %s5
  $region1: #{s4block_forward.2} parent=0
    #allocation2 [shape = 'u8[65536]{0}', space=vmem, size = 0x10000, scoped, tag = 'input window, operand 0']
    #allocation3 [shape = 's32[2]{0}', space=sflag, size = 0x8, scoped, tag = 'scoped memory for s4block_forward.2']
    #allocation4 [shape = 's32[2]{0}', space=sflag, size = 0x8, scoped, tag = 'scoped memory for s4block_forward.2']
    #allocation5 [shape = 'u8[65536]{0}', space=vmem, size = 0x10000, scoped, tag = 'input window, operand 1']
    #allocation6 [shape = 's32[2]{0}', space=sflag, size = 0x8, scoped, tag = 'scoped memory for s4block_forward.2']
    #allocation7 [shape = 'u8[49152]{0}', space=vmem, size = 0xc000, scoped, tag = 'input window, operand 2, single buffered']
    #allocation8 [shape = 'u8[1048576]{0}', space=vmem, size = 0x100000, scoped, tag = 'input window, operand 3, single buffered']
    #allocation9 [shape = 's32[1]{0}', space=sflag, size = 0x4, scoped, tag = 'scoped memory for s4block_forward.2']
    #allocation10 [shape = 'u8[32768]{0}', space=vmem, size = 0x8000, scoped, tag = 'output window, operand 0']
    %9 = vsyncpa [#allocation3], 0
    %s10 = scalar_lea.sflag [#allocation3], 1
    %11 = vsyncpa %s10, 0
    %12 = vsyncpa [#allocation6], 0
    %s13 = scalar_lea.sflag [#allocation6], 1
    %14 = vsyncpa %s13, 0
    %15 = vsyncpa [#allocation9], 0
    %16 = vsyncpa [#allocation4], 0
    %s17 = scalar_lea.sflag [#allocation4], 1
    %18 = vsyncpa %s17, 0
    loop: start=0, step=1, limit=6
    $region2: #{s4block_forward.2} parent=1 // loop_pre_header
      _
    $region3: #{s4block_forward.2} parent=1 // loop_header
      %s20 = sphi 0, %s24
      %p21 = scmp.ge.s32.totalorder %s20, 6
      %s30 = sphi 0, %s32
      %s33 = sphi 0, %s30
      %s34 = sphi 0, %s33
      %s50 = sphi 0, %s34
      %s56 = sphi 0, %s58
      %s59 = sphi 0, %s56
      %s60 = sphi 0, %s59
      %s76 = sphi 0, %s60
      %s80 = sphi 0, %s80
      %s82 = sphi 0, %s80
      %s83 = sphi 0, %s82
      %s97 = sphi 0, %s83
      %s101 = sphi 0, %s101
      %s103 = sphi 0, %s101
      %s104 = sphi 0, %s103
      %s118 = sphi 0, %s104
      %s124 = sphi 0, %s126
      %s127 = sphi 0, %s124
      %s128 = sphi 0, %s127
      %s144 = sphi 0, %s128
    $region4: #{s4block_forward.2} parent=1 // loop_header_branch
      %23 = sbr.rel (%p21) target = $region8
    $region5: #{s4block_forward.2} parent=1 // loop_body
      %s25 = ssub.s32 %s20, 1
      %s26 = ssub.s32 %s20, 2
      %s27 = sadd.s32 %s20, 1
      %s28 = ssub.s32 %s20, %s27
      %p29 = scmp.eq.s32.totalorder %s28, 0
      %s31 = sadd.s32 %s30, 1
      %s32 = scalar_select %p29, %s30, %s31
      %p35 = pneg %p29
      %p36 = scmp.eq.s32.totalorder %s20, 3
      %p37 = por %p35, %p36
      %p38 = scmp.ne.s32.totalorder %s30, %s33
      %p39 = scmp.eq.s32.totalorder %s20, 0
      %p40 = por %p38, %p39
      %p41 = scmp.ne.s32.totalorder %s30, %s33
      %p42 = scmp.eq.s32.totalorder %s25, 3
      %p43 = por %p41, %p42
      %p44 = scmp.ne.s32.totalorder %s33, %s34
      %p45 = scmp.eq.s32.totalorder %s25, 0
      %p46 = por %p44, %p45
      %p47 = scmp.ne.s32.totalorder %s33, %s34
      %p48 = scmp.eq.s32.totalorder %s26, 3
      %p49 = por %p47, %p48
      %p51 = scmp.ne.s32.totalorder %s34, %s50
      %p52 = scmp.eq.s32.totalorder %s26, 0
      %p53 = por %p51, %p52
      %s54 = ssub.s32 %s20, %s27
      %p55 = scmp.eq.s32.totalorder %s54, 0
      %s57 = sadd.s32 %s56, 1
      %s58 = scalar_select %p55, %s56, %s57
      %p61 = pneg %p55
      %p62 = scmp.eq.s32.totalorder %s20, 3
      %p63 = por %p61, %p62
      %p64 = scmp.ne.s32.totalorder %s56, %s59
      %p65 = scmp.eq.s32.totalorder %s20, 0
      %p66 = por %p64, %p65
      %p67 = scmp.ne.s32.totalorder %s56, %s59
      %p68 = scmp.eq.s32.totalorder %s25, 3
      %p69 = por %p67, %p68
      %p70 = scmp.ne.s32.totalorder %s59, %s60
      %p71 = scmp.eq.s32.totalorder %s25, 0
      %p72 = por %p70, %p71
      %p73 = scmp.ne.s32.totalorder %s59, %s60
      %p74 = scmp.eq.s32.totalorder %s26, 3
      %p75 = por %p73, %p74
      %p77 = scmp.ne.s32.totalorder %s60, %s76
      %p78 = scmp.eq.s32.totalorder %s26, 0
      %p79 = por %p77, %p78
      %s81 = sadd.s32 %s80, 1
      %p84 = scmp.eq.s32.totalorder %s20, 3
      %p85 = scmp.ne.s32.totalorder %s80, %s82
      %p86 = scmp.eq.s32.totalorder %s20, 0
      %p87 = por %p85, %p86
      %p88 = scmp.ne.s32.totalorder %s80, %s82
      %p89 = scmp.eq.s32.totalorder %s25, 3
      %p90 = por %p88, %p89
      %p91 = scmp.ne.s32.totalorder %s82, %s83
      %p92 = scmp.eq.s32.totalorder %s25, 0
      %p93 = por %p91, %p92
      %p94 = scmp.ne.s32.totalorder %s82, %s83
      %p95 = scmp.eq.s32.totalorder %s26, 3
      %p96 = por %p94, %p95
      %p98 = scmp.ne.s32.totalorder %s83, %s97
      %p99 = scmp.eq.s32.totalorder %s26, 0
      %p100 = por %p98, %p99
      %s102 = sadd.s32 %s101, 1
      %p105 = scmp.eq.s32.totalorder %s20, 3
      %p106 = scmp.ne.s32.totalorder %s101, %s103
      %p107 = scmp.eq.s32.totalorder %s20, 0
      %p108 = por %p106, %p107
      %p109 = scmp.ne.s32.totalorder %s101, %s103
      %p110 = scmp.eq.s32.totalorder %s25, 3
      %p111 = por %p109, %p110
      %p112 = scmp.ne.s32.totalorder %s103, %s104
      %p113 = scmp.eq.s32.totalorder %s25, 0
      %p114 = por %p112, %p113
      %p115 = scmp.ne.s32.totalorder %s103, %s104
      %p116 = scmp.eq.s32.totalorder %s26, 3
      %p117 = por %p115, %p116
      %p119 = scmp.ne.s32.totalorder %s104, %s118
      %p120 = scmp.eq.s32.totalorder %s26, 0
      %p121 = por %p119, %p120
      %s122 = ssub.s32 %s20, %s27
      %p123 = scmp.eq.s32.totalorder %s122, 0
      %s125 = sadd.s32 %s124, 1
      %s126 = scalar_select %p123, %s124, %s125
      %p129 = pneg %p123
      %p130 = scmp.eq.s32.totalorder %s20, 3
      %p131 = por %p129, %p130
      %p132 = scmp.ne.s32.totalorder %s124, %s127
      %p133 = scmp.eq.s32.totalorder %s20, 0
      %p134 = por %p132, %p133
      %p135 = scmp.ne.s32.totalorder %s124, %s127
      %p136 = scmp.eq.s32.totalorder %s25, 3
      %p137 = por %p135, %p136
      %p138 = scmp.ne.s32.totalorder %s127, %s128
      %p139 = scmp.eq.s32.totalorder %s25, 0
      %p140 = por %p138, %p139
      %p141 = scmp.ne.s32.totalorder %s127, %s128
      %p142 = scmp.eq.s32.totalorder %s26, 3
      %p143 = por %p141, %p142
      %p145 = scmp.ne.s32.totalorder %s128, %s144
      %p146 = scmp.eq.s32.totalorder %s26, 0
      %p147 = por %p145, %p146
      %p148 = scmp.le.s32.totalorder 1, %s20
      %p149 = scmp.lt.s32.totalorder %s20, 5
      %p150 = pnand %p148, %p149
      %p151 = pneg %p150
      // Predicated region
      $region9: #{s4block_forward.2} parent=5 // pred_check
        _
      $region10: #{s4block_forward.2} parent=5 // pred_check_branch
        %153 = sbr.rel (%p150) target = $region12
      $region11: #{s4block_forward.2} parent=5 // pred_region
        %s154 = ssub.s32 %s20, 1
        // Predicated region
        $region13: #{s4block_forward.2} parent=11 // pred_check
          %p155 = pneg %p93
        $region14: #{s4block_forward.2} parent=11 // pred_check_branch
          %157 = sbr.rel (%p155) target = $region16
        $region15: #{s4block_forward.2} parent=11 // pred_region
          %s159 = ssub.s32 1536, 1536
          %160 = vsyncadd [#allocation6], %s159
          %s161 = sshll.u32 [#allocation7], 4
          %s162 = int_to_ptr.vmem [resolvable:$true] %s161
          %167 = dma.hbm_to_vmem [thread:$0]  %s2, 1536, %s162, [#allocation6], 16, 16, 1
        $region16: #{s4block_forward.2} parent=11 // pred_fallthru
          _
        // Predicated region
        $region17: #{s4block_forward.2} parent=11 // pred_check
          %p168 = pneg %p114
        $region18: #{s4block_forward.2} parent=11 // pred_check_branch
          %170 = sbr.rel (%p168) target = $region20
        $region19: #{s4block_forward.2} parent=11 // pred_region
          %s172 = ssub.s32 32768, 32768
          %173 = vsyncadd [#allocation9], %s172
          %s174 = sshll.u32 [#allocation8], 4
          %s175 = int_to_ptr.vmem [resolvable:$true] %s174
          %180 = dma.hbm_to_vmem [thread:$0]  %s3, 32768, %s175, [#allocation9], 64, 64, 4
        $region20: #{s4block_forward.2} parent=11 // pred_fallthru
          _
      $region12: #{s4block_forward.2} parent=5 // pred_fallthru
        _
      %p181 = scmp.lt.s32.totalorder %s20, 4
      // Predicated region
      $region21: #{s4block_forward.2} parent=5 // pred_check
        %p182 = pneg %p181
      $region22: #{s4block_forward.2} parent=5 // pred_check_branch
        %184 = sbr.rel (%p182) target = $region24
      $region23: #{s4block_forward.2} parent=5 // pred_region
        // Predicated region
        $region25: #{s4block_forward.2} parent=23 // pred_check
          %p185 = pneg %p40
        $region26: #{s4block_forward.2} parent=23 // pred_check_branch
          %187 = sbr.rel (%p185) target = $region28
        $region27: #{s4block_forward.2} parent=23 // pred_region
          %s188 = sand.u32 %s30, 1
          %s189 = scalar_lea.sflag [#allocation3], %s188
          %s190 = sand.u32 %s30, 1
          %s191 = smul.addr %s190, 64
          %s192 = scalar_lea.vmem [#allocation2], %s191
          %s194 = ssub.s32 1024, 1024
          %195 = vsyncadd %s189, %s194
          %s196 = smul.addr %s20, 32
          %s197 = smul.addr %s196, 32
          %s198 = scalar_lea.hbm %s0, %s197
          %s199 = sshll.u32 %s192, 4
          %s200 = int_to_ptr.vmem [resolvable:$true] %s199
          %205 = dma.hbm_to_vmem [thread:$0]  %s198, 1024, %s200, %s189, 32, 32, 2
        $region28: #{s4block_forward.2} parent=23 // pred_fallthru
          _
        // Predicated region
        $region29: #{s4block_forward.2} parent=23 // pred_check
          %p206 = pneg %p66
        $region30: #{s4block_forward.2} parent=23 // pred_check_branch
          %208 = sbr.rel (%p206) target = $region32
        $region31: #{s4block_forward.2} parent=23 // pred_region
          %s209 = sand.u32 %s20, 1
          %s210 = scalar_lea.sflag [#allocation6], %s209
          %s211 = sand.u32 %s56, 1
          %s212 = smul.addr %s211, 64
          %s213 = scalar_lea.vmem [#allocation5], %s212
          %s215 = ssub.s32 1024, 1024
          %216 = vsyncadd %s210, %s215
          %s217 = smul.addr %s20, 32
          %s218 = smul.addr %s217, 32
          %s219 = scalar_lea.hbm %s1, %s218
          %s220 = sshll.u32 %s213, 4
          %s221 = int_to_ptr.vmem [resolvable:$true] %s220
          %226 = dma.hbm_to_vmem [thread:$0]  %s219, 1024, %s221, %s210, 32, 32, 2
        $region32: #{s4block_forward.2} parent=23 // pred_fallthru
          _
      $region24: #{s4block_forward.2} parent=5 // pred_fallthru
        _
      %p227 = scmp.le.s32.totalorder 1, %s20
      %p228 = scmp.lt.s32.totalorder %s20, 5
      %p229 = pnand %p227, %p228
      %p230 = pneg %p229
      // Predicated region
      $region33: #{s4block_forward.2} parent=5 // pred_check
        _
      $region34: #{s4block_forward.2} parent=5 // pred_check_branch
        %232 = sbr.rel (%p229) target = $region36
      $region35: #{s4block_forward.2} parent=5 // pred_region
        %s233 = ssub.s32 %s20, 1
        %s234 = sand.u32 %s33, 1
        %s235 = scalar_lea.sflag [#allocation3], %s234
        %s236 = sand.u32 %s33, 1
        %s237 = smul.addr %s236, 64
        %s238 = scalar_lea.vmem [#allocation2], %s237
        // Predicated region
        $region37: #{s4block_forward.2} parent=35 // pred_check
          %p239 = pneg %p46
        $region38: #{s4block_forward.2} parent=35 // pred_check_branch
          %241 = sbr.rel (%p239) target = $region40
        $region39: #{s4block_forward.2} parent=35 // pred_region
          %242 = dma.done %s235, 1024
        $region40: #{s4block_forward.2} parent=35 // pred_fallthru
          _
        %s243 = sand.u32 %s25, 1
        %s244 = scalar_lea.sflag [#allocation6], %s243
        %s245 = sand.u32 %s59, 1
        %s246 = smul.addr %s245, 64
        %s247 = scalar_lea.vmem [#allocation5], %s246
        // Predicated region
        $region41: #{s4block_forward.2} parent=35 // pred_check
          %p248 = pneg %p72
        $region42: #{s4block_forward.2} parent=35 // pred_check_branch
          %250 = sbr.rel (%p248) target = $region44
        $region43: #{s4block_forward.2} parent=35 // pred_region
          %251 = dma.done %s244, 1024
        $region44: #{s4block_forward.2} parent=35 // pred_fallthru
          _
        // Predicated region
        $region45: #{s4block_forward.2} parent=35 // pred_check
          %p252 = pneg %p93
        $region46: #{s4block_forward.2} parent=35 // pred_check_branch
          %254 = sbr.rel (%p252) target = $region48
        $region47: #{s4block_forward.2} parent=35 // pred_region
          %255 = dma.done [#allocation6], 1536
        $region48: #{s4block_forward.2} parent=35 // pred_fallthru
          _
        // Predicated region
        $region49: #{s4block_forward.2} parent=35 // pred_check
          %p256 = pneg %p114
        $region50: #{s4block_forward.2} parent=35 // pred_check_branch
          %258 = sbr.rel (%p256) target = $region52
        $region51: #{s4block_forward.2} parent=35 // pred_region
          %259 = dma.done [#allocation9], 32768
        $region52: #{s4block_forward.2} parent=35 // pred_fallthru
          _
        %s260 = sand.u32 %s33, 1
        %s261 = scalar_lea.sflag [#allocation3], %s260
        %s262 = sand.u32 %s33, 1
        %s263 = smul.addr %s262, 64
        %s264 = scalar_lea.vmem [#allocation2], %s263
        %p265 = pneg %p46
        %p266 = pneg %p43
        %s267 = sand.u32 %s25, 1
        %s268 = scalar_lea.sflag [#allocation6], %s267
        %s269 = sand.u32 %s59, 1
        %s270 = smul.addr %s269, 64
        %s271 = scalar_lea.vmem [#allocation5], %s270
        %p272 = pneg %p72
        %p273 = pneg %p69
        %p274 = pneg %p93
        %p275 = pneg %p90
        %p276 = pneg %p114
        %p277 = pneg %p111
        %p278 = pneg %p140
        %p279 = pneg %p137
        %s280 = sand.u32 %s127, 1
        %s281 = scalar_lea.sflag [#allocation4], %s280
        %s282 = sand.u32 %s127, 1
        %s283 = smul.addr %s282, 32
        %s284 = scalar_lea.vmem [#allocation10], %s283
        %v286 = vld [vmem:[%s238] sm:$0x3]
        %v287 = vld [vmem:[%s238 + $0x2] sm:$0x3]
        %v288 = vld [vmem:[%s238 + $0x4] sm:$0x3]
        %v289 = vld [vmem:[%s238 + $0x6] sm:$0x3]
        %v290 = vld [vmem:[%s238 + $0x8] sm:$0x3]
        %v291 = vld [vmem:[%s238 + $0xa] sm:$0x3]
        %v292 = vld [vmem:[%s238 + $0xc] sm:$0x3]
        %v293 = vld [vmem:[%s238 + $0xe] sm:$0x3]
        %v294 = vld [vmem:[%s238 + $0x10] sm:$0x3]
        %v295 = vld [vmem:[%s238 + $0x12] sm:$0x3]
        %v296 = vld [vmem:[%s238 + $0x14] sm:$0x3]
        %v297 = vld [vmem:[%s238 + $0x16] sm:$0x3]
        %v298 = vld [vmem:[%s238 + $0x18] sm:$0x3]
        %v299 = vld [vmem:[%s238 + $0x1a] sm:$0x3]
        %v300 = vld [vmem:[%s238 + $0x1c] sm:$0x3]
        %v301 = vld [vmem:[%s238 + $0x1e] sm:$0x3]
        %v302 = vld [vmem:[%s238 + $0x20] sm:$0x3]
        %v303 = vld [vmem:[%s238 + $0x22] sm:$0x3]
        %v304 = vld [vmem:[%s238 + $0x24] sm:$0x3]
        %v305 = vld [vmem:[%s238 + $0x26] sm:$0x3]
        %v306 = vld [vmem:[%s238 + $0x28] sm:$0x3]
        %v307 = vld [vmem:[%s238 + $0x2a] sm:$0x3]
        %v308 = vld [vmem:[%s238 + $0x2c] sm:$0x3]
        %v309 = vld [vmem:[%s238 + $0x2e] sm:$0x3]
        %v310 = vld [vmem:[%s238 + $0x30] sm:$0x3]
        %v311 = vld [vmem:[%s238 + $0x32] sm:$0x3]
        %v312 = vld [vmem:[%s238 + $0x34] sm:$0x3]
        %v313 = vld [vmem:[%s238 + $0x36] sm:$0x3]
        %v314 = vld [vmem:[%s238 + $0x38] sm:$0x3]
        %v315 = vld [vmem:[%s238 + $0x3a] sm:$0x3]
        %v316 = vld [vmem:[%s238 + $0x3c] sm:$0x3]
        %v317 = vld [vmem:[%s238 + $0x3e] sm:$0x3]
        %v318 = vld [vmem:[%s247] sm:$0x3]
        %v319 = vld [vmem:[%s247 + $0x2] sm:$0x3]
        %v320 = vld [vmem:[%s247 + $0x4] sm:$0x3]
        %v321 = vld [vmem:[%s247 + $0x6] sm:$0x3]
        %v322 = vld [vmem:[%s247 + $0x8] sm:$0x3]
        %v323 = vld [vmem:[%s247 + $0xa] sm:$0x3]
        %v324 = vld [vmem:[%s247 + $0xc] sm:$0x3]
        %v325 = vld [vmem:[%s247 + $0xe] sm:$0x3]
        %v326 = vld [vmem:[%s247 + $0x10] sm:$0x3]
        %v327 = vld [vmem:[%s247 + $0x12] sm:$0x3]
        %v328 = vld [vmem:[%s247 + $0x14] sm:$0x3]
        %v329 = vld [vmem:[%s247 + $0x16] sm:$0x3]
        %v330 = vld [vmem:[%s247 + $0x18] sm:$0x3]
        %v331 = vld [vmem:[%s247 + $0x1a] sm:$0x3]
        %v332 = vld [vmem:[%s247 + $0x1c] sm:$0x3]
        %v333 = vld [vmem:[%s247 + $0x1e] sm:$0x3]
        %v334 = vld [vmem:[%s247 + $0x20] sm:$0x3]
        %v335 = vld [vmem:[%s247 + $0x22] sm:$0x3]
        %v336 = vld [vmem:[%s247 + $0x24] sm:$0x3]
        %v337 = vld [vmem:[%s247 + $0x26] sm:$0x3]
        %v338 = vld [vmem:[%s247 + $0x28] sm:$0x3]
        %v339 = vld [vmem:[%s247 + $0x2a] sm:$0x3]
        %v340 = vld [vmem:[%s247 + $0x2c] sm:$0x3]
        %v341 = vld [vmem:[%s247 + $0x2e] sm:$0x3]
        %v342 = vld [vmem:[%s247 + $0x30] sm:$0x3]
        %v343 = vld [vmem:[%s247 + $0x32] sm:$0x3]
        %v344 = vld [vmem:[%s247 + $0x34] sm:$0x3]
        %v345 = vld [vmem:[%s247 + $0x36] sm:$0x3]
        %v346 = vld [vmem:[%s247 + $0x38] sm:$0x3]
        %v347 = vld [vmem:[%s247 + $0x3a] sm:$0x3]
        %v348 = vld [vmem:[%s247 + $0x3c] sm:$0x3]
        %v349 = vld [vmem:[%s247 + $0x3e] sm:$0x3]
        %v350 = vld [vmem:[#allocation7] sm:$0x1]
        %v351 = vld [vmem:[#allocation7 + $0x1] sm:$0x1]
        %v352 = vld [vmem:[#allocation7 + $0x2] sm:$0x1]
        %v353 = vld [vmem:[#allocation7 + $0x3] sm:$0x1]
        %v354 = vld [vmem:[#allocation7 + $0x4] sm:$0x1]
        %v355 = vld [vmem:[#allocation7 + $0x5] sm:$0x1]
        %v356 = vld [vmem:[#allocation7 + $0x6] sm:$0x1]
        %v357 = vld [vmem:[#allocation7 + $0x7] sm:$0x1]
        %v358 = vld [vmem:[#allocation7 + $0x8] sm:$0x1]
        %v359 = vld [vmem:[#allocation7 + $0x9] sm:$0x1]
        %v360 = vld [vmem:[#allocation7 + $0xa] sm:$0x1]
        %v361 = vld [vmem:[#allocation7 + $0xb] sm:$0x1]
        %v362 = vld [vmem:[#allocation7 + $0xc] sm:$0x1]
        %v363 = vld [vmem:[#allocation7 + $0xd] sm:$0x1]
        %v364 = vld [vmem:[#allocation7 + $0xe] sm:$0x1]
        %v365 = vld [vmem:[#allocation7 + $0xf] sm:$0x1]
        %v366 = vld [vmem:[#allocation7 + $0x10] sm:$0x1]
        %v367 = vld [vmem:[#allocation7 + $0x11] sm:$0x1]
        %v368 = vld [vmem:[#allocation7 + $0x12] sm:$0x1]
        %v369 = vld [vmem:[#allocation7 + $0x13] sm:$0x1]
        %v370 = vld [vmem:[#allocation7 + $0x14] sm:$0x1]
        %v371 = vld [vmem:[#allocation7 + $0x15] sm:$0x1]
        %v372 = vld [vmem:[#allocation7 + $0x16] sm:$0x1]
        %v373 = vld [vmem:[#allocation7 + $0x17] sm:$0x1]
        %v374 = vld [vmem:[#allocation7 + $0x18] sm:$0x1]
        %v375 = vld [vmem:[#allocation7 + $0x19] sm:$0x1]
        %v376 = vld [vmem:[#allocation7 + $0x1a] sm:$0x1]
        %v377 = vld [vmem:[#allocation7 + $0x1b] sm:$0x1]
        %v378 = vld [vmem:[#allocation7 + $0x1c] sm:$0x1]
        %v379 = vld [vmem:[#allocation7 + $0x1d] sm:$0x1]
        %v380 = vld [vmem:[#allocation7 + $0x1e] sm:$0x1]
        %v381 = vld [vmem:[#allocation7 + $0x1f] sm:$0x1]
        %s382 = scalar_lea.vmem [#allocation7], 32
        %v383 = vld [vmem:[%s382] sm:$0x1]
        %v384 = vld [vmem:[%s382 + $0x1] sm:$0x1]
        %v385 = vld [vmem:[%s382 + $0x2] sm:$0x1]
        %v386 = vld [vmem:[%s382 + $0x3] sm:$0x1]
        %v387 = vld [vmem:[%s382 + $0x4] sm:$0x1]
        %v388 = vld [vmem:[%s382 + $0x5] sm:$0x1]
        %v389 = vld [vmem:[%s382 + $0x6] sm:$0x1]
        %v390 = vld [vmem:[%s382 + $0x7] sm:$0x1]
        %v391 = vld [vmem:[%s382 + $0x8] sm:$0x1]
        %v392 = vld [vmem:[%s382 + $0x9] sm:$0x1]
        %v393 = vld [vmem:[%s382 + $0xa] sm:$0x1]
        %v394 = vld [vmem:[%s382 + $0xb] sm:$0x1]
        %v395 = vld [vmem:[%s382 + $0xc] sm:$0x1]
        %v396 = vld [vmem:[%s382 + $0xd] sm:$0x1]
        %v397 = vld [vmem:[%s382 + $0xe] sm:$0x1]
        %v398 = vld [vmem:[%s382 + $0xf] sm:$0x1]
        %v399 = vld [vmem:[%s382 + $0x10] sm:$0x1]
        %v400 = vld [vmem:[%s382 + $0x11] sm:$0x1]
        %v401 = vld [vmem:[%s382 + $0x12] sm:$0x1]
        %v402 = vld [vmem:[%s382 + $0x13] sm:$0x1]
        %v403 = vld [vmem:[%s382 + $0x14] sm:$0x1]
        %v404 = vld [vmem:[%s382 + $0x15] sm:$0x1]
        %v405 = vld [vmem:[%s382 + $0x16] sm:$0x1]
        %v406 = vld [vmem:[%s382 + $0x17] sm:$0x1]
        %v407 = vld [vmem:[%s382 + $0x18] sm:$0x1]
        %v408 = vld [vmem:[%s382 + $0x19] sm:$0x1]
        %v409 = vld [vmem:[%s382 + $0x1a] sm:$0x1]
        %v410 = vld [vmem:[%s382 + $0x1b] sm:$0x1]
        %v411 = vld [vmem:[%s382 + $0x1c] sm:$0x1]
        %v412 = vld [vmem:[%s382 + $0x1d] sm:$0x1]
        %v413 = vld [vmem:[%s382 + $0x1e] sm:$0x1]
        %v414 = vld [vmem:[%s382 + $0x1f] sm:$0x1]
        %s415 = scalar_lea.vmem [#allocation7], 64
        %v416 = vld [vmem:[%s415] sm:$0x1]
        %v417 = vld [vmem:[%s415 + $0x1] sm:$0x1]
        %v418 = vld [vmem:[%s415 + $0x2] sm:$0x1]
        %v419 = vld [vmem:[%s415 + $0x3] sm:$0x1]
        %v420 = vld [vmem:[%s415 + $0x4] sm:$0x1]
        %v421 = vld [vmem:[%s415 + $0x5] sm:$0x1]
        %v422 = vld [vmem:[%s415 + $0x6] sm:$0x1]
        %v423 = vld [vmem:[%s415 + $0x7] sm:$0x1]
        %v424 = vld [vmem:[%s415 + $0x8] sm:$0x1]
        %v425 = vld [vmem:[%s415 + $0x9] sm:$0x1]
        %v426 = vld [vmem:[%s415 + $0xa] sm:$0x1]
        %v427 = vld [vmem:[%s415 + $0xb] sm:$0x1]
        %v428 = vld [vmem:[%s415 + $0xc] sm:$0x1]
        %v429 = vld [vmem:[%s415 + $0xd] sm:$0x1]
        %v430 = vld [vmem:[%s415 + $0xe] sm:$0x1]
        %v431 = vld [vmem:[%s415 + $0xf] sm:$0x1]
        %v432 = vld [vmem:[%s415 + $0x10] sm:$0x1]
        %v433 = vld [vmem:[%s415 + $0x11] sm:$0x1]
        %v434 = vld [vmem:[%s415 + $0x12] sm:$0x1]
        %v435 = vld [vmem:[%s415 + $0x13] sm:$0x1]
        %v436 = vld [vmem:[%s415 + $0x14] sm:$0x1]
        %v437 = vld [vmem:[%s415 + $0x15] sm:$0x1]
        %v438 = vld [vmem:[%s415 + $0x16] sm:$0x1]
        %v439 = vld [vmem:[%s415 + $0x17] sm:$0x1]
        %v440 = vld [vmem:[%s415 + $0x18] sm:$0x1]
        %v441 = vld [vmem:[%s415 + $0x19] sm:$0x1]
        %v442 = vld [vmem:[%s415 + $0x1a] sm:$0x1]
        %v443 = vld [vmem:[%s415 + $0x1b] sm:$0x1]
        %v444 = vld [vmem:[%s415 + $0x1c] sm:$0x1]
        %v445 = vld [vmem:[%s415 + $0x1d] sm:$0x1]
        %v446 = vld [vmem:[%s415 + $0x1e] sm:$0x1]
        %v447 = vld [vmem:[%s415 + $0x1f] sm:$0x1]
        %449 = vset.pattern.permute.xlu0 0
        %450 = vperm.xlu0 %449, %v318
        %v451 = vpop.permute.xlu0 %450
        %454 = vset.pattern.permute.xlu0 0
        %455 = vperm.xlu0 %454, %v319
        %v456 = vpop.permute.xlu0 %455
        %459 = vset.pattern.permute.xlu0 0
        %460 = vperm.xlu0 %459, %v320
        %v461 = vpop.permute.xlu0 %460
        %464 = vset.pattern.permute.xlu0 0
        %465 = vperm.xlu0 %464, %v321
        %v466 = vpop.permute.xlu0 %465
        %469 = vset.pattern.permute.xlu0 0
        %470 = vperm.xlu0 %469, %v322
        %v471 = vpop.permute.xlu0 %470
        %474 = vset.pattern.permute.xlu0 0
        %475 = vperm.xlu0 %474, %v323
        %v476 = vpop.permute.xlu0 %475
        %479 = vset.pattern.permute.xlu0 0
        %480 = vperm.xlu0 %479, %v324
        %v481 = vpop.permute.xlu0 %480
        %484 = vset.pattern.permute.xlu0 0
        %485 = vperm.xlu0 %484, %v325
        %v486 = vpop.permute.xlu0 %485
        %489 = vset.pattern.permute.xlu0 0
        %490 = vperm.xlu0 %489, %v326
        %v491 = vpop.permute.xlu0 %490
        %494 = vset.pattern.permute.xlu0 0
        %495 = vperm.xlu0 %494, %v327
        %v496 = vpop.permute.xlu0 %495
        %499 = vset.pattern.permute.xlu0 0
        %500 = vperm.xlu0 %499, %v328
        %v501 = vpop.permute.xlu0 %500
        %504 = vset.pattern.permute.xlu0 0
        %505 = vperm.xlu0 %504, %v329
        %v506 = vpop.permute.xlu0 %505
        %509 = vset.pattern.permute.xlu0 0
        %510 = vperm.xlu0 %509, %v330
        %v511 = vpop.permute.xlu0 %510
        %514 = vset.pattern.permute.xlu0 0
        %515 = vperm.xlu0 %514, %v331
        %v516 = vpop.permute.xlu0 %515
        %519 = vset.pattern.permute.xlu0 0
        %520 = vperm.xlu0 %519, %v332
        %v521 = vpop.permute.xlu0 %520
        %524 = vset.pattern.permute.xlu0 0
        %525 = vperm.xlu0 %524, %v333
        %v526 = vpop.permute.xlu0 %525
        %529 = vset.pattern.permute.xlu0 0
        %530 = vperm.xlu0 %529, %v334
        %v531 = vpop.permute.xlu0 %530
        %534 = vset.pattern.permute.xlu0 0
        %535 = vperm.xlu0 %534, %v335
        %v536 = vpop.permute.xlu0 %535
        %539 = vset.pattern.permute.xlu0 0
        %540 = vperm.xlu0 %539, %v336
        %v541 = vpop.permute.xlu0 %540
        %544 = vset.pattern.permute.xlu0 0
        %545 = vperm.xlu0 %544, %v337
        %v546 = vpop.permute.xlu0 %545
        %549 = vset.pattern.permute.xlu0 0
        %550 = vperm.xlu0 %549, %v338
        %v551 = vpop.permute.xlu0 %550
        %554 = vset.pattern.permute.xlu0 0
        %555 = vperm.xlu0 %554, %v339
        %v556 = vpop.permute.xlu0 %555
        %559 = vset.pattern.permute.xlu0 0
        %560 = vperm.xlu0 %559, %v340
        %v561 = vpop.permute.xlu0 %560
        %564 = vset.pattern.permute.xlu0 0
        %565 = vperm.xlu0 %564, %v341
        %v566 = vpop.permute.xlu0 %565
        %569 = vset.pattern.permute.xlu0 0
        %570 = vperm.xlu0 %569, %v342
        %v571 = vpop.permute.xlu0 %570
        %574 = vset.pattern.permute.xlu0 0
        %575 = vperm.xlu0 %574, %v343
        %v576 = vpop.permute.xlu0 %575
        %579 = vset.pattern.permute.xlu0 0
        %580 = vperm.xlu0 %579, %v344
        %v581 = vpop.permute.xlu0 %580
        %584 = vset.pattern.permute.xlu0 0
        %585 = vperm.xlu0 %584, %v345
        %v586 = vpop.permute.xlu0 %585
        %589 = vset.pattern.permute.xlu0 0
        %590 = vperm.xlu0 %589, %v346
        %v591 = vpop.permute.xlu0 %590
        %594 = vset.pattern.permute.xlu0 0
        %595 = vperm.xlu0 %594, %v347
        %v596 = vpop.permute.xlu0 %595
        %599 = vset.pattern.permute.xlu0 0
        %600 = vperm.xlu0 %599, %v348
        %v601 = vpop.permute.xlu0 %600
        %604 = vset.pattern.permute.xlu0 0
        %605 = vperm.xlu0 %604, %v349
        %v606 = vpop.permute.xlu0 %605
        %v608 = vadd.f32 %v286, %v451
        %v609 = vadd.f32 %v287, %v456
        %v610 = vadd.f32 %v288, %v461
        %v611 = vadd.f32 %v289, %v466
        %v612 = vadd.f32 %v290, %v471
        %v613 = vadd.f32 %v291, %v476
        %v614 = vadd.f32 %v292, %v481
        %v615 = vadd.f32 %v293, %v486
        %v616 = vadd.f32 %v294, %v491
        %v617 = vadd.f32 %v295, %v496
        %v618 = vadd.f32 %v296, %v501
        %v619 = vadd.f32 %v297, %v506
        %v620 = vadd.f32 %v298, %v511
        %v621 = vadd.f32 %v299, %v516
        %v622 = vadd.f32 %v300, %v521
        %v623 = vadd.f32 %v301, %v526
        %v624 = vadd.f32 %v302, %v531
        %v625 = vadd.f32 %v303, %v536
        %v626 = vadd.f32 %v304, %v541
        %v627 = vadd.f32 %v305, %v546
        %v628 = vadd.f32 %v306, %v551
        %v629 = vadd.f32 %v307, %v556
        %v630 = vadd.f32 %v308, %v561
        %v631 = vadd.f32 %v309, %v566
        %v632 = vadd.f32 %v310, %v571
        %v633 = vadd.f32 %v311, %v576
        %v634 = vadd.f32 %v312, %v581
        %v635 = vadd.f32 %v313, %v586
        %v636 = vadd.f32 %v314, %v591
        %v637 = vadd.f32 %v315, %v596
        %v638 = vadd.f32 %v316, %v601
        %v639 = vadd.f32 %v317, %v606
        %vm640 = vcmask 1041408
        %v641 = vsel %vm640, %v608, 0.0
        %v642 = vsel %vm640, %v609, 0.0
        %v643 = vadd.f32 %v641, %v642
        %v644 = vsel %vm640, %v610, 0.0
        %v645 = vadd.f32 %v643, %v644
        %v646 = vsel %vm640, %v611, 0.0
        %v647 = vadd.f32 %v645, %v646
        %v648 = vsel %vm640, %v612, 0.0
        %v649 = vadd.f32 %v647, %v648
        %v650 = vsel %vm640, %v613, 0.0
        %v651 = vadd.f32 %v649, %v650
        %v652 = vsel %vm640, %v614, 0.0
        %v653 = vadd.f32 %v651, %v652
        %v654 = vsel %vm640, %v615, 0.0
        %v655 = vadd.f32 %v653, %v654
        %v656 = vsel %vm640, %v616, 0.0
        %v657 = vadd.f32 %v655, %v656
        %v658 = vsel %vm640, %v617, 0.0
        %v659 = vadd.f32 %v657, %v658
        %v660 = vsel %vm640, %v618, 0.0
        %v661 = vadd.f32 %v659, %v660
        %v662 = vsel %vm640, %v619, 0.0
        %v663 = vadd.f32 %v661, %v662
        %v664 = vsel %vm640, %v620, 0.0
        %v665 = vadd.f32 %v663, %v664
        %v666 = vsel %vm640, %v621, 0.0
        %v667 = vadd.f32 %v665, %v666
        %v668 = vsel %vm640, %v622, 0.0
        %v669 = vadd.f32 %v667, %v668
        %v670 = vsel %vm640, %v623, 0.0
        %v671 = vadd.f32 %v669, %v670
        %v672 = vsel %vm640, %v624, 0.0
        %v673 = vadd.f32 %v671, %v672
        %v674 = vsel %vm640, %v625, 0.0
        %v675 = vadd.f32 %v673, %v674
        %v676 = vsel %vm640, %v626, 0.0
        %v677 = vadd.f32 %v675, %v676
        %v678 = vsel %vm640, %v627, 0.0
        %v679 = vadd.f32 %v677, %v678
        %v680 = vsel %vm640, %v628, 0.0
        %v681 = vadd.f32 %v679, %v680
        %v682 = vsel %vm640, %v629, 0.0
        %v683 = vadd.f32 %v681, %v682
        %v684 = vsel %vm640, %v630, 0.0
        %v685 = vadd.f32 %v683, %v684
        %v686 = vsel %vm640, %v631, 0.0
        %v687 = vadd.f32 %v685, %v686
        %v688 = vsel %vm640, %v632, 0.0
        %v689 = vadd.f32 %v687, %v688
        %v690 = vsel %vm640, %v633, 0.0
        %v691 = vadd.f32 %v689, %v690
        %v692 = vsel %vm640, %v634, 0.0
        %v693 = vadd.f32 %v691, %v692
        %v694 = vsel %vm640, %v635, 0.0
        %v695 = vadd.f32 %v693, %v694
        %v696 = vsel %vm640, %v636, 0.0
        %v697 = vadd.f32 %v695, %v696
        %v698 = vsel %vm640, %v637, 0.0
        %v699 = vadd.f32 %v697, %v698
        %v700 = vsel %vm640, %v638, 0.0
        %v701 = vadd.f32 %v699, %v700
        %v702 = vsel %vm640, %v639, 0.0
        %v703 = vadd.f32 %v701, %v702
        %v704 = vrcp.pop 32.0
        %v705 = vmul.f32 %v703, %v704
        %v706 = vsub.f32 %v608, %v705
        %v707 = vsub.f32 %v609, %v705
        %v708 = vsub.f32 %v610, %v705
        %v709 = vsub.f32 %v611, %v705
        %v710 = vsub.f32 %v612, %v705
        %v711 = vsub.f32 %v613, %v705
        %v712 = vsub.f32 %v614, %v705
        %v713 = vsub.f32 %v615, %v705
        %v714 = vsub.f32 %v616, %v705
        %v715 = vsub.f32 %v617, %v705
        %v716 = vsub.f32 %v618, %v705
        %v717 = vsub.f32 %v619, %v705
        %v718 = vsub.f32 %v620, %v705
        %v719 = vsub.f32 %v621, %v705
        %v720 = vsub.f32 %v622, %v705
        %v721 = vsub.f32 %v623, %v705
        %v722 = vsub.f32 %v624, %v705
        %v723 = vsub.f32 %v625, %v705
        %v724 = vsub.f32 %v626, %v705
        %v725 = vsub.f32 %v627, %v705
        %v726 = vsub.f32 %v628, %v705
        %v727 = vsub.f32 %v629, %v705
        %v728 = vsub.f32 %v630, %v705
        %v729 = vsub.f32 %v631, %v705
        %v730 = vsub.f32 %v632, %v705
        %v731 = vsub.f32 %v633, %v705
        %v732 = vsub.f32 %v634, %v705
        %v733 = vsub.f32 %v635, %v705
        %v734 = vsub.f32 %v636, %v705
        %v735 = vsub.f32 %v637, %v705
        %v736 = vsub.f32 %v638, %v705
        %v737 = vsub.f32 %v639, %v705
        %v738 = vmul.f32 %v706, %v706
        %v739 = vmul.f32 %v707, %v707
        %v740 = vmul.f32 %v708, %v708
        %v741 = vmul.f32 %v709, %v709
        %v742 = vmul.f32 %v710, %v710
        %v743 = vmul.f32 %v711, %v711
        %v744 = vmul.f32 %v712, %v712
        %v745 = vmul.f32 %v713, %v713
        %v746 = vmul.f32 %v714, %v714
        %v747 = vmul.f32 %v715, %v715
        %v748 = vmul.f32 %v716, %v716
        %v749 = vmul.f32 %v717, %v717
        %v750 = vmul.f32 %v718, %v718
        %v751 = vmul.f32 %v719, %v719
        %v752 = vmul.f32 %v720, %v720
        %v753 = vmul.f32 %v721, %v721
        %v754 = vmul.f32 %v722, %v722
        %v755 = vmul.f32 %v723, %v723
        %v756 = vmul.f32 %v724, %v724
        %v757 = vmul.f32 %v725, %v725
        %v758 = vmul.f32 %v726, %v726
        %v759 = vmul.f32 %v727, %v727
        %v760 = vmul.f32 %v728, %v728
        %v761 = vmul.f32 %v729, %v729
        %v762 = vmul.f32 %v730, %v730
        %v763 = vmul.f32 %v731, %v731
        %v764 = vmul.f32 %v732, %v732
        %v765 = vmul.f32 %v733, %v733
        %v766 = vmul.f32 %v734, %v734
        %v767 = vmul.f32 %v735, %v735
        %v768 = vmul.f32 %v736, %v736
        %v769 = vmul.f32 %v737, %v737
        %v770 = vsel %vm640, %v738, 0.0
        %v771 = vsel %vm640, %v739, 0.0
        %v772 = vadd.f32 %v770, %v771
        %v773 = vsel %vm640, %v740, 0.0
        %v774 = vadd.f32 %v772, %v773
        %v775 = vsel %vm640, %v741, 0.0
        %v776 = vadd.f32 %v774, %v775
        %v777 = vsel %vm640, %v742, 0.0
        %v778 = vadd.f32 %v776, %v777
        %v779 = vsel %vm640, %v743, 0.0
        %v780 = vadd.f32 %v778, %v779
        %v781 = vsel %vm640, %v744, 0.0
        %v782 = vadd.f32 %v780, %v781
        %v783 = vsel %vm640, %v745, 0.0
        %v784 = vadd.f32 %v782, %v783
        %v785 = vsel %vm640, %v746, 0.0
        %v786 = vadd.f32 %v784, %v785
        %v787 = vsel %vm640, %v747, 0.0
        %v788 = vadd.f32 %v786, %v787
        %v789 = vsel %vm640, %v748, 0.0
        %v790 = vadd.f32 %v788, %v789
        %v791 = vsel %vm640, %v749, 0.0
        %v792 = vadd.f32 %v790, %v791
        %v793 = vsel %vm640, %v750, 0.0
        %v794 = vadd.f32 %v792, %v793
        %v795 = vsel %vm640, %v751, 0.0
        %v796 = vadd.f32 %v794, %v795
        %v797 = vsel %vm640, %v752, 0.0
        %v798 = vadd.f32 %v796, %v797
        %v799 = vsel %vm640, %v753, 0.0
        %v800 = vadd.f32 %v798, %v799
        %v801 = vsel %vm640, %v754, 0.0
        %v802 = vadd.f32 %v800, %v801
        %v803 = vsel %vm640, %v755, 0.0
        %v804 = vadd.f32 %v802, %v803
        %v805 = vsel %vm640, %v756, 0.0
        %v806 = vadd.f32 %v804, %v805
        %v807 = vsel %vm640, %v757, 0.0
        %v808 = vadd.f32 %v806, %v807
        %v809 = vsel %vm640, %v758, 0.0
        %v810 = vadd.f32 %v808, %v809
        %v811 = vsel %vm640, %v759, 0.0
        %v812 = vadd.f32 %v810, %v811
        %v813 = vsel %vm640, %v760, 0.0
        %v814 = vadd.f32 %v812, %v813
        %v815 = vsel %vm640, %v761, 0.0
        %v816 = vadd.f32 %v814, %v815
        %v817 = vsel %vm640, %v762, 0.0
        %v818 = vadd.f32 %v816, %v817
        %v819 = vsel %vm640, %v763, 0.0
        %v820 = vadd.f32 %v818, %v819
        %v821 = vsel %vm640, %v764, 0.0
        %v822 = vadd.f32 %v820, %v821
        %v823 = vsel %vm640, %v765, 0.0
        %v824 = vadd.f32 %v822, %v823
        %v825 = vsel %vm640, %v766, 0.0
        %v826 = vadd.f32 %v824, %v825
        %v827 = vsel %vm640, %v767, 0.0
        %v828 = vadd.f32 %v826, %v827
        %v829 = vsel %vm640, %v768, 0.0
        %v830 = vadd.f32 %v828, %v829
        %v831 = vsel %vm640, %v769, 0.0
        %v832 = vadd.f32 %v830, %v831
        %v833 = vmul.f32 %v832, %v704
        %v834 = vadd.f32 %v833, 1e-05
        %v835 = vrsqrt.pop %v834
        %v836 = vmul.f32 %v706, %v835
        %v837 = vmul.f32 %v707, %v835
        %v838 = vmul.f32 %v708, %v835
        %v839 = vmul.f32 %v709, %v835
        %v840 = vmul.f32 %v710, %v835
        %v841 = vmul.f32 %v711, %v835
        %v842 = vmul.f32 %v712, %v835
        %v843 = vmul.f32 %v713, %v835
        %v844 = vmul.f32 %v714, %v835
        %v845 = vmul.f32 %v715, %v835
        %v846 = vmul.f32 %v716, %v835
        %v847 = vmul.f32 %v717, %v835
        %v848 = vmul.f32 %v718, %v835
        %v849 = vmul.f32 %v719, %v835
        %v850 = vmul.f32 %v720, %v835
        %v851 = vmul.f32 %v721, %v835
        %v852 = vmul.f32 %v722, %v835
        %v853 = vmul.f32 %v723, %v835
        %v854 = vmul.f32 %v724, %v835
        %v855 = vmul.f32 %v725, %v835
        %v856 = vmul.f32 %v726, %v835
        %v857 = vmul.f32 %v727, %v835
        %v858 = vmul.f32 %v728, %v835
        %v859 = vmul.f32 %v729, %v835
        %v860 = vmul.f32 %v730, %v835
        %v861 = vmul.f32 %v731, %v835
        %v862 = vmul.f32 %v732, %v835
        %v863 = vmul.f32 %v733, %v835
        %v864 = vmul.f32 %v734, %v835
        %v865 = vmul.f32 %v735, %v835
        %v866 = vmul.f32 %v736, %v835
        %v867 = vmul.f32 %v737, %v835
        %v900 = vlaneseq
        %v901 = vshrl.u32 %v900, 7
        %v902 = vsub.s32 0, %v901
        %v903 = vrot.slane %v350, %v902
        %v904 = vlaneseq
        %v905 = vshrl.u32 %v904, 7
        %v906 = vsub.s32 0, %v905
        %v907 = vrot.slane %v351, %v906
        %v908 = vlaneseq
        %v909 = vshrl.u32 %v908, 7
        %v910 = vsub.s32 0, %v909
        %v911 = vrot.slane %v352, %v910
        %v912 = vlaneseq
        %v913 = vshrl.u32 %v912, 7
        %v914 = vsub.s32 0, %v913
        %v915 = vrot.slane %v353, %v914
        %v916 = vlaneseq
        %v917 = vshrl.u32 %v916, 7
        %v918 = vsub.s32 0, %v917
        %v919 = vrot.slane %v354, %v918
        %v920 = vlaneseq
        %v921 = vshrl.u32 %v920, 7
        %v922 = vsub.s32 0, %v921
        %v923 = vrot.slane %v355, %v922
        %v924 = vlaneseq
        %v925 = vshrl.u32 %v924, 7
        %v926 = vsub.s32 0, %v925
        %v927 = vrot.slane %v356, %v926
        %v928 = vlaneseq
        %v929 = vshrl.u32 %v928, 7
        %v930 = vsub.s32 0, %v929
        %v931 = vrot.slane %v357, %v930
        %v932 = vlaneseq
        %v933 = vshrl.u32 %v932, 7
        %v934 = vsub.s32 0, %v933
        %v935 = vrot.slane %v358, %v934
        %v936 = vlaneseq
        %v937 = vshrl.u32 %v936, 7
        %v938 = vsub.s32 0, %v937
        %v939 = vrot.slane %v359, %v938
        %v940 = vlaneseq
        %v941 = vshrl.u32 %v940, 7
        %v942 = vsub.s32 0, %v941
        %v943 = vrot.slane %v360, %v942
        %v944 = vlaneseq
        %v945 = vshrl.u32 %v944, 7
        %v946 = vsub.s32 0, %v945
        %v947 = vrot.slane %v361, %v946
        %v948 = vlaneseq
        %v949 = vshrl.u32 %v948, 7
        %v950 = vsub.s32 0, %v949
        %v951 = vrot.slane %v362, %v950
        %v952 = vlaneseq
        %v953 = vshrl.u32 %v952, 7
        %v954 = vsub.s32 0, %v953
        %v955 = vrot.slane %v363, %v954
        %v956 = vlaneseq
        %v957 = vshrl.u32 %v956, 7
        %v958 = vsub.s32 0, %v957
        %v959 = vrot.slane %v364, %v958
        %v960 = vlaneseq
        %v961 = vshrl.u32 %v960, 7
        %v962 = vsub.s32 0, %v961
        %v963 = vrot.slane %v365, %v962
        %v964 = vlaneseq
        %v965 = vshrl.u32 %v964, 7
        %v966 = vsub.s32 0, %v965
        %v967 = vrot.slane %v366, %v966
        %v968 = vlaneseq
        %v969 = vshrl.u32 %v968, 7
        %v970 = vsub.s32 0, %v969
        %v971 = vrot.slane %v367, %v970
        %v972 = vlaneseq
        %v973 = vshrl.u32 %v972, 7
        %v974 = vsub.s32 0, %v973
        %v975 = vrot.slane %v368, %v974
        %v976 = vlaneseq
        %v977 = vshrl.u32 %v976, 7
        %v978 = vsub.s32 0, %v977
        %v979 = vrot.slane %v369, %v978
        %v980 = vlaneseq
        %v981 = vshrl.u32 %v980, 7
        %v982 = vsub.s32 0, %v981
        %v983 = vrot.slane %v370, %v982
        %v984 = vlaneseq
        %v985 = vshrl.u32 %v984, 7
        %v986 = vsub.s32 0, %v985
        %v987 = vrot.slane %v371, %v986
        %v988 = vlaneseq
        %v989 = vshrl.u32 %v988, 7
        %v990 = vsub.s32 0, %v989
        %v991 = vrot.slane %v372, %v990
        %v992 = vlaneseq
        %v993 = vshrl.u32 %v992, 7
        %v994 = vsub.s32 0, %v993
        %v995 = vrot.slane %v373, %v994
        %v996 = vlaneseq
        %v997 = vshrl.u32 %v996, 7
        %v998 = vsub.s32 0, %v997
        %v999 = vrot.slane %v374, %v998
        %v1000 = vlaneseq
        %v1001 = vshrl.u32 %v1000, 7
        %v1002 = vsub.s32 0, %v1001
        %v1003 = vrot.slane %v375, %v1002
        %v1004 = vlaneseq
        %v1005 = vshrl.u32 %v1004, 7
        %v1006 = vsub.s32 0, %v1005
        %v1007 = vrot.slane %v376, %v1006
        %v1008 = vlaneseq
        %v1009 = vshrl.u32 %v1008, 7
        %v1010 = vsub.s32 0, %v1009
        %v1011 = vrot.slane %v377, %v1010
        %v1012 = vlaneseq
        %v1013 = vshrl.u32 %v1012, 7
        %v1014 = vsub.s32 0, %v1013
        %v1015 = vrot.slane %v378, %v1014
        %v1016 = vlaneseq
        %v1017 = vshrl.u32 %v1016, 7
        %v1018 = vsub.s32 0, %v1017
        %v1019 = vrot.slane %v379, %v1018
        %v1020 = vlaneseq
        %v1021 = vshrl.u32 %v1020, 7
        %v1022 = vsub.s32 0, %v1021
        %v1023 = vrot.slane %v380, %v1022
        %v1024 = vlaneseq
        %v1025 = vshrl.u32 %v1024, 7
        %v1026 = vsub.s32 0, %v1025
        %v1027 = vrot.slane %v381, %v1026
        %1028 = vset.pattern.permute.xlu0 0
        %1029 = vperm.xlu0 %1028, %v903
        %v1030 = vpop.permute.xlu0 %1029
        %1032 = vset.pattern.permute.xlu0 0
        %1033 = vperm.xlu0 %1032, %v907
        %v1034 = vpop.permute.xlu0 %1033
        %1036 = vset.pattern.permute.xlu0 0
        %1037 = vperm.xlu0 %1036, %v911
        %v1038 = vpop.permute.xlu0 %1037
        %1040 = vset.pattern.permute.xlu0 0
        %1041 = vperm.xlu0 %1040, %v915
        %v1042 = vpop.permute.xlu0 %1041
        %1044 = vset.pattern.permute.xlu0 0
        %1045 = vperm.xlu0 %1044, %v919
        %v1046 = vpop.permute.xlu0 %1045
        %1048 = vset.pattern.permute.xlu0 0
        %1049 = vperm.xlu0 %1048, %v923
        %v1050 = vpop.permute.xlu0 %1049
        %1052 = vset.pattern.permute.xlu0 0
        %1053 = vperm.xlu0 %1052, %v927
        %v1054 = vpop.permute.xlu0 %1053
        %1056 = vset.pattern.permute.xlu0 0
        %1057 = vperm.xlu0 %1056, %v931
        %v1058 = vpop.permute.xlu0 %1057
        %1060 = vset.pattern.permute.xlu0 0
        %1061 = vperm.xlu0 %1060, %v935
        %v1062 = vpop.permute.xlu0 %1061
        %1064 = vset.pattern.permute.xlu0 0
        %1065 = vperm.xlu0 %1064, %v939
        %v1066 = vpop.permute.xlu0 %1065
        %1068 = vset.pattern.permute.xlu0 0
        %1069 = vperm.xlu0 %1068, %v943
        %v1070 = vpop.permute.xlu0 %1069
        %1072 = vset.pattern.permute.xlu0 0
        %1073 = vperm.xlu0 %1072, %v947
        %v1074 = vpop.permute.xlu0 %1073
        %1076 = vset.pattern.permute.xlu0 0
        %1077 = vperm.xlu0 %1076, %v951
        %v1078 = vpop.permute.xlu0 %1077
        %1080 = vset.pattern.permute.xlu0 0
        %1081 = vperm.xlu0 %1080, %v955
        %v1082 = vpop.permute.xlu0 %1081
        %1084 = vset.pattern.permute.xlu0 0
        %1085 = vperm.xlu0 %1084, %v959
        %v1086 = vpop.permute.xlu0 %1085
        %1088 = vset.pattern.permute.xlu0 0
        %1089 = vperm.xlu0 %1088, %v963
        %v1090 = vpop.permute.xlu0 %1089
        %1092 = vset.pattern.permute.xlu0 0
        %1093 = vperm.xlu0 %1092, %v967
        %v1094 = vpop.permute.xlu0 %1093
        %1096 = vset.pattern.permute.xlu0 0
        %1097 = vperm.xlu0 %1096, %v971
        %v1098 = vpop.permute.xlu0 %1097
        %1100 = vset.pattern.permute.xlu0 0
        %1101 = vperm.xlu0 %1100, %v975
        %v1102 = vpop.permute.xlu0 %1101
        %1104 = vset.pattern.permute.xlu0 0
        %1105 = vperm.xlu0 %1104, %v979
        %v1106 = vpop.permute.xlu0 %1105
        %1108 = vset.pattern.permute.xlu0 0
        %1109 = vperm.xlu0 %1108, %v983
        %v1110 = vpop.permute.xlu0 %1109
        %1112 = vset.pattern.permute.xlu0 0
        %1113 = vperm.xlu0 %1112, %v987
        %v1114 = vpop.permute.xlu0 %1113
        %1116 = vset.pattern.permute.xlu0 0
        %1117 = vperm.xlu0 %1116, %v991
        %v1118 = vpop.permute.xlu0 %1117
        %1120 = vset.pattern.permute.xlu0 0
        %1121 = vperm.xlu0 %1120, %v995
        %v1122 = vpop.permute.xlu0 %1121
        %1124 = vset.pattern.permute.xlu0 0
        %1125 = vperm.xlu0 %1124, %v999
        %v1126 = vpop.permute.xlu0 %1125
        %1128 = vset.pattern.permute.xlu0 0
        %1129 = vperm.xlu0 %1128, %v1003
        %v1130 = vpop.permute.xlu0 %1129
        %1132 = vset.pattern.permute.xlu0 0
        %1133 = vperm.xlu0 %1132, %v1007
        %v1134 = vpop.permute.xlu0 %1133
        %1136 = vset.pattern.permute.xlu0 0
        %1137 = vperm.xlu0 %1136, %v1011
        %v1138 = vpop.permute.xlu0 %1137
        %1140 = vset.pattern.permute.xlu0 0
        %1141 = vperm.xlu0 %1140, %v1015
        %v1142 = vpop.permute.xlu0 %1141
        %1144 = vset.pattern.permute.xlu0 0
        %1145 = vperm.xlu0 %1144, %v1019
        %v1146 = vpop.permute.xlu0 %1145
        %1148 = vset.pattern.permute.xlu0 0
        %1149 = vperm.xlu0 %1148, %v1023
        %v1150 = vpop.permute.xlu0 %1149
        %1152 = vset.pattern.permute.xlu0 0
        %1153 = vperm.xlu0 %1152, %v1027
        %v1154 = vpop.permute.xlu0 %1153
        %v1156 = vmul.f32 %v836, %v1030
        %v1157 = vmul.f32 %v837, %v1034
        %v1158 = vmul.f32 %v838, %v1038
        %v1159 = vmul.f32 %v839, %v1042
        %v1160 = vmul.f32 %v840, %v1046
        %v1161 = vmul.f32 %v841, %v1050
        %v1162 = vmul.f32 %v842, %v1054
        %v1163 = vmul.f32 %v843, %v1058
        %v1164 = vmul.f32 %v844, %v1062
        %v1165 = vmul.f32 %v845, %v1066
        %v1166 = vmul.f32 %v846, %v1070
        %v1167 = vmul.f32 %v847, %v1074
        %v1168 = vmul.f32 %v848, %v1078
        %v1169 = vmul.f32 %v849, %v1082
        %v1170 = vmul.f32 %v850, %v1086
        %v1171 = vmul.f32 %v851, %v1090
        %v1172 = vmul.f32 %v852, %v1094
        %v1173 = vmul.f32 %v853, %v1098
        %v1174 = vmul.f32 %v854, %v1102
        %v1175 = vmul.f32 %v855, %v1106
        %v1176 = vmul.f32 %v856, %v1110
        %v1177 = vmul.f32 %v857, %v1114
        %v1178 = vmul.f32 %v858, %v1118
        %v1179 = vmul.f32 %v859, %v1122
        %v1180 = vmul.f32 %v860, %v1126
        %v1181 = vmul.f32 %v861, %v1130
        %v1182 = vmul.f32 %v862, %v1134
        %v1183 = vmul.f32 %v863, %v1138
        %v1184 = vmul.f32 %v864, %v1142
        %v1185 = vmul.f32 %v865, %v1146
        %v1186 = vmul.f32 %v866, %v1150
        %v1187 = vmul.f32 %v867, %v1154
        %v1220 = vlaneseq
        %v1221 = vshrl.u32 %v1220, 7
        %v1222 = vsub.s32 0, %v1221
        %v1223 = vrot.slane %v383, %v1222
        %v1224 = vlaneseq
        %v1225 = vshrl.u32 %v1224, 7
        %v1226 = vsub.s32 0, %v1225
        %v1227 = vrot.slane %v384, %v1226
        %v1228 = vlaneseq
        %v1229 = vshrl.u32 %v1228, 7
        %v1230 = vsub.s32 0, %v1229
        %v1231 = vrot.slane %v385, %v1230
        %v1232 = vlaneseq
        %v1233 = vshrl.u32 %v1232, 7
        %v1234 = vsub.s32 0, %v1233
        %v1235 = vrot.slane %v386, %v1234
        %v1236 = vlaneseq
        %v1237 = vshrl.u32 %v1236, 7
        %v1238 = vsub.s32 0, %v1237
        %v1239 = vrot.slane %v387, %v1238
        %v1240 = vlaneseq
        %v1241 = vshrl.u32 %v1240, 7
        %v1242 = vsub.s32 0, %v1241
        %v1243 = vrot.slane %v388, %v1242
        %v1244 = vlaneseq
        %v1245 = vshrl.u32 %v1244, 7
        %v1246 = vsub.s32 0, %v1245
        %v1247 = vrot.slane %v389, %v1246
        %v1248 = vlaneseq
        %v1249 = vshrl.u32 %v1248, 7
        %v1250 = vsub.s32 0, %v1249
        %v1251 = vrot.slane %v390, %v1250
        %v1252 = vlaneseq
        %v1253 = vshrl.u32 %v1252, 7
        %v1254 = vsub.s32 0, %v1253
        %v1255 = vrot.slane %v391, %v1254
        %v1256 = vlaneseq
        %v1257 = vshrl.u32 %v1256, 7
        %v1258 = vsub.s32 0, %v1257
        %v1259 = vrot.slane %v392, %v1258
        %v1260 = vlaneseq
        %v1261 = vshrl.u32 %v1260, 7
        %v1262 = vsub.s32 0, %v1261
        %v1263 = vrot.slane %v393, %v1262
        %v1264 = vlaneseq
        %v1265 = vshrl.u32 %v1264, 7
        %v1266 = vsub.s32 0, %v1265
        %v1267 = vrot.slane %v394, %v1266
        %v1268 = vlaneseq
        %v1269 = vshrl.u32 %v1268, 7
        %v1270 = vsub.s32 0, %v1269
        %v1271 = vrot.slane %v395, %v1270
        %v1272 = vlaneseq
        %v1273 = vshrl.u32 %v1272, 7
        %v1274 = vsub.s32 0, %v1273
        %v1275 = vrot.slane %v396, %v1274
        %v1276 = vlaneseq
        %v1277 = vshrl.u32 %v1276, 7
        %v1278 = vsub.s32 0, %v1277
        %v1279 = vrot.slane %v397, %v1278
        %v1280 = vlaneseq
        %v1281 = vshrl.u32 %v1280, 7
        %v1282 = vsub.s32 0, %v1281
        %v1283 = vrot.slane %v398, %v1282
        %v1284 = vlaneseq
        %v1285 = vshrl.u32 %v1284, 7
        %v1286 = vsub.s32 0, %v1285
        %v1287 = vrot.slane %v399, %v1286
        %v1288 = vlaneseq
        %v1289 = vshrl.u32 %v1288, 7
        %v1290 = vsub.s32 0, %v1289
        %v1291 = vrot.slane %v400, %v1290
        %v1292 = vlaneseq
        %v1293 = vshrl.u32 %v1292, 7
        %v1294 = vsub.s32 0, %v1293
        %v1295 = vrot.slane %v401, %v1294
        %v1296 = vlaneseq
        %v1297 = vshrl.u32 %v1296, 7
        %v1298 = vsub.s32 0, %v1297
        %v1299 = vrot.slane %v402, %v1298
        %v1300 = vlaneseq
        %v1301 = vshrl.u32 %v1300, 7
        %v1302 = vsub.s32 0, %v1301
        %v1303 = vrot.slane %v403, %v1302
        %v1304 = vlaneseq
        %v1305 = vshrl.u32 %v1304, 7
        %v1306 = vsub.s32 0, %v1305
        %v1307 = vrot.slane %v404, %v1306
        %v1308 = vlaneseq
        %v1309 = vshrl.u32 %v1308, 7
        %v1310 = vsub.s32 0, %v1309
        %v1311 = vrot.slane %v405, %v1310
        %v1312 = vlaneseq
        %v1313 = vshrl.u32 %v1312, 7
        %v1314 = vsub.s32 0, %v1313
        %v1315 = vrot.slane %v406, %v1314
        %v1316 = vlaneseq
        %v1317 = vshrl.u32 %v1316, 7
        %v1318 = vsub.s32 0, %v1317
        %v1319 = vrot.slane %v407, %v1318
        %v1320 = vlaneseq
        %v1321 = vshrl.u32 %v1320, 7
        %v1322 = vsub.s32 0, %v1321
        %v1323 = vrot.slane %v408, %v1322
        %v1324 = vlaneseq
        %v1325 = vshrl.u32 %v1324, 7
        %v1326 = vsub.s32 0, %v1325
        %v1327 = vrot.slane %v409, %v1326
        %v1328 = vlaneseq
        %v1329 = vshrl.u32 %v1328, 7
        %v1330 = vsub.s32 0, %v1329
        %v1331 = vrot.slane %v410, %v1330
        %v1332 = vlaneseq
        %v1333 = vshrl.u32 %v1332, 7
        %v1334 = vsub.s32 0, %v1333
        %v1335 = vrot.slane %v411, %v1334
        %v1336 = vlaneseq
        %v1337 = vshrl.u32 %v1336, 7
        %v1338 = vsub.s32 0, %v1337
        %v1339 = vrot.slane %v412, %v1338
        %v1340 = vlaneseq
        %v1341 = vshrl.u32 %v1340, 7
        %v1342 = vsub.s32 0, %v1341
        %v1343 = vrot.slane %v413, %v1342
        %v1344 = vlaneseq
        %v1345 = vshrl.u32 %v1344, 7
        %v1346 = vsub.s32 0, %v1345
        %v1347 = vrot.slane %v414, %v1346
        %1348 = vset.pattern.permute.xlu0 0
        %1349 = vperm.xlu0 %1348, %v1223
        %v1350 = vpop.permute.xlu0 %1349
        %1352 = vset.pattern.permute.xlu0 0
        %1353 = vperm.xlu0 %1352, %v1227
        %v1354 = vpop.permute.xlu0 %1353
        %1356 = vset.pattern.permute.xlu0 0
        %1357 = vperm.xlu0 %1356, %v1231
        %v1358 = vpop.permute.xlu0 %1357
        %1360 = vset.pattern.permute.xlu0 0
        %1361 = vperm.xlu0 %1360, %v1235
        %v1362 = vpop.permute.xlu0 %1361
        %1364 = vset.pattern.permute.xlu0 0
        %1365 = vperm.xlu0 %1364, %v1239
        %v1366 = vpop.permute.xlu0 %1365
        %1368 = vset.pattern.permute.xlu0 0
        %1369 = vperm.xlu0 %1368, %v1243
        %v1370 = vpop.permute.xlu0 %1369
        %1372 = vset.pattern.permute.xlu0 0
        %1373 = vperm.xlu0 %1372, %v1247
        %v1374 = vpop.permute.xlu0 %1373
        %1376 = vset.pattern.permute.xlu0 0
        %1377 = vperm.xlu0 %1376, %v1251
        %v1378 = vpop.permute.xlu0 %1377
        %1380 = vset.pattern.permute.xlu0 0
        %1381 = vperm.xlu0 %1380, %v1255
        %v1382 = vpop.permute.xlu0 %1381
        %1384 = vset.pattern.permute.xlu0 0
        %1385 = vperm.xlu0 %1384, %v1259
        %v1386 = vpop.permute.xlu0 %1385
        %1388 = vset.pattern.permute.xlu0 0
        %1389 = vperm.xlu0 %1388, %v1263
        %v1390 = vpop.permute.xlu0 %1389
        %1392 = vset.pattern.permute.xlu0 0
        %1393 = vperm.xlu0 %1392, %v1267
        %v1394 = vpop.permute.xlu0 %1393
        %1396 = vset.pattern.permute.xlu0 0
        %1397 = vperm.xlu0 %1396, %v1271
        %v1398 = vpop.permute.xlu0 %1397
        %1400 = vset.pattern.permute.xlu0 0
        %1401 = vperm.xlu0 %1400, %v1275
        %v1402 = vpop.permute.xlu0 %1401
        %1404 = vset.pattern.permute.xlu0 0
        %1405 = vperm.xlu0 %1404, %v1279
        %v1406 = vpop.permute.xlu0 %1405
        %1408 = vset.pattern.permute.xlu0 0
        %1409 = vperm.xlu0 %1408, %v1283
        %v1410 = vpop.permute.xlu0 %1409
        %1412 = vset.pattern.permute.xlu0 0
        %1413 = vperm.xlu0 %1412, %v1287
        %v1414 = vpop.permute.xlu0 %1413
        %1416 = vset.pattern.permute.xlu0 0
        %1417 = vperm.xlu0 %1416, %v1291
        %v1418 = vpop.permute.xlu0 %1417
        %1420 = vset.pattern.permute.xlu0 0
        %1421 = vperm.xlu0 %1420, %v1295
        %v1422 = vpop.permute.xlu0 %1421
        %1424 = vset.pattern.permute.xlu0 0
        %1425 = vperm.xlu0 %1424, %v1299
        %v1426 = vpop.permute.xlu0 %1425
        %1428 = vset.pattern.permute.xlu0 0
        %1429 = vperm.xlu0 %1428, %v1303
        %v1430 = vpop.permute.xlu0 %1429
        %1432 = vset.pattern.permute.xlu0 0
        %1433 = vperm.xlu0 %1432, %v1307
        %v1434 = vpop.permute.xlu0 %1433
        %1436 = vset.pattern.permute.xlu0 0
        %1437 = vperm.xlu0 %1436, %v1311
        %v1438 = vpop.permute.xlu0 %1437
        %1440 = vset.pattern.permute.xlu0 0
        %1441 = vperm.xlu0 %1440, %v1315
        %v1442 = vpop.permute.xlu0 %1441
        %1444 = vset.pattern.permute.xlu0 0
        %1445 = vperm.xlu0 %1444, %v1319
        %v1446 = vpop.permute.xlu0 %1445
        %1448 = vset.pattern.permute.xlu0 0
        %1449 = vperm.xlu0 %1448, %v1323
        %v1450 = vpop.permute.xlu0 %1449
        %1452 = vset.pattern.permute.xlu0 0
        %1453 = vperm.xlu0 %1452, %v1327
        %v1454 = vpop.permute.xlu0 %1453
        %1456 = vset.pattern.permute.xlu0 0
        %1457 = vperm.xlu0 %1456, %v1331
        %v1458 = vpop.permute.xlu0 %1457
        %1460 = vset.pattern.permute.xlu0 0
        %1461 = vperm.xlu0 %1460, %v1335
        %v1462 = vpop.permute.xlu0 %1461
        %1464 = vset.pattern.permute.xlu0 0
        %1465 = vperm.xlu0 %1464, %v1339
        %v1466 = vpop.permute.xlu0 %1465
        %1468 = vset.pattern.permute.xlu0 0
        %1469 = vperm.xlu0 %1468, %v1343
        %v1470 = vpop.permute.xlu0 %1469
        %1472 = vset.pattern.permute.xlu0 0
        %1473 = vperm.xlu0 %1472, %v1347
        %v1474 = vpop.permute.xlu0 %1473
        %v1476 = vadd.f32 %v1156, %v1350
        %v1477 = vadd.f32 %v1157, %v1354
        %v1478 = vadd.f32 %v1158, %v1358
        %v1479 = vadd.f32 %v1159, %v1362
        %v1480 = vadd.f32 %v1160, %v1366
        %v1481 = vadd.f32 %v1161, %v1370
        %v1482 = vadd.f32 %v1162, %v1374
        %v1483 = vadd.f32 %v1163, %v1378
        %v1484 = vadd.f32 %v1164, %v1382
        %v1485 = vadd.f32 %v1165, %v1386
        %v1486 = vadd.f32 %v1166, %v1390
        %v1487 = vadd.f32 %v1167, %v1394
        %v1488 = vadd.f32 %v1168, %v1398
        %v1489 = vadd.f32 %v1169, %v1402
        %v1490 = vadd.f32 %v1170, %v1406
        %v1491 = vadd.f32 %v1171, %v1410
        %v1492 = vadd.f32 %v1172, %v1414
        %v1493 = vadd.f32 %v1173, %v1418
        %v1494 = vadd.f32 %v1174, %v1422
        %v1495 = vadd.f32 %v1175, %v1426
        %v1496 = vadd.f32 %v1176, %v1430
        %v1497 = vadd.f32 %v1177, %v1434
        %v1498 = vadd.f32 %v1178, %v1438
        %v1499 = vadd.f32 %v1179, %v1442
        %v1500 = vadd.f32 %v1180, %v1446
        %v1501 = vadd.f32 %v1181, %v1450
        %v1502 = vadd.f32 %v1182, %v1454
        %v1503 = vadd.f32 %v1183, %v1458
        %v1504 = vadd.f32 %v1184, %v1462
        %v1505 = vadd.f32 %v1185, %v1466
        %v1506 = vadd.f32 %v1186, %v1470
        %v1507 = vadd.f32 %v1187, %v1474
        %v1508 = vpack.c.bf16 %v1476, %v1476
        %v1509 = vpack.c.bf16 %v1477, %v1477
        %v1510 = vpack.c.bf16 %v1478, %v1478
        %v1511 = vpack.c.bf16 %v1479, %v1479
        %v1512 = vpack.c.bf16 %v1480, %v1480
        %v1513 = vpack.c.bf16 %v1481, %v1481
        %v1514 = vpack.c.bf16 %v1482, %v1482
        %v1515 = vpack.c.bf16 %v1483, %v1483
        %v1516 = vpack.c.bf16 %v1484, %v1484
        %v1517 = vpack.c.bf16 %v1485, %v1485
        %v1518 = vpack.c.bf16 %v1486, %v1486
        %v1519 = vpack.c.bf16 %v1487, %v1487
        %v1520 = vpack.c.bf16 %v1488, %v1488
        %v1521 = vpack.c.bf16 %v1489, %v1489
        %v1522 = vpack.c.bf16 %v1490, %v1490
        %v1523 = vpack.c.bf16 %v1491, %v1491
        %v1524 = vpack.c.bf16 %v1492, %v1492
        %v1525 = vpack.c.bf16 %v1493, %v1493
        %v1526 = vpack.c.bf16 %v1494, %v1494
        %v1527 = vpack.c.bf16 %v1495, %v1495
        %v1528 = vpack.c.bf16 %v1496, %v1496
        %v1529 = vpack.c.bf16 %v1497, %v1497
        %v1530 = vpack.c.bf16 %v1498, %v1498
        %v1531 = vpack.c.bf16 %v1499, %v1499
        %v1532 = vpack.c.bf16 %v1500, %v1500
        %v1533 = vpack.c.bf16 %v1501, %v1501
        %v1534 = vpack.c.bf16 %v1502, %v1502
        %v1535 = vpack.c.bf16 %v1503, %v1503
        %v1536 = vpack.c.bf16 %v1504, %v1504
        %v1537 = vpack.c.bf16 %v1505, %v1505
        %v1538 = vpack.c.bf16 %v1506, %v1506
        %v1539 = vpack.c.bf16 %v1507, %v1507
        %v1540 = vld [vmem:[#allocation8] sm:$0xf]
        %v1541 = vld [vmem:[#allocation8 + $0x4] sm:$0xf]
        %v1542 = vld [vmem:[#allocation8 + $0x8] sm:$0xf]
        %v1543 = vld [vmem:[#allocation8 + $0xc] sm:$0xf]
        %v1544 = vld [vmem:[#allocation8 + $0x10] sm:$0xf]
        %v1545 = vld [vmem:[#allocation8 + $0x14] sm:$0xf]
        %v1546 = vld [vmem:[#allocation8 + $0x18] sm:$0xf]
        %v1547 = vld [vmem:[#allocation8 + $0x1c] sm:$0xf]
        %v1548 = vld [vmem:[#allocation8 + $0x20] sm:$0xf]
        %v1549 = vld [vmem:[#allocation8 + $0x24] sm:$0xf]
        %v1550 = vld [vmem:[#allocation8 + $0x28] sm:$0xf]
        %v1551 = vld [vmem:[#allocation8 + $0x2c] sm:$0xf]
        %v1552 = vld [vmem:[#allocation8 + $0x30] sm:$0xf]
        %v1553 = vld [vmem:[#allocation8 + $0x34] sm:$0xf]
        %v1554 = vld [vmem:[#allocation8 + $0x38] sm:$0xf]
        %v1555 = vld [vmem:[#allocation8 + $0x3c] sm:$0xf]
        %v1556 = vld [vmem:[#allocation8 + $0x40] sm:$0xf]
        %v1557 = vld [vmem:[#allocation8 + $0x44] sm:$0xf]
        %v1558 = vld [vmem:[#allocation8 + $0x48] sm:$0xf]
        %v1559 = vld [vmem:[#allocation8 + $0x4c] sm:$0xf]
        %v1560 = vld [vmem:[#allocation8 + $0x50] sm:$0xf]
        %v1561 = vld [vmem:[#allocation8 + $0x54] sm:$0xf]
        %v1562 = vld [vmem:[#allocation8 + $0x58] sm:$0xf]
        %v1563 = vld [vmem:[#allocation8 + $0x5c] sm:$0xf]
        %v1564 = vld [vmem:[#allocation8 + $0x60] sm:$0xf]
        %v1565 = vld [vmem:[#allocation8 + $0x64] sm:$0xf]
        %v1566 = vld [vmem:[#allocation8 + $0x68] sm:$0xf]
        %v1567 = vld [vmem:[#allocation8 + $0x6c] sm:$0xf]
        %v1568 = vld [vmem:[#allocation8 + $0x70] sm:$0xf]
        %v1569 = vld [vmem:[#allocation8 + $0x74] sm:$0xf]
        %v1570 = vld [vmem:[#allocation8 + $0x78] sm:$0xf]
        %v1571 = vld [vmem:[#allocation8 + $0x7c] sm:$0xf]
        %v1572 = vld [vmem:[#allocation8 + $0x80] sm:$0xf]
        %v1573 = vld [vmem:[#allocation8 + $0x84] sm:$0xf]
        %v1574 = vld [vmem:[#allocation8 + $0x88] sm:$0xf]
        %v1575 = vld [vmem:[#allocation8 + $0x8c] sm:$0xf]
        %v1576 = vld [vmem:[#allocation8 + $0x90] sm:$0xf]
        %v1577 = vld [vmem:[#allocation8 + $0x94] sm:$0xf]
        %v1578 = vld [vmem:[#allocation8 + $0x98] sm:$0xf]
        %v1579 = vld [vmem:[#allocation8 + $0x9c] sm:$0xf]
        %v1580 = vld [vmem:[#allocation8 + $0xa0] sm:$0xf]
        %v1581 = vld [vmem:[#allocation8 + $0xa4] sm:$0xf]
        %v1582 = vld [vmem:[#allocation8 + $0xa8] sm:$0xf]
        %v1583 = vld [vmem:[#allocation8 + $0xac] sm:$0xf]
        %v1584 = vld [vmem:[#allocation8 + $0xb0] sm:$0xf]
        %v1585 = vld [vmem:[#allocation8 + $0xb4] sm:$0xf]
        %v1586 = vld [vmem:[#allocation8 + $0xb8] sm:$0xf]
        %v1587 = vld [vmem:[#allocation8 + $0xbc] sm:$0xf]
        %v1588 = vld [vmem:[#allocation8 + $0xc0] sm:$0xf]
        %v1589 = vld [vmem:[#allocation8 + $0xc4] sm:$0xf]
        %v1590 = vld [vmem:[#allocation8 + $0xc8] sm:$0xf]
        %v1591 = vld [vmem:[#allocation8 + $0xcc] sm:$0xf]
        %v1592 = vld [vmem:[#allocation8 + $0xd0] sm:$0xf]
        %v1593 = vld [vmem:[#allocation8 + $0xd4] sm:$0xf]
        %v1594 = vld [vmem:[#allocation8 + $0xd8] sm:$0xf]
        %v1595 = vld [vmem:[#allocation8 + $0xdc] sm:$0xf]
        %v1596 = vld [vmem:[#allocation8 + $0xe0] sm:$0xf]
        %v1597 = vld [vmem:[#allocation8 + $0xe4] sm:$0xf]
        %v1598 = vld [vmem:[#allocation8 + $0xe8] sm:$0xf]
        %v1599 = vld [vmem:[#allocation8 + $0xec] sm:$0xf]
        %v1600 = vld [vmem:[#allocation8 + $0xf0] sm:$0xf]
        %v1601 = vld [vmem:[#allocation8 + $0xf4] sm:$0xf]
        %v1602 = vld [vmem:[#allocation8 + $0xf8] sm:$0xf]
        %v1603 = vld [vmem:[#allocation8 + $0xfc] sm:$0xf]
        %v1604 = vld [vmem:[#allocation8 + $0x100] sm:$0xf]
        %v1605 = vld [vmem:[#allocation8 + $0x104] sm:$0xf]
        %v1606 = vld [vmem:[#allocation8 + $0x108] sm:$0xf]
        %v1607 = vld [vmem:[#allocation8 + $0x10c] sm:$0xf]
        %v1608 = vld [vmem:[#allocation8 + $0x110] sm:$0xf]
        %v1609 = vld [vmem:[#allocation8 + $0x114] sm:$0xf]
        %v1610 = vld [vmem:[#allocation8 + $0x118] sm:$0xf]
        %v1611 = vld [vmem:[#allocation8 + $0x11c] sm:$0xf]
        %v1612 = vld [vmem:[#allocation8 + $0x120] sm:$0xf]
        %v1613 = vld [vmem:[#allocation8 + $0x124] sm:$0xf]
        %v1614 = vld [vmem:[#allocation8 + $0x128] sm:$0xf]
        %v1615 = vld [vmem:[#allocation8 + $0x12c] sm:$0xf]
        %v1616 = vld [vmem:[#allocation8 + $0x130] sm:$0xf]
        %v1617 = vld [vmem:[#allocation8 + $0x134] sm:$0xf]
        %v1618 = vld [vmem:[#allocation8 + $0x138] sm:$0xf]
        %v1619 = vld [vmem:[#allocation8 + $0x13c] sm:$0xf]
        %v1620 = vld [vmem:[#allocation8 + $0x140] sm:$0xf]
        %v1621 = vld [vmem:[#allocation8 + $0x144] sm:$0xf]
        %v1622 = vld [vmem:[#allocation8 + $0x148] sm:$0xf]
        %v1623 = vld [vmem:[#allocation8 + $0x14c] sm:$0xf]
        %v1624 = vld [vmem:[#allocation8 + $0x150] sm:$0xf]
        %v1625 = vld [vmem:[#allocation8 + $0x154] sm:$0xf]
        %v1626 = vld [vmem:[#allocation8 + $0x158] sm:$0xf]
        %v1627 = vld [vmem:[#allocation8 + $0x15c] sm:$0xf]
        %v1628 = vld [vmem:[#allocation8 + $0x160] sm:$0xf]
        %v1629 = vld [vmem:[#allocation8 + $0x164] sm:$0xf]
        %v1630 = vld [vmem:[#allocation8 + $0x168] sm:$0xf]
        %v1631 = vld [vmem:[#allocation8 + $0x16c] sm:$0xf]
        %v1632 = vld [vmem:[#allocation8 + $0x170] sm:$0xf]
        %v1633 = vld [vmem:[#allocation8 + $0x174] sm:$0xf]
        %v1634 = vld [vmem:[#allocation8 + $0x178] sm:$0xf]
        %v1635 = vld [vmem:[#allocation8 + $0x17c] sm:$0xf]
        %v1636 = vld [vmem:[#allocation8 + $0x180] sm:$0xf]
        %v1637 = vld [vmem:[#allocation8 + $0x184] sm:$0xf]
        %v1638 = vld [vmem:[#allocation8 + $0x188] sm:$0xf]
        %v1639 = vld [vmem:[#allocation8 + $0x18c] sm:$0xf]
        %v1640 = vld [vmem:[#allocation8 + $0x190] sm:$0xf]
        %v1641 = vld [vmem:[#allocation8 + $0x194] sm:$0xf]
        %v1642 = vld [vmem:[#allocation8 + $0x198] sm:$0xf]
        %v1643 = vld [vmem:[#allocation8 + $0x19c] sm:$0xf]
        %v1644 = vld [vmem:[#allocation8 + $0x1a0] sm:$0xf]
        %v1645 = vld [vmem:[#allocation8 + $0x1a4] sm:$0xf]
        %v1646 = vld [vmem:[#allocation8 + $0x1a8] sm:$0xf]
        %v1647 = vld [vmem:[#allocation8 + $0x1ac] sm:$0xf]
        %v1648 = vld [vmem:[#allocation8 + $0x1b0] sm:$0xf]
        %v1649 = vld [vmem:[#allocation8 + $0x1b4] sm:$0xf]
        %v1650 = vld [vmem:[#allocation8 + $0x1b8] sm:$0xf]
        %v1651 = vld [vmem:[#allocation8 + $0x1bc] sm:$0xf]
        %v1652 = vld [vmem:[#allocation8 + $0x1c0] sm:$0xf]
        %v1653 = vld [vmem:[#allocation8 + $0x1c4] sm:$0xf]
        %v1654 = vld [vmem:[#allocation8 + $0x1c8] sm:$0xf]
        %v1655 = vld [vmem:[#allocation8 + $0x1cc] sm:$0xf]
        %v1656 = vld [vmem:[#allocation8 + $0x1d0] sm:$0xf]
        %v1657 = vld [vmem:[#allocation8 + $0x1d4] sm:$0xf]
        %v1658 = vld [vmem:[#allocation8 + $0x1d8] sm:$0xf]
        %v1659 = vld [vmem:[#allocation8 + $0x1dc] sm:$0xf]
        %v1660 = vld [vmem:[#allocation8 + $0x1e0] sm:$0xf]
        %v1661 = vld [vmem:[#allocation8 + $0x1e4] sm:$0xf]
        %v1662 = vld [vmem:[#allocation8 + $0x1e8] sm:$0xf]
        %v1663 = vld [vmem:[#allocation8 + $0x1ec] sm:$0xf]
        %v1664 = vld [vmem:[#allocation8 + $0x1f0] sm:$0xf]
        %v1665 = vld [vmem:[#allocation8 + $0x1f4] sm:$0xf]
        %v1666 = vld [vmem:[#allocation8 + $0x1f8] sm:$0xf]
        %v1667 = vld [vmem:[#allocation8 + $0x1fc] sm:$0xf]
        %v1668 = vld [vmem:[#allocation8 + $0x200] sm:$0xf]
        %v1669 = vld [vmem:[#allocation8 + $0x204] sm:$0xf]
        %v1670 = vld [vmem:[#allocation8 + $0x208] sm:$0xf]
        %v1671 = vld [vmem:[#allocation8 + $0x20c] sm:$0xf]
        %v1672 = vld [vmem:[#allocation8 + $0x210] sm:$0xf]
        %v1673 = vld [vmem:[#allocation8 + $0x214] sm:$0xf]
        %v1674 = vld [vmem:[#allocation8 + $0x218] sm:$0xf]
        %v1675 = vld [vmem:[#allocation8 + $0x21c] sm:$0xf]
        %v1676 = vld [vmem:[#allocation8 + $0x220] sm:$0xf]
        %v1677 = vld [vmem:[#allocation8 + $0x224] sm:$0xf]
        %v1678 = vld [vmem:[#allocation8 + $0x228] sm:$0xf]
        %v1679 = vld [vmem:[#allocation8 + $0x22c] sm:$0xf]
        %v1680 = vld [vmem:[#allocation8 + $0x230] sm:$0xf]
        %v1681 = vld [vmem:[#allocation8 + $0x234] sm:$0xf]
        %v1682 = vld [vmem:[#allocation8 + $0x238] sm:$0xf]
        %v1683 = vld [vmem:[#allocation8 + $0x23c] sm:$0xf]
        %v1684 = vld [vmem:[#allocation8 + $0x240] sm:$0xf]
        %v1685 = vld [vmem:[#allocation8 + $0x244] sm:$0xf]
        %v1686 = vld [vmem:[#allocation8 + $0x248] sm:$0xf]
        %v1687 = vld [vmem:[#allocation8 + $0x24c] sm:$0xf]
        %v1688 = vld [vmem:[#allocation8 + $0x250] sm:$0xf]
        %v1689 = vld [vmem:[#allocation8 + $0x254] sm:$0xf]
        %v1690 = vld [vmem:[#allocation8 + $0x258] sm:$0xf]
        %v1691 = vld [vmem:[#allocation8 + $0x25c] sm:$0xf]
        %v1692 = vld [vmem:[#allocation8 + $0x260] sm:$0xf]
        %v1693 = vld [vmem:[#allocation8 + $0x264] sm:$0xf]
        %v1694 = vld [vmem:[#allocation8 + $0x268] sm:$0xf]
        %v1695 = vld [vmem:[#allocation8 + $0x26c] sm:$0xf]
        %v1696 = vld [vmem:[#allocation8 + $0x270] sm:$0xf]
        %v1697 = vld [vmem:[#allocation8 + $0x274] sm:$0xf]
        %v1698 = vld [vmem:[#allocation8 + $0x278] sm:$0xf]
        %v1699 = vld [vmem:[#allocation8 + $0x27c] sm:$0xf]
        %v1700 = vld [vmem:[#allocation8 + $0x280] sm:$0xf]
        %v1701 = vld [vmem:[#allocation8 + $0x284] sm:$0xf]
        %v1702 = vld [vmem:[#allocation8 + $0x288] sm:$0xf]
        %v1703 = vld [vmem:[#allocation8 + $0x28c] sm:$0xf]
        %v1704 = vld [vmem:[#allocation8 + $0x290] sm:$0xf]
        %v1705 = vld [vmem:[#allocation8 + $0x294] sm:$0xf]
        %v1706 = vld [vmem:[#allocation8 + $0x298] sm:$0xf]
        %v1707 = vld [vmem:[#allocation8 + $0x29c] sm:$0xf]
        %v1708 = vld [vmem:[#allocation8 + $0x2a0] sm:$0xf]
        %v1709 = vld [vmem:[#allocation8 + $0x2a4] sm:$0xf]
        %v1710 = vld [vmem:[#allocation8 + $0x2a8] sm:$0xf]
        %v1711 = vld [vmem:[#allocation8 + $0x2ac] sm:$0xf]
        %v1712 = vld [vmem:[#allocation8 + $0x2b0] sm:$0xf]
        %v1713 = vld [vmem:[#allocation8 + $0x2b4] sm:$0xf]
        %v1714 = vld [vmem:[#allocation8 + $0x2b8] sm:$0xf]
        %v1715 = vld [vmem:[#allocation8 + $0x2bc] sm:$0xf]
        %v1716 = vld [vmem:[#allocation8 + $0x2c0] sm:$0xf]
        %v1717 = vld [vmem:[#allocation8 + $0x2c4] sm:$0xf]
        %v1718 = vld [vmem:[#allocation8 + $0x2c8] sm:$0xf]
        %v1719 = vld [vmem:[#allocation8 + $0x2cc] sm:$0xf]
        %v1720 = vld [vmem:[#allocation8 + $0x2d0] sm:$0xf]
        %v1721 = vld [vmem:[#allocation8 + $0x2d4] sm:$0xf]
        %v1722 = vld [vmem:[#allocation8 + $0x2d8] sm:$0xf]
        %v1723 = vld [vmem:[#allocation8 + $0x2dc] sm:$0xf]
        %v1724 = vld [vmem:[#allocation8 + $0x2e0] sm:$0xf]
        %v1725 = vld [vmem:[#allocation8 + $0x2e4] sm:$0xf]
        %v1726 = vld [vmem:[#allocation8 + $0x2e8] sm:$0xf]
        %v1727 = vld [vmem:[#allocation8 + $0x2ec] sm:$0xf]
        %v1728 = vld [vmem:[#allocation8 + $0x2f0] sm:$0xf]
        %v1729 = vld [vmem:[#allocation8 + $0x2f4] sm:$0xf]
        %v1730 = vld [vmem:[#allocation8 + $0x2f8] sm:$0xf]
        %v1731 = vld [vmem:[#allocation8 + $0x2fc] sm:$0xf]
        %v1732 = vld [vmem:[#allocation8 + $0x300] sm:$0xf]
        %v1733 = vld [vmem:[#allocation8 + $0x304] sm:$0xf]
        %v1734 = vld [vmem:[#allocation8 + $0x308] sm:$0xf]
        %v1735 = vld [vmem:[#allocation8 + $0x30c] sm:$0xf]
        %v1736 = vld [vmem:[#allocation8 + $0x310] sm:$0xf]
        %v1737 = vld [vmem:[#allocation8 + $0x314] sm:$0xf]
        %v1738 = vld [vmem:[#allocation8 + $0x318] sm:$0xf]
        %v1739 = vld [vmem:[#allocation8 + $0x31c] sm:$0xf]
        %v1740 = vld [vmem:[#allocation8 + $0x320] sm:$0xf]
        %v1741 = vld [vmem:[#allocation8 + $0x324] sm:$0xf]
        %v1742 = vld [vmem:[#allocation8 + $0x328] sm:$0xf]
        %v1743 = vld [vmem:[#allocation8 + $0x32c] sm:$0xf]
        %v1744 = vld [vmem:[#allocation8 + $0x330] sm:$0xf]
        %v1745 = vld [vmem:[#allocation8 + $0x334] sm:$0xf]
        %v1746 = vld [vmem:[#allocation8 + $0x338] sm:$0xf]
        %v1747 = vld [vmem:[#allocation8 + $0x33c] sm:$0xf]
        %v1748 = vld [vmem:[#allocation8 + $0x340] sm:$0xf]
        %v1749 = vld [vmem:[#allocation8 + $0x344] sm:$0xf]
        %v1750 = vld [vmem:[#allocation8 + $0x348] sm:$0xf]
        %v1751 = vld [vmem:[#allocation8 + $0x34c] sm:$0xf]
        %v1752 = vld [vmem:[#allocation8 + $0x350] sm:$0xf]
        %v1753 = vld [vmem:[#allocation8 + $0x354] sm:$0xf]
        %v1754 = vld [vmem:[#allocation8 + $0x358] sm:$0xf]
        %v1755 = vld [vmem:[#allocation8 + $0x35c] sm:$0xf]
        %v1756 = vld [vmem:[#allocation8 + $0x360] sm:$0xf]
        %v1757 = vld [vmem:[#allocation8 + $0x364] sm:$0xf]
        %v1758 = vld [vmem:[#allocation8 + $0x368] sm:$0xf]
        %v1759 = vld [vmem:[#allocation8 + $0x36c] sm:$0xf]
        %v1760 = vld [vmem:[#allocation8 + $0x370] sm:$0xf]
        %v1761 = vld [vmem:[#allocation8 + $0x374] sm:$0xf]
        %v1762 = vld [vmem:[#allocation8 + $0x378] sm:$0xf]
        %v1763 = vld [vmem:[#allocation8 + $0x37c] sm:$0xf]
        %v1764 = vld [vmem:[#allocation8 + $0x380] sm:$0xf]
        %v1765 = vld [vmem:[#allocation8 + $0x384] sm:$0xf]
        %v1766 = vld [vmem:[#allocation8 + $0x388] sm:$0xf]
        %v1767 = vld [vmem:[#allocation8 + $0x38c] sm:$0xf]
        %v1768 = vld [vmem:[#allocation8 + $0x390] sm:$0xf]
        %v1769 = vld [vmem:[#allocation8 + $0x394] sm:$0xf]
        %v1770 = vld [vmem:[#allocation8 + $0x398] sm:$0xf]
        %v1771 = vld [vmem:[#allocation8 + $0x39c] sm:$0xf]
        %v1772 = vld [vmem:[#allocation8 + $0x3a0] sm:$0xf]
        %v1773 = vld [vmem:[#allocation8 + $0x3a4] sm:$0xf]
        %v1774 = vld [vmem:[#allocation8 + $0x3a8] sm:$0xf]
        %v1775 = vld [vmem:[#allocation8 + $0x3ac] sm:$0xf]
        %v1776 = vld [vmem:[#allocation8 + $0x3b0] sm:$0xf]
        %v1777 = vld [vmem:[#allocation8 + $0x3b4] sm:$0xf]
        %v1778 = vld [vmem:[#allocation8 + $0x3b8] sm:$0xf]
        %v1779 = vld [vmem:[#allocation8 + $0x3bc] sm:$0xf]
        %v1780 = vld [vmem:[#allocation8 + $0x3c0] sm:$0xf]
        %v1781 = vld [vmem:[#allocation8 + $0x3c4] sm:$0xf]
        %v1782 = vld [vmem:[#allocation8 + $0x3c8] sm:$0xf]
        %v1783 = vld [vmem:[#allocation8 + $0x3cc] sm:$0xf]
        %v1784 = vld [vmem:[#allocation8 + $0x3d0] sm:$0xf]
        %v1785 = vld [vmem:[#allocation8 + $0x3d4] sm:$0xf]
        %v1786 = vld [vmem:[#allocation8 + $0x3d8] sm:$0xf]
        %v1787 = vld [vmem:[#allocation8 + $0x3dc] sm:$0xf]
        %v1788 = vld [vmem:[#allocation8 + $0x3e0] sm:$0xf]
        %v1789 = vld [vmem:[#allocation8 + $0x3e4] sm:$0xf]
        %v1790 = vld [vmem:[#allocation8 + $0x3e8] sm:$0xf]
        %v1791 = vld [vmem:[#allocation8 + $0x3ec] sm:$0xf]
        %v1792 = vld [vmem:[#allocation8 + $0x3f0] sm:$0xf]
        %v1793 = vld [vmem:[#allocation8 + $0x3f4] sm:$0xf]
        %v1794 = vld [vmem:[#allocation8 + $0x3f8] sm:$0xf]
        %v1795 = vld [vmem:[#allocation8 + $0x3fc] sm:$0xf]
        %v1796 = vld [vmem:[#allocation8 + $0x400] sm:$0xf]
        %v1797 = vld [vmem:[#allocation8 + $0x404] sm:$0xf]
        %v1798 = vld [vmem:[#allocation8 + $0x408] sm:$0xf]
        %v1799 = vld [vmem:[#allocation8 + $0x40c] sm:$0xf]
        %v1800 = vld [vmem:[#allocation8 + $0x410] sm:$0xf]
        %v1801 = vld [vmem:[#allocation8 + $0x414] sm:$0xf]
        %v1802 = vld [vmem:[#allocation8 + $0x418] sm:$0xf]
        %v1803 = vld [vmem:[#allocation8 + $0x41c] sm:$0xf]
        %v1804 = vld [vmem:[#allocation8 + $0x420] sm:$0xf]
        %v1805 = vld [vmem:[#allocation8 + $0x424] sm:$0xf]
        %v1806 = vld [vmem:[#allocation8 + $0x428] sm:$0xf]
        %v1807 = vld [vmem:[#allocation8 + $0x42c] sm:$0xf]
        %v1808 = vld [vmem:[#allocation8 + $0x430] sm:$0xf]
        %v1809 = vld [vmem:[#allocation8 + $0x434] sm:$0xf]
        %v1810 = vld [vmem:[#allocation8 + $0x438] sm:$0xf]
        %v1811 = vld [vmem:[#allocation8 + $0x43c] sm:$0xf]
        %v1812 = vld [vmem:[#allocation8 + $0x440] sm:$0xf]
        %v1813 = vld [vmem:[#allocation8 + $0x444] sm:$0xf]
        %v1814 = vld [vmem:[#allocation8 + $0x448] sm:$0xf]
        %v1815 = vld [vmem:[#allocation8 + $0x44c] sm:$0xf]
        %v1816 = vld [vmem:[#allocation8 + $0x450] sm:$0xf]
        %v1817 = vld [vmem:[#allocation8 + $0x454] sm:$0xf]
        %v1818 = vld [vmem:[#allocation8 + $0x458] sm:$0xf]
        %v1819 = vld [vmem:[#allocation8 + $0x45c] sm:$0xf]
        %v1820 = vld [vmem:[#allocation8 + $0x460] sm:$0xf]
        %v1821 = vld [vmem:[#allocation8 + $0x464] sm:$0xf]
        %v1822 = vld [vmem:[#allocation8 + $0x468] sm:$0xf]
        %v1823 = vld [vmem:[#allocation8 + $0x46c] sm:$0xf]
        %v1824 = vld [vmem:[#allocation8 + $0x470] sm:$0xf]
        %v1825 = vld [vmem:[#allocation8 + $0x474] sm:$0xf]
        %v1826 = vld [vmem:[#allocation8 + $0x478] sm:$0xf]
        %v1827 = vld [vmem:[#allocation8 + $0x47c] sm:$0xf]
        %v1828 = vld [vmem:[#allocation8 + $0x480] sm:$0xf]
        %v1829 = vld [vmem:[#allocation8 + $0x484] sm:$0xf]
        %v1830 = vld [vmem:[#allocation8 + $0x488] sm:$0xf]
        %v1831 = vld [vmem:[#allocation8 + $0x48c] sm:$0xf]
        %v1832 = vld [vmem:[#allocation8 + $0x490] sm:$0xf]
        %v1833 = vld [vmem:[#allocation8 + $0x494] sm:$0xf]
        %v1834 = vld [vmem:[#allocation8 + $0x498] sm:$0xf]
        %v1835 = vld [vmem:[#allocation8 + $0x49c] sm:$0xf]
        %v1836 = vld [vmem:[#allocation8 + $0x4a0] sm:$0xf]
        %v1837 = vld [vmem:[#allocation8 + $0x4a4] sm:$0xf]
        %v1838 = vld [vmem:[#allocation8 + $0x4a8] sm:$0xf]
        %v1839 = vld [vmem:[#allocation8 + $0x4ac] sm:$0xf]
        %v1840 = vld [vmem:[#allocation8 + $0x4b0] sm:$0xf]
        %v1841 = vld [vmem:[#allocation8 + $0x4b4] sm:$0xf]
        %v1842 = vld [vmem:[#allocation8 + $0x4b8] sm:$0xf]
        %v1843 = vld [vmem:[#allocation8 + $0x4bc] sm:$0xf]
        %v1844 = vld [vmem:[#allocation8 + $0x4c0] sm:$0xf]
        %v1845 = vld [vmem:[#allocation8 + $0x4c4] sm:$0xf]
        %v1846 = vld [vmem:[#allocation8 + $0x4c8] sm:$0xf]
        %v1847 = vld [vmem:[#allocation8 + $0x4cc] sm:$0xf]
        %v1848 = vld [vmem:[#allocation8 + $0x4d0] sm:$0xf]
        %v1849 = vld [vmem:[#allocation8 + $0x4d4] sm:$0xf]
        %v1850 = vld [vmem:[#allocation8 + $0x4d8] sm:$0xf]
        %v1851 = vld [vmem:[#allocation8 + $0x4dc] sm:$0xf]
        %v1852 = vld [vmem:[#allocation8 + $0x4e0] sm:$0xf]
        %v1853 = vld [vmem:[#allocation8 + $0x4e4] sm:$0xf]
        %v1854 = vld [vmem:[#allocation8 + $0x4e8] sm:$0xf]
        %v1855 = vld [vmem:[#allocation8 + $0x4ec] sm:$0xf]
        %v1856 = vld [vmem:[#allocation8 + $0x4f0] sm:$0xf]
        %v1857 = vld [vmem:[#allocation8 + $0x4f4] sm:$0xf]
        %v1858 = vld [vmem:[#allocation8 + $0x4f8] sm:$0xf]
        %v1859 = vld [vmem:[#allocation8 + $0x4fc] sm:$0xf]
        %v1860 = vld [vmem:[#allocation8 + $0x500] sm:$0xf]
        %v1861 = vld [vmem:[#allocation8 + $0x504] sm:$0xf]
        %v1862 = vld [vmem:[#allocation8 + $0x508] sm:$0xf]
        %v1863 = vld [vmem:[#allocation8 + $0x50c] sm:$0xf]
        %v1864 = vld [vmem:[#allocation8 + $0x510] sm:$0xf]
        %v1865 = vld [vmem:[#allocation8 + $0x514] sm:$0xf]
        %v1866 = vld [vmem:[#allocation8 + $0x518] sm:$0xf]
        %v1867 = vld [vmem:[#allocation8 + $0x51c] sm:$0xf]
        %v1868 = vld [vmem:[#allocation8 + $0x520] sm:$0xf]
        %v1869 = vld [vmem:[#allocation8 + $0x524] sm:$0xf]
        %v1870 = vld [vmem:[#allocation8 + $0x528] sm:$0xf]
        %v1871 = vld [vmem:[#allocation8 + $0x52c] sm:$0xf]
        %v1872 = vld [vmem:[#allocation8 + $0x530] sm:$0xf]
        %v1873 = vld [vmem:[#allocation8 + $0x534] sm:$0xf]
        %v1874 = vld [vmem:[#allocation8 + $0x538] sm:$0xf]
        %v1875 = vld [vmem:[#allocation8 + $0x53c] sm:$0xf]
        %v1876 = vld [vmem:[#allocation8 + $0x540] sm:$0xf]
        %v1877 = vld [vmem:[#allocation8 + $0x544] sm:$0xf]
        %v1878 = vld [vmem:[#allocation8 + $0x548] sm:$0xf]
        %v1879 = vld [vmem:[#allocation8 + $0x54c] sm:$0xf]
        %v1880 = vld [vmem:[#allocation8 + $0x550] sm:$0xf]
        %v1881 = vld [vmem:[#allocation8 + $0x554] sm:$0xf]
        %v1882 = vld [vmem:[#allocation8 + $0x558] sm:$0xf]
        %v1883 = vld [vmem:[#allocation8 + $0x55c] sm:$0xf]
        %v1884 = vld [vmem:[#allocation8 + $0x560] sm:$0xf]
        %v1885 = vld [vmem:[#allocation8 + $0x564] sm:$0xf]
        %v1886 = vld [vmem:[#allocation8 + $0x568] sm:$0xf]
        %v1887 = vld [vmem:[#allocation8 + $0x56c] sm:$0xf]
        %v1888 = vld [vmem:[#allocation8 + $0x570] sm:$0xf]
        %v1889 = vld [vmem:[#allocation8 + $0x574] sm:$0xf]
        %v1890 = vld [vmem:[#allocation8 + $0x578] sm:$0xf]
        %v1891 = vld [vmem:[#allocation8 + $0x57c] sm:$0xf]
        %v1892 = vld [vmem:[#allocation8 + $0x580] sm:$0xf]
        %v1893 = vld [vmem:[#allocation8 + $0x584] sm:$0xf]
        %v1894 = vld [vmem:[#allocation8 + $0x588] sm:$0xf]
        %v1895 = vld [vmem:[#allocation8 + $0x58c] sm:$0xf]
        %v1896 = vld [vmem:[#allocation8 + $0x590] sm:$0xf]
        %v1897 = vld [vmem:[#allocation8 + $0x594] sm:$0xf]
        %v1898 = vld [vmem:[#allocation8 + $0x598] sm:$0xf]
        %v1899 = vld [vmem:[#allocation8 + $0x59c] sm:$0xf]
        %v1900 = vld [vmem:[#allocation8 + $0x5a0] sm:$0xf]
        %v1901 = vld [vmem:[#allocation8 + $0x5a4] sm:$0xf]
        %v1902 = vld [vmem:[#allocation8 + $0x5a8] sm:$0xf]
        %v1903 = vld [vmem:[#allocation8 + $0x5ac] sm:$0xf]
        %v1904 = vld [vmem:[#allocation8 + $0x5b0] sm:$0xf]
        %v1905 = vld [vmem:[#allocation8 + $0x5b4] sm:$0xf]
        %v1906 = vld [vmem:[#allocation8 + $0x5b8] sm:$0xf]
        %v1907 = vld [vmem:[#allocation8 + $0x5bc] sm:$0xf]
        %v1908 = vld [vmem:[#allocation8 + $0x5c0] sm:$0xf]
        %v1909 = vld [vmem:[#allocation8 + $0x5c4] sm:$0xf]
        %v1910 = vld [vmem:[#allocation8 + $0x5c8] sm:$0xf]
        %v1911 = vld [vmem:[#allocation8 + $0x5cc] sm:$0xf]
        %v1912 = vld [vmem:[#allocation8 + $0x5d0] sm:$0xf]
        %v1913 = vld [vmem:[#allocation8 + $0x5d4] sm:$0xf]
        %v1914 = vld [vmem:[#allocation8 + $0x5d8] sm:$0xf]
        %v1915 = vld [vmem:[#allocation8 + $0x5dc] sm:$0xf]
        %v1916 = vld [vmem:[#allocation8 + $0x5e0] sm:$0xf]
        %v1917 = vld [vmem:[#allocation8 + $0x5e4] sm:$0xf]
        %v1918 = vld [vmem:[#allocation8 + $0x5e8] sm:$0xf]
        %v1919 = vld [vmem:[#allocation8 + $0x5ec] sm:$0xf]
        %v1920 = vld [vmem:[#allocation8 + $0x5f0] sm:$0xf]
        %v1921 = vld [vmem:[#allocation8 + $0x5f4] sm:$0xf]
        %v1922 = vld [vmem:[#allocation8 + $0x5f8] sm:$0xf]
        %v1923 = vld [vmem:[#allocation8 + $0x5fc] sm:$0xf]
        %v1924 = vld [vmem:[#allocation8 + $0x600] sm:$0xf]
        %v1925 = vld [vmem:[#allocation8 + $0x604] sm:$0xf]
        %v1926 = vld [vmem:[#allocation8 + $0x608] sm:$0xf]
        %v1927 = vld [vmem:[#allocation8 + $0x60c] sm:$0xf]
        %v1928 = vld [vmem:[#allocation8 + $0x610] sm:$0xf]
        %v1929 = vld [vmem:[#allocation8 + $0x614] sm:$0xf]
        %v1930 = vld [vmem:[#allocation8 + $0x618] sm:$0xf]
        %v1931 = vld [vmem:[#allocation8 + $0x61c] sm:$0xf]
        %v1932 = vld [vmem:[#allocation8 + $0x620] sm:$0xf]
        %v1933 = vld [vmem:[#allocation8 + $0x624] sm:$0xf]
        %v1934 = vld [vmem:[#allocation8 + $0x628] sm:$0xf]
        %v1935 = vld [vmem:[#allocation8 + $0x62c] sm:$0xf]
        %v1936 = vld [vmem:[#allocation8 + $0x630] sm:$0xf]
        %v1937 = vld [vmem:[#allocation8 + $0x634] sm:$0xf]
        %v1938 = vld [vmem:[#allocation8 + $0x638] sm:$0xf]
        %v1939 = vld [vmem:[#allocation8 + $0x63c] sm:$0xf]
        %v1940 = vld [vmem:[#allocation8 + $0x640] sm:$0xf]
        %v1941 = vld [vmem:[#allocation8 + $0x644] sm:$0xf]
        %v1942 = vld [vmem:[#allocation8 + $0x648] sm:$0xf]
        %v1943 = vld [vmem:[#allocation8 + $0x64c] sm:$0xf]
        %v1944 = vld [vmem:[#allocation8 + $0x650] sm:$0xf]
        %v1945 = vld [vmem:[#allocation8 + $0x654] sm:$0xf]
        %v1946 = vld [vmem:[#allocation8 + $0x658] sm:$0xf]
        %v1947 = vld [vmem:[#allocation8 + $0x65c] sm:$0xf]
        %v1948 = vld [vmem:[#allocation8 + $0x660] sm:$0xf]
        %v1949 = vld [vmem:[#allocation8 + $0x664] sm:$0xf]
        %v1950 = vld [vmem:[#allocation8 + $0x668] sm:$0xf]
        %v1951 = vld [vmem:[#allocation8 + $0x66c] sm:$0xf]
        %v1952 = vld [vmem:[#allocation8 + $0x670] sm:$0xf]
        %v1953 = vld [vmem:[#allocation8 + $0x674] sm:$0xf]
        %v1954 = vld [vmem:[#allocation8 + $0x678] sm:$0xf]
        %v1955 = vld [vmem:[#allocation8 + $0x67c] sm:$0xf]
        %v1956 = vld [vmem:[#allocation8 + $0x680] sm:$0xf]
        %v1957 = vld [vmem:[#allocation8 + $0x684] sm:$0xf]
        %v1958 = vld [vmem:[#allocation8 + $0x688] sm:$0xf]
        %v1959 = vld [vmem:[#allocation8 + $0x68c] sm:$0xf]
        %v1960 = vld [vmem:[#allocation8 + $0x690] sm:$0xf]
        %v1961 = vld [vmem:[#allocation8 + $0x694] sm:$0xf]
        %v1962 = vld [vmem:[#allocation8 + $0x698] sm:$0xf]
        %v1963 = vld [vmem:[#allocation8 + $0x69c] sm:$0xf]
        %v1964 = vld [vmem:[#allocation8 + $0x6a0] sm:$0xf]
        %v1965 = vld [vmem:[#allocation8 + $0x6a4] sm:$0xf]
        %v1966 = vld [vmem:[#allocation8 + $0x6a8] sm:$0xf]
        %v1967 = vld [vmem:[#allocation8 + $0x6ac] sm:$0xf]
        %v1968 = vld [vmem:[#allocation8 + $0x6b0] sm:$0xf]
        %v1969 = vld [vmem:[#allocation8 + $0x6b4] sm:$0xf]
        %v1970 = vld [vmem:[#allocation8 + $0x6b8] sm:$0xf]
        %v1971 = vld [vmem:[#allocation8 + $0x6bc] sm:$0xf]
        %v1972 = vld [vmem:[#allocation8 + $0x6c0] sm:$0xf]
        %v1973 = vld [vmem:[#allocation8 + $0x6c4] sm:$0xf]
        %v1974 = vld [vmem:[#allocation8 + $0x6c8] sm:$0xf]
        %v1975 = vld [vmem:[#allocation8 + $0x6cc] sm:$0xf]
        %v1976 = vld [vmem:[#allocation8 + $0x6d0] sm:$0xf]
        %v1977 = vld [vmem:[#allocation8 + $0x6d4] sm:$0xf]
        %v1978 = vld [vmem:[#allocation8 + $0x6d8] sm:$0xf]
        %v1979 = vld [vmem:[#allocation8 + $0x6dc] sm:$0xf]
        %v1980 = vld [vmem:[#allocation8 + $0x6e0] sm:$0xf]
        %v1981 = vld [vmem:[#allocation8 + $0x6e4] sm:$0xf]
        %v1982 = vld [vmem:[#allocation8 + $0x6e8] sm:$0xf]
        %v1983 = vld [vmem:[#allocation8 + $0x6ec] sm:$0xf]
        %v1984 = vld [vmem:[#allocation8 + $0x6f0] sm:$0xf]
        %v1985 = vld [vmem:[#allocation8 + $0x6f4] sm:$0xf]
        %v1986 = vld [vmem:[#allocation8 + $0x6f8] sm:$0xf]
        %v1987 = vld [vmem:[#allocation8 + $0x6fc] sm:$0xf]
        %v1988 = vld [vmem:[#allocation8 + $0x700] sm:$0xf]
        %v1989 = vld [vmem:[#allocation8 + $0x704] sm:$0xf]
        %v1990 = vld [vmem:[#allocation8 + $0x708] sm:$0xf]
        %v1991 = vld [vmem:[#allocation8 + $0x70c] sm:$0xf]
        %v1992 = vld [vmem:[#allocation8 + $0x710] sm:$0xf]
        %v1993 = vld [vmem:[#allocation8 + $0x714] sm:$0xf]
        %v1994 = vld [vmem:[#allocation8 + $0x718] sm:$0xf]
        %v1995 = vld [vmem:[#allocation8 + $0x71c] sm:$0xf]
        %v1996 = vld [vmem:[#allocation8 + $0x720] sm:$0xf]
        %v1997 = vld [vmem:[#allocation8 + $0x724] sm:$0xf]
        %v1998 = vld [vmem:[#allocation8 + $0x728] sm:$0xf]
        %v1999 = vld [vmem:[#allocation8 + $0x72c] sm:$0xf]
        %v2000 = vld [vmem:[#allocation8 + $0x730] sm:$0xf]
        %v2001 = vld [vmem:[#allocation8 + $0x734] sm:$0xf]
        %v2002 = vld [vmem:[#allocation8 + $0x738] sm:$0xf]
        %v2003 = vld [vmem:[#allocation8 + $0x73c] sm:$0xf]
        %v2004 = vld [vmem:[#allocation8 + $0x740] sm:$0xf]
        %v2005 = vld [vmem:[#allocation8 + $0x744] sm:$0xf]
        %v2006 = vld [vmem:[#allocation8 + $0x748] sm:$0xf]
        %v2007 = vld [vmem:[#allocation8 + $0x74c] sm:$0xf]
        %v2008 = vld [vmem:[#allocation8 + $0x750] sm:$0xf]
        %v2009 = vld [vmem:[#allocation8 + $0x754] sm:$0xf]
        %v2010 = vld [vmem:[#allocation8 + $0x758] sm:$0xf]
        %v2011 = vld [vmem:[#allocation8 + $0x75c] sm:$0xf]
        %v2012 = vld [vmem:[#allocation8 + $0x760] sm:$0xf]
        %v2013 = vld [vmem:[#allocation8 + $0x764] sm:$0xf]
        %v2014 = vld [vmem:[#allocation8 + $0x768] sm:$0xf]
        %v2015 = vld [vmem:[#allocation8 + $0x76c] sm:$0xf]
        %v2016 = vld [vmem:[#allocation8 + $0x770] sm:$0xf]
        %v2017 = vld [vmem:[#allocation8 + $0x774] sm:$0xf]
        %v2018 = vld [vmem:[#allocation8 + $0x778] sm:$0xf]
        %v2019 = vld [vmem:[#allocation8 + $0x77c] sm:$0xf]
        %v2020 = vld [vmem:[#allocation8 + $0x780] sm:$0xf]
        %v2021 = vld [vmem:[#allocation8 + $0x784] sm:$0xf]
        %v2022 = vld [vmem:[#allocation8 + $0x788] sm:$0xf]
        %v2023 = vld [vmem:[#allocation8 + $0x78c] sm:$0xf]
        %v2024 = vld [vmem:[#allocation8 + $0x790] sm:$0xf]
        %v2025 = vld [vmem:[#allocation8 + $0x794] sm:$0xf]
        %v2026 = vld [vmem:[#allocation8 + $0x798] sm:$0xf]
        %v2027 = vld [vmem:[#allocation8 + $0x79c] sm:$0xf]
        %v2028 = vld [vmem:[#allocation8 + $0x7a0] sm:$0xf]
        %v2029 = vld [vmem:[#allocation8 + $0x7a4] sm:$0xf]
        %v2030 = vld [vmem:[#allocation8 + $0x7a8] sm:$0xf]
        %v2031 = vld [vmem:[#allocation8 + $0x7ac] sm:$0xf]
        %v2032 = vld [vmem:[#allocation8 + $0x7b0] sm:$0xf]
        %v2033 = vld [vmem:[#allocation8 + $0x7b4] sm:$0xf]
        %v2034 = vld [vmem:[#allocation8 + $0x7b8] sm:$0xf]
        %v2035 = vld [vmem:[#allocation8 + $0x7bc] sm:$0xf]
        %v2036 = vld [vmem:[#allocation8 + $0x7c0] sm:$0xf]
        %v2037 = vld [vmem:[#allocation8 + $0x7c4] sm:$0xf]
        %v2038 = vld [vmem:[#allocation8 + $0x7c8] sm:$0xf]
        %v2039 = vld [vmem:[#allocation8 + $0x7cc] sm:$0xf]
        %v2040 = vld [vmem:[#allocation8 + $0x7d0] sm:$0xf]
        %v2041 = vld [vmem:[#allocation8 + $0x7d4] sm:$0xf]
        %v2042 = vld [vmem:[#allocation8 + $0x7d8] sm:$0xf]
        %v2043 = vld [vmem:[#allocation8 + $0x7dc] sm:$0xf]
        %v2044 = vld [vmem:[#allocation8 + $0x7e0] sm:$0xf]
        %v2045 = vld [vmem:[#allocation8 + $0x7e4] sm:$0xf]
        %v2046 = vld [vmem:[#allocation8 + $0x7e8] sm:$0xf]
        %v2047 = vld [vmem:[#allocation8 + $0x7ec] sm:$0xf]
        %v2048 = vld [vmem:[#allocation8 + $0x7f0] sm:$0xf]
        %v2049 = vld [vmem:[#allocation8 + $0x7f4] sm:$0xf]
        %v2050 = vld [vmem:[#allocation8 + $0x7f8] sm:$0xf]
        %v2051 = vld [vmem:[#allocation8 + $0x7fc] sm:$0xf]
        %v2084 = vlaneseq
        %v2085 = vshrl.u32 %v2084, 7
        %v2086 = vsub.s32 0, %v2085
        %v2087 = vrot.slane %v416, %v2086
        %v2088 = vlaneseq
        %v2089 = vshrl.u32 %v2088, 7
        %v2090 = vsub.s32 0, %v2089
        %v2091 = vrot.slane %v417, %v2090
        %v2092 = vlaneseq
        %v2093 = vshrl.u32 %v2092, 7
        %v2094 = vsub.s32 0, %v2093
        %v2095 = vrot.slane %v418, %v2094
        %v2096 = vlaneseq
        %v2097 = vshrl.u32 %v2096, 7
        %v2098 = vsub.s32 0, %v2097
        %v2099 = vrot.slane %v419, %v2098
        %v2100 = vlaneseq
        %v2101 = vshrl.u32 %v2100, 7
        %v2102 = vsub.s32 0, %v2101
        %v2103 = vrot.slane %v420, %v2102
        %v2104 = vlaneseq
        %v2105 = vshrl.u32 %v2104, 7
        %v2106 = vsub.s32 0, %v2105
        %v2107 = vrot.slane %v421, %v2106
        %v2108 = vlaneseq
        %v2109 = vshrl.u32 %v2108, 7
        %v2110 = vsub.s32 0, %v2109
        %v2111 = vrot.slane %v422, %v2110
        %v2112 = vlaneseq
        %v2113 = vshrl.u32 %v2112, 7
        %v2114 = vsub.s32 0, %v2113
        %v2115 = vrot.slane %v423, %v2114
        %v2116 = vlaneseq
        %v2117 = vshrl.u32 %v2116, 7
        %v2118 = vsub.s32 0, %v2117
        %v2119 = vrot.slane %v424, %v2118
        %v2120 = vlaneseq
        %v2121 = vshrl.u32 %v2120, 7
        %v2122 = vsub.s32 0, %v2121
        %v2123 = vrot.slane %v425, %v2122
        %v2124 = vlaneseq
        %v2125 = vshrl.u32 %v2124, 7
        %v2126 = vsub.s32 0, %v2125
        %v2127 = vrot.slane %v426, %v2126
        %v2128 = vlaneseq
        %v2129 = vshrl.u32 %v2128, 7
        %v2130 = vsub.s32 0, %v2129
        %v2131 = vrot.slane %v427, %v2130
        %v2132 = vlaneseq
        %v2133 = vshrl.u32 %v2132, 7
        %v2134 = vsub.s32 0, %v2133
        %v2135 = vrot.slane %v428, %v2134
        %v2136 = vlaneseq
        %v2137 = vshrl.u32 %v2136, 7
        %v2138 = vsub.s32 0, %v2137
        %v2139 = vrot.slane %v429, %v2138
        %v2140 = vlaneseq
        %v2141 = vshrl.u32 %v2140, 7
        %v2142 = vsub.s32 0, %v2141
        %v2143 = vrot.slane %v430, %v2142
        %v2144 = vlaneseq
        %v2145 = vshrl.u32 %v2144, 7
        %v2146 = vsub.s32 0, %v2145
        %v2147 = vrot.slane %v431, %v2146
        %v2148 = vlaneseq
        %v2149 = vshrl.u32 %v2148, 7
        %v2150 = vsub.s32 0, %v2149
        %v2151 = vrot.slane %v432, %v2150
        %v2152 = vlaneseq
        %v2153 = vshrl.u32 %v2152, 7
        %v2154 = vsub.s32 0, %v2153
        %v2155 = vrot.slane %v433, %v2154
        %v2156 = vlaneseq
        %v2157 = vshrl.u32 %v2156, 7
        %v2158 = vsub.s32 0, %v2157
        %v2159 = vrot.slane %v434, %v2158
        %v2160 = vlaneseq
        %v2161 = vshrl.u32 %v2160, 7
        %v2162 = vsub.s32 0, %v2161
        %v2163 = vrot.slane %v435, %v2162
        %v2164 = vlaneseq
        %v2165 = vshrl.u32 %v2164, 7
        %v2166 = vsub.s32 0, %v2165
        %v2167 = vrot.slane %v436, %v2166
        %v2168 = vlaneseq
        %v2169 = vshrl.u32 %v2168, 7
        %v2170 = vsub.s32 0, %v2169
        %v2171 = vrot.slane %v437, %v2170
        %v2172 = vlaneseq
        %v2173 = vshrl.u32 %v2172, 7
        %v2174 = vsub.s32 0, %v2173
        %v2175 = vrot.slane %v438, %v2174
        %v2176 = vlaneseq
        %v2177 = vshrl.u32 %v2176, 7
        %v2178 = vsub.s32 0, %v2177
        %v2179 = vrot.slane %v439, %v2178
        %v2180 = vlaneseq
        %v2181 = vshrl.u32 %v2180, 7
        %v2182 = vsub.s32 0, %v2181
        %v2183 = vrot.slane %v440, %v2182
        %v2184 = vlaneseq
        %v2185 = vshrl.u32 %v2184, 7
        %v2186 = vsub.s32 0, %v2185
        %v2187 = vrot.slane %v441, %v2186
        %v2188 = vlaneseq
        %v2189 = vshrl.u32 %v2188, 7
        %v2190 = vsub.s32 0, %v2189
        %v2191 = vrot.slane %v442, %v2190
        %v2192 = vlaneseq
        %v2193 = vshrl.u32 %v2192, 7
        %v2194 = vsub.s32 0, %v2193
        %v2195 = vrot.slane %v443, %v2194
        %v2196 = vlaneseq
        %v2197 = vshrl.u32 %v2196, 7
        %v2198 = vsub.s32 0, %v2197
        %v2199 = vrot.slane %v444, %v2198
        %v2200 = vlaneseq
        %v2201 = vshrl.u32 %v2200, 7
        %v2202 = vsub.s32 0, %v2201
        %v2203 = vrot.slane %v445, %v2202
        %v2204 = vlaneseq
        %v2205 = vshrl.u32 %v2204, 7
        %v2206 = vsub.s32 0, %v2205
        %v2207 = vrot.slane %v446, %v2206
        %v2208 = vlaneseq
        %v2209 = vshrl.u32 %v2208, 7
        %v2210 = vsub.s32 0, %v2209
        %v2211 = vrot.slane %v447, %v2210
        %2212 = vset.pattern.permute.xlu0 0
        %2213 = vperm.xlu0 %2212, %v2087
        %v2214 = vpop.permute.xlu0 %2213
        %2216 = vset.pattern.permute.xlu0 0
        %2217 = vperm.xlu0 %2216, %v2091
        %v2218 = vpop.permute.xlu0 %2217
        %2220 = vset.pattern.permute.xlu0 0
        %2221 = vperm.xlu0 %2220, %v2095
        %v2222 = vpop.permute.xlu0 %2221
        %2224 = vset.pattern.permute.xlu0 0
        %2225 = vperm.xlu0 %2224, %v2099
        %v2226 = vpop.permute.xlu0 %2225
        %2228 = vset.pattern.permute.xlu0 0
        %2229 = vperm.xlu0 %2228, %v2103
        %v2230 = vpop.permute.xlu0 %2229
        %2232 = vset.pattern.permute.xlu0 0
        %2233 = vperm.xlu0 %2232, %v2107
        %v2234 = vpop.permute.xlu0 %2233
        %2236 = vset.pattern.permute.xlu0 0
        %2237 = vperm.xlu0 %2236, %v2111
        %v2238 = vpop.permute.xlu0 %2237
        %2240 = vset.pattern.permute.xlu0 0
        %2241 = vperm.xlu0 %2240, %v2115
        %v2242 = vpop.permute.xlu0 %2241
        %2244 = vset.pattern.permute.xlu0 0
        %2245 = vperm.xlu0 %2244, %v2119
        %v2246 = vpop.permute.xlu0 %2245
        %2248 = vset.pattern.permute.xlu0 0
        %2249 = vperm.xlu0 %2248, %v2123
        %v2250 = vpop.permute.xlu0 %2249
        %2252 = vset.pattern.permute.xlu0 0
        %2253 = vperm.xlu0 %2252, %v2127
        %v2254 = vpop.permute.xlu0 %2253
        %2256 = vset.pattern.permute.xlu0 0
        %2257 = vperm.xlu0 %2256, %v2131
        %v2258 = vpop.permute.xlu0 %2257
        %2260 = vset.pattern.permute.xlu0 0
        %2261 = vperm.xlu0 %2260, %v2135
        %v2262 = vpop.permute.xlu0 %2261
        %2264 = vset.pattern.permute.xlu0 0
        %2265 = vperm.xlu0 %2264, %v2139
        %v2266 = vpop.permute.xlu0 %2265
        %2268 = vset.pattern.permute.xlu0 0
        %2269 = vperm.xlu0 %2268, %v2143
        %v2270 = vpop.permute.xlu0 %2269
        %2272 = vset.pattern.permute.xlu0 0
        %2273 = vperm.xlu0 %2272, %v2147
        %v2274 = vpop.permute.xlu0 %2273
        %2276 = vset.pattern.permute.xlu0 0
        %2277 = vperm.xlu0 %2276, %v2151
        %v2278 = vpop.permute.xlu0 %2277
        %2280 = vset.pattern.permute.xlu0 0
        %2281 = vperm.xlu0 %2280, %v2155
        %v2282 = vpop.permute.xlu0 %2281
        %2284 = vset.pattern.permute.xlu0 0
        %2285 = vperm.xlu0 %2284, %v2159
        %v2286 = vpop.permute.xlu0 %2285
        %2288 = vset.pattern.permute.xlu0 0
        %2289 = vperm.xlu0 %2288, %v2163
        %v2290 = vpop.permute.xlu0 %2289
        %2292 = vset.pattern.permute.xlu0 0
        %2293 = vperm.xlu0 %2292, %v2167
        %v2294 = vpop.permute.xlu0 %2293
        %2296 = vset.pattern.permute.xlu0 0
        %2297 = vperm.xlu0 %2296, %v2171
        %v2298 = vpop.permute.xlu0 %2297
        %2300 = vset.pattern.permute.xlu0 0
        %2301 = vperm.xlu0 %2300, %v2175
        %v2302 = vpop.permute.xlu0 %2301
        %2304 = vset.pattern.permute.xlu0 0
        %2305 = vperm.xlu0 %2304, %v2179
        %v2306 = vpop.permute.xlu0 %2305
        %2308 = vset.pattern.permute.xlu0 0
        %2309 = vperm.xlu0 %2308, %v2183
        %v2310 = vpop.permute.xlu0 %2309
        %2312 = vset.pattern.permute.xlu0 0
        %2313 = vperm.xlu0 %2312, %v2187
        %v2314 = vpop.permute.xlu0 %2313
        %2316 = vset.pattern.permute.xlu0 0
        %2317 = vperm.xlu0 %2316, %v2191
        %v2318 = vpop.permute.xlu0 %2317
        %2320 = vset.pattern.permute.xlu0 0
        %2321 = vperm.xlu0 %2320, %v2195
        %v2322 = vpop.permute.xlu0 %2321
        %2324 = vset.pattern.permute.xlu0 0
        %2325 = vperm.xlu0 %2324, %v2199
        %v2326 = vpop.permute.xlu0 %2325
        %2328 = vset.pattern.permute.xlu0 0
        %2329 = vperm.xlu0 %2328, %v2203
        %v2330 = vpop.permute.xlu0 %2329
        %2332 = vset.pattern.permute.xlu0 0
        %2333 = vperm.xlu0 %2332, %v2207
        %v2334 = vpop.permute.xlu0 %2333
        %2336 = vset.pattern.permute.xlu0 0
        %2337 = vperm.xlu0 %2336, %v2211
        %v2338 = vpop.permute.xlu0 %2337
        %v2340 = vmul.f32 %v1476, %v2214
        %v2341 = vmul.f32 %v1477, %v2218
        %v2342 = vmul.f32 %v1478, %v2222
        %v2343 = vmul.f32 %v1479, %v2226
        %v2344 = vmul.f32 %v1480, %v2230
        %v2345 = vmul.f32 %v1481, %v2234
        %v2346 = vmul.f32 %v1482, %v2238
        %v2347 = vmul.f32 %v1483, %v2242
        %v2348 = vmul.f32 %v1484, %v2246
        %v2349 = vmul.f32 %v1485, %v2250
        %v2350 = vmul.f32 %v1486, %v2254
        %v2351 = vmul.f32 %v1487, %v2258
        %v2352 = vmul.f32 %v1488, %v2262
        %v2353 = vmul.f32 %v1489, %v2266
        %v2354 = vmul.f32 %v1490, %v2270
        %v2355 = vmul.f32 %v1491, %v2274
        %v2356 = vmul.f32 %v1492, %v2278
        %v2357 = vmul.f32 %v1493, %v2282
        %v2358 = vmul.f32 %v1494, %v2286
        %v2359 = vmul.f32 %v1495, %v2290
        %v2360 = vmul.f32 %v1496, %v2294
        %v2361 = vmul.f32 %v1497, %v2298
        %v2362 = vmul.f32 %v1498, %v2302
        %v2363 = vmul.f32 %v1499, %v2306
        %v2364 = vmul.f32 %v1500, %v2310
        %v2365 = vmul.f32 %v1501, %v2314
        %v2366 = vmul.f32 %v1502, %v2318
        %v2367 = vmul.f32 %v1503, %v2322
        %v2368 = vmul.f32 %v1504, %v2326
        %v2369 = vmul.f32 %v1505, %v2330
        %v2370 = vmul.f32 %v1506, %v2334
        %v2371 = vmul.f32 %v1507, %v2338
        %v2388 = vunpack.c.l.b16 %v1540
        %v2389 = vunpack.c.l.b16 %v1541
        %v2390 = vunpack.c.l.b16 %v1542
        %v2391 = vunpack.c.l.b16 %v1543
        %v2392 = vunpack.c.l.b16 %v1544
        %v2393 = vunpack.c.l.b16 %v1545
        %v2394 = vunpack.c.l.b16 %v1546
        %v2395 = vunpack.c.l.b16 %v1547
        %v2396 = vunpack.c.l.b16 %v1548
        %v2397 = vunpack.c.l.b16 %v1549
        %v2398 = vunpack.c.l.b16 %v1550
        %v2399 = vunpack.c.l.b16 %v1551
        %v2400 = vunpack.c.l.b16 %v1552
        %v2401 = vunpack.c.l.b16 %v1553
        %v2402 = vunpack.c.l.b16 %v1554
        %v2403 = vunpack.c.l.b16 %v1555
        %v2404 = vpack.c.b16 %v2389, %v2388
        %v2405 = vpack.c.b16 %v2391, %v2390
        %v2406 = vpack.c.b16 %v2393, %v2392
        %v2407 = vpack.c.b16 %v2395, %v2394
        %v2408 = vpack.c.b16 %v2397, %v2396
        %v2409 = vpack.c.b16 %v2399, %v2398
        %v2410 = vpack.c.b16 %v2401, %v2400
        %v2411 = vpack.c.b16 %v2403, %v2402
        %2420 = vmatprep.subr.bf16.mxu0 0
        %2421 = vmatpush1.bf16.xpose.msra.mxu0 %v2404
        %2422 = vmatprep.subr.bf16.mxu0 0
        %2423 = vmatpush1.bf16.xpose.msra.mxu0 %v2405
        %2424 = vmatprep.subr.bf16.mxu0 0
        %2425 = vmatpush1.bf16.xpose.msra.mxu0 %v2406
        %2426 = vmatprep.subr.bf16.mxu0 0
        %2427 = vmatpush1.bf16.xpose.msra.mxu0 %v2407
        %2428 = vmatprep.subr.bf16.mxu0 0
        %2429 = vmatpush1.bf16.xpose.msra.mxu0 %v2408
        %2430 = vmatprep.subr.bf16.mxu0 0
        %2431 = vmatpush1.bf16.xpose.msra.mxu0 %v2409
        %2432 = vmatprep.subr.bf16.mxu0 0
        %2433 = vmatpush1.bf16.xpose.msra.mxu0 %v2410
        %2434 = vmatprep.subr.bf16.mxu0 0
        %2435 = vmatpush1.bf16.xpose.msra.mxu0 %v2411
        %2436 = vmatprep.subr.bf16.mxu0 0
        %2437 = vmatpush1.bf16.xpose.msra.mxu0 0
        %2438 = vmatprep.subr.bf16.mxu0 0
        %2439 = vmatpush1.bf16.xpose.msra.mxu0 0
        %2440 = vmatprep.subr.bf16.mxu0 0
        %2441 = vmatpush1.bf16.xpose.msra.mxu0 0
        %2442 = vmatprep.subr.bf16.mxu0 0
        %2443 = vmatpush1.bf16.xpose.msra.mxu0 0
        %2444 = vmatprep.subr.bf16.mxu0 0
        %2445 = vmatpush1.bf16.xpose.msra.mxu0 0
        %2446 = vmatprep.subr.bf16.mxu0 0
        %2447 = vmatpush1.bf16.xpose.msra.mxu0 0
        %2448 = vmatprep.subr.bf16.mxu0 0
        %2449 = vmatpush1.bf16.xpose.msra.mxu0 0
        %2450 = vmatprep.subr.bf16.mxu0 0
        %2451 = vmatpush1.bf16.xpose.msra.mxu0 0
        %2452 = vmatprep.mubr.bf16.mxu0 0
        %2453 = vmatmul.mubr.bf16.gmra.mrb[0].mxu0 %v1508
        %v2454 = vpop.f32.mrb[0].mxu0
        %v2455 = vadd.f32 %v2340, %v2454
        %v2456 = vpop.f32.mrb[0].mxu0
        %v2457 = vpop.f32.mrb[0].mxu0
        %v2458 = vpop.f32.mrb[0].mxu0
        %2459 = vdwg.mxu0
        %v2476 = vunpack.c.l.b16 %v1556
        %v2477 = vunpack.c.l.b16 %v1557
        %v2478 = vunpack.c.l.b16 %v1558
        %v2479 = vunpack.c.l.b16 %v1559
        %v2480 = vunpack.c.l.b16 %v1560
        %v2481 = vunpack.c.l.b16 %v1561
        %v2482 = vunpack.c.l.b16 %v1562
        %v2483 = vunpack.c.l.b16 %v1563
        %v2484 = vunpack.c.l.b16 %v1564
        %v2485 = vunpack.c.l.b16 %v1565
        %v2486 = vunpack.c.l.b16 %v1566
        %v2487 = vunpack.c.l.b16 %v1567
        %v2488 = vunpack.c.l.b16 %v1568
        %v2489 = vunpack.c.l.b16 %v1569
        %v2490 = vunpack.c.l.b16 %v1570
        %v2491 = vunpack.c.l.b16 %v1571
        %v2492 = vpack.c.b16 %v2477, %v2476
        %v2493 = vpack.c.b16 %v2479, %v2478
        %v2494 = vpack.c.b16 %v2481, %v2480
        %v2495 = vpack.c.b16 %v2483, %v2482
        %v2496 = vpack.c.b16 %v2485, %v2484
        %v2497 = vpack.c.b16 %v2487, %v2486
        %v2498 = vpack.c.b16 %v2489, %v2488
        %v2499 = vpack.c.b16 %v2491, %v2490
        %2508 = vmatprep.subr.bf16.mxu0 0
        %2509 = vmatpush1.bf16.xpose.msra.mxu0 %v2492
        %2510 = vmatprep.subr.bf16.mxu0 0
        %2511 = vmatpush1.bf16.xpose.msra.mxu0 %v2493
        %2512 = vmatprep.subr.bf16.mxu0 0
        %2513 = vmatpush1.bf16.xpose.msra.mxu0 %v2494
        %2514 = vmatprep.subr.bf16.mxu0 0
        %2515 = vmatpush1.bf16.xpose.msra.mxu0 %v2495
        %2516 = vmatprep.subr.bf16.mxu0 0
        %2517 = vmatpush1.bf16.xpose.msra.mxu0 %v2496
        %2518 = vmatprep.subr.bf16.mxu0 0
        %2519 = vmatpush1.bf16.xpose.msra.mxu0 %v2497
        %2520 = vmatprep.subr.bf16.mxu0 0
        %2521 = vmatpush1.bf16.xpose.msra.mxu0 %v2498
        %2522 = vmatprep.subr.bf16.mxu0 0
        %2523 = vmatpush1.bf16.xpose.msra.mxu0 %v2499
        %2524 = vmatprep.subr.bf16.mxu0 0
        %2525 = vmatpush1.bf16.xpose.msra.mxu0 0
        %2526 = vmatprep.subr.bf16.mxu0 0
        %2527 = vmatpush1.bf16.xpose.msra.mxu0 0
        %2528 = vmatprep.subr.bf16.mxu0 0
        %2529 = vmatpush1.bf16.xpose.msra.mxu0 0
        %2530 = vmatprep.subr.bf16.mxu0 0
        %2531 = vmatpush1.bf16.xpose.msra.mxu0 0
        %2532 = vmatprep.subr.bf16.mxu0 0
        %2533 = vmatpush1.bf16.xpose.msra.mxu0 0
        %2534 = vmatprep.subr.bf16.mxu0 0
        %2535 = vmatpush1.bf16.xpose.msra.mxu0 0
        %2536 = vmatprep.subr.bf16.mxu0 0
        %2537 = vmatpush1.bf16.xpose.msra.mxu0 0
        %2538 = vmatprep.subr.bf16.mxu0 0
        %2539 = vmatpush1.bf16.xpose.msra.mxu0 0
        %2540 = vmatprep.mubr.bf16.mxu0 0
        %2541 = vmatmul.mubr.bf16.gmra.mrb[0].mxu0 %v1509
        %v2542 = vpop.f32.mrb[0].mxu0
        %v2543 = vadd.f32 %v2341, %v2542
        %v2544 = vpop.f32.mrb[0].mxu0
        %v2545 = vpop.f32.mrb[0].mxu0
        %v2546 = vpop.f32.mrb[0].mxu0
        %2547 = vdwg.mxu0
        %v2564 = vunpack.c.l.b16 %v1572
        %v2565 = vunpack.c.l.b16 %v1573
        %v2566 = vunpack.c.l.b16 %v1574
        %v2567 = vunpack.c.l.b16 %v1575
        %v2568 = vunpack.c.l.b16 %v1576
        %v2569 = vunpack.c.l.b16 %v1577
        %v2570 = vunpack.c.l.b16 %v1578
        %v2571 = vunpack.c.l.b16 %v1579
        %v2572 = vunpack.c.l.b16 %v1580
        %v2573 = vunpack.c.l.b16 %v1581
        %v2574 = vunpack.c.l.b16 %v1582
        %v2575 = vunpack.c.l.b16 %v1583
        %v2576 = vunpack.c.l.b16 %v1584
        %v2577 = vunpack.c.l.b16 %v1585
        %v2578 = vunpack.c.l.b16 %v1586
        %v2579 = vunpack.c.l.b16 %v1587
        %v2580 = vpack.c.b16 %v2565, %v2564
        %v2581 = vpack.c.b16 %v2567, %v2566
        %v2582 = vpack.c.b16 %v2569, %v2568
        %v2583 = vpack.c.b16 %v2571, %v2570
        %v2584 = vpack.c.b16 %v2573, %v2572
        %v2585 = vpack.c.b16 %v2575, %v2574
        %v2586 = vpack.c.b16 %v2577, %v2576
        %v2587 = vpack.c.b16 %v2579, %v2578
        %2596 = vmatprep.subr.bf16.mxu0 0
        %2597 = vmatpush1.bf16.xpose.msra.mxu0 %v2580
        %2598 = vmatprep.subr.bf16.mxu0 0
        %2599 = vmatpush1.bf16.xpose.msra.mxu0 %v2581
        %2600 = vmatprep.subr.bf16.mxu0 0
        %2601 = vmatpush1.bf16.xpose.msra.mxu0 %v2582
        %2602 = vmatprep.subr.bf16.mxu0 0
        %2603 = vmatpush1.bf16.xpose.msra.mxu0 %v2583
        %2604 = vmatprep.subr.bf16.mxu0 0
        %2605 = vmatpush1.bf16.xpose.msra.mxu0 %v2584
        %2606 = vmatprep.subr.bf16.mxu0 0
        %2607 = vmatpush1.bf16.xpose.msra.mxu0 %v2585
        %2608 = vmatprep.subr.bf16.mxu0 0
        %2609 = vmatpush1.bf16.xpose.msra.mxu0 %v2586
        %2610 = vmatprep.subr.bf16.mxu0 0
        %2611 = vmatpush1.bf16.xpose.msra.mxu0 %v2587
        %2612 = vmatprep.subr.bf16.mxu0 0
        %2613 = vmatpush1.bf16.xpose.msra.mxu0 0
        %2614 = vmatprep.subr.bf16.mxu0 0
        %2615 = vmatpush1.bf16.xpose.msra.mxu0 0
        %2616 = vmatprep.subr.bf16.mxu0 0
        %2617 = vmatpush1.bf16.xpose.msra.mxu0 0
        %2618 = vmatprep.subr.bf16.mxu0 0
        %2619 = vmatpush1.bf16.xpose.msra.mxu0 0
        %2620 = vmatprep.subr.bf16.mxu0 0
        %2621 = vmatpush1.bf16.xpose.msra.mxu0 0
        %2622 = vmatprep.subr.bf16.mxu0 0
        %2623 = vmatpush1.bf16.xpose.msra.mxu0 0
        %2624 = vmatprep.subr.bf16.mxu0 0
        %2625 = vmatpush1.bf16.xpose.msra.mxu0 0
        %2626 = vmatprep.subr.bf16.mxu0 0
        %2627 = vmatpush1.bf16.xpose.msra.mxu0 0
        %2628 = vmatprep.mubr.bf16.mxu0 0
        %2629 = vmatmul.mubr.bf16.gmra.mrb[0].mxu0 %v1510
        %v2630 = vpop.f32.mrb[0].mxu0
        %v2631 = vadd.f32 %v2342, %v2630
        %v2632 = vpop.f32.mrb[0].mxu0
        %v2633 = vpop.f32.mrb[0].mxu0
        %v2634 = vpop.f32.mrb[0].mxu0
        %2635 = vdwg.mxu0
        %v2652 = vunpack.c.l.b16 %v1588
        %v2653 = vunpack.c.l.b16 %v1589
        %v2654 = vunpack.c.l.b16 %v1590
        %v2655 = vunpack.c.l.b16 %v1591
        %v2656 = vunpack.c.l.b16 %v1592
        %v2657 = vunpack.c.l.b16 %v1593
        %v2658 = vunpack.c.l.b16 %v1594
        %v2659 = vunpack.c.l.b16 %v1595
        %v2660 = vunpack.c.l.b16 %v1596
        %v2661 = vunpack.c.l.b16 %v1597
        %v2662 = vunpack.c.l.b16 %v1598
        %v2663 = vunpack.c.l.b16 %v1599
        %v2664 = vunpack.c.l.b16 %v1600
        %v2665 = vunpack.c.l.b16 %v1601
        %v2666 = vunpack.c.l.b16 %v1602
        %v2667 = vunpack.c.l.b16 %v1603
        %v2668 = vpack.c.b16 %v2653, %v2652
        %v2669 = vpack.c.b16 %v2655, %v2654
        %v2670 = vpack.c.b16 %v2657, %v2656
        %v2671 = vpack.c.b16 %v2659, %v2658
        %v2672 = vpack.c.b16 %v2661, %v2660
        %v2673 = vpack.c.b16 %v2663, %v2662
        %v2674 = vpack.c.b16 %v2665, %v2664
        %v2675 = vpack.c.b16 %v2667, %v2666
        %2684 = vmatprep.subr.bf16.mxu0 0
        %2685 = vmatpush1.bf16.xpose.msra.mxu0 %v2668
        %2686 = vmatprep.subr.bf16.mxu0 0
        %2687 = vmatpush1.bf16.xpose.msra.mxu0 %v2669
        %2688 = vmatprep.subr.bf16.mxu0 0
        %2689 = vmatpush1.bf16.xpose.msra.mxu0 %v2670
        %2690 = vmatprep.subr.bf16.mxu0 0
        %2691 = vmatpush1.bf16.xpose.msra.mxu0 %v2671
        %2692 = vmatprep.subr.bf16.mxu0 0
        %2693 = vmatpush1.bf16.xpose.msra.mxu0 %v2672
        %2694 = vmatprep.subr.bf16.mxu0 0
        %2695 = vmatpush1.bf16.xpose.msra.mxu0 %v2673
        %2696 = vmatprep.subr.bf16.mxu0 0
        %2697 = vmatpush1.bf16.xpose.msra.mxu0 %v2674
        %2698 = vmatprep.subr.bf16.mxu0 0
        %2699 = vmatpush1.bf16.xpose.msra.mxu0 %v2675
        %2700 = vmatprep.subr.bf16.mxu0 0
        %2701 = vmatpush1.bf16.xpose.msra.mxu0 0
        %2702 = vmatprep.subr.bf16.mxu0 0
        %2703 = vmatpush1.bf16.xpose.msra.mxu0 0
        %2704 = vmatprep.subr.bf16.mxu0 0
        %2705 = vmatpush1.bf16.xpose.msra.mxu0 0
        %2706 = vmatprep.subr.bf16.mxu0 0
        %2707 = vmatpush1.bf16.xpose.msra.mxu0 0
        %2708 = vmatprep.subr.bf16.mxu0 0
        %2709 = vmatpush1.bf16.xpose.msra.mxu0 0
        %2710 = vmatprep.subr.bf16.mxu0 0
        %2711 = vmatpush1.bf16.xpose.msra.mxu0 0
        %2712 = vmatprep.subr.bf16.mxu0 0
        %2713 = vmatpush1.bf16.xpose.msra.mxu0 0
        %2714 = vmatprep.subr.bf16.mxu0 0
        %2715 = vmatpush1.bf16.xpose.msra.mxu0 0
        %2716 = vmatprep.mubr.bf16.mxu0 0
        %2717 = vmatmul.mubr.bf16.gmra.mrb[0].mxu0 %v1511
        %v2718 = vpop.f32.mrb[0].mxu0
        %v2719 = vadd.f32 %v2343, %v2718
        %v2720 = vpop.f32.mrb[0].mxu0
        %v2721 = vpop.f32.mrb[0].mxu0
        %v2722 = vpop.f32.mrb[0].mxu0
        %2723 = vdwg.mxu0
        %v2740 = vunpack.c.l.b16 %v1604
        %v2741 = vunpack.c.l.b16 %v1605
        %v2742 = vunpack.c.l.b16 %v1606
        %v2743 = vunpack.c.l.b16 %v1607
        %v2744 = vunpack.c.l.b16 %v1608
        %v2745 = vunpack.c.l.b16 %v1609
        %v2746 = vunpack.c.l.b16 %v1610
        %v2747 = vunpack.c.l.b16 %v1611
        %v2748 = vunpack.c.l.b16 %v1612
        %v2749 = vunpack.c.l.b16 %v1613
        %v2750 = vunpack.c.l.b16 %v1614
        %v2751 = vunpack.c.l.b16 %v1615
        %v2752 = vunpack.c.l.b16 %v1616
        %v2753 = vunpack.c.l.b16 %v1617
        %v2754 = vunpack.c.l.b16 %v1618
        %v2755 = vunpack.c.l.b16 %v1619
        %v2756 = vpack.c.b16 %v2741, %v2740
        %v2757 = vpack.c.b16 %v2743, %v2742
        %v2758 = vpack.c.b16 %v2745, %v2744
        %v2759 = vpack.c.b16 %v2747, %v2746
        %v2760 = vpack.c.b16 %v2749, %v2748
        %v2761 = vpack.c.b16 %v2751, %v2750
        %v2762 = vpack.c.b16 %v2753, %v2752
        %v2763 = vpack.c.b16 %v2755, %v2754
        %2772 = vmatprep.subr.bf16.mxu0 0
        %2773 = vmatpush1.bf16.xpose.msra.mxu0 %v2756
        %2774 = vmatprep.subr.bf16.mxu0 0
        %2775 = vmatpush1.bf16.xpose.msra.mxu0 %v2757
        %2776 = vmatprep.subr.bf16.mxu0 0
        %2777 = vmatpush1.bf16.xpose.msra.mxu0 %v2758
        %2778 = vmatprep.subr.bf16.mxu0 0
        %2779 = vmatpush1.bf16.xpose.msra.mxu0 %v2759
        %2780 = vmatprep.subr.bf16.mxu0 0
        %2781 = vmatpush1.bf16.xpose.msra.mxu0 %v2760
        %2782 = vmatprep.subr.bf16.mxu0 0
        %2783 = vmatpush1.bf16.xpose.msra.mxu0 %v2761
        %2784 = vmatprep.subr.bf16.mxu0 0
        %2785 = vmatpush1.bf16.xpose.msra.mxu0 %v2762
        %2786 = vmatprep.subr.bf16.mxu0 0
        %2787 = vmatpush1.bf16.xpose.msra.mxu0 %v2763
        %2788 = vmatprep.subr.bf16.mxu0 0
        %2789 = vmatpush1.bf16.xpose.msra.mxu0 0
        %2790 = vmatprep.subr.bf16.mxu0 0
        %2791 = vmatpush1.bf16.xpose.msra.mxu0 0
        %2792 = vmatprep.subr.bf16.mxu0 0
        %2793 = vmatpush1.bf16.xpose.msra.mxu0 0
        %2794 = vmatprep.subr.bf16.mxu0 0
        %2795 = vmatpush1.bf16.xpose.msra.mxu0 0
        %2796 = vmatprep.subr.bf16.mxu0 0
        %2797 = vmatpush1.bf16.xpose.msra.mxu0 0
        %2798 = vmatprep.subr.bf16.mxu0 0
        %2799 = vmatpush1.bf16.xpose.msra.mxu0 0
        %2800 = vmatprep.subr.bf16.mxu0 0
        %2801 = vmatpush1.bf16.xpose.msra.mxu0 0
        %2802 = vmatprep.subr.bf16.mxu0 0
        %2803 = vmatpush1.bf16.xpose.msra.mxu0 0
        %2804 = vmatprep.mubr.bf16.mxu0 0
        %2805 = vmatmul.mubr.bf16.gmra.mrb[0].mxu0 %v1512
        %v2806 = vpop.f32.mrb[0].mxu0
        %v2807 = vadd.f32 %v2344, %v2806
        %v2808 = vpop.f32.mrb[0].mxu0
        %v2809 = vpop.f32.mrb[0].mxu0
        %v2810 = vpop.f32.mrb[0].mxu0
        %2811 = vdwg.mxu0
        %v2828 = vunpack.c.l.b16 %v1620
        %v2829 = vunpack.c.l.b16 %v1621
        %v2830 = vunpack.c.l.b16 %v1622
        %v2831 = vunpack.c.l.b16 %v1623
        %v2832 = vunpack.c.l.b16 %v1624
        %v2833 = vunpack.c.l.b16 %v1625
        %v2834 = vunpack.c.l.b16 %v1626
        %v2835 = vunpack.c.l.b16 %v1627
        %v2836 = vunpack.c.l.b16 %v1628
        %v2837 = vunpack.c.l.b16 %v1629
        %v2838 = vunpack.c.l.b16 %v1630
        %v2839 = vunpack.c.l.b16 %v1631
        %v2840 = vunpack.c.l.b16 %v1632
        %v2841 = vunpack.c.l.b16 %v1633
        %v2842 = vunpack.c.l.b16 %v1634
        %v2843 = vunpack.c.l.b16 %v1635
        %v2844 = vpack.c.b16 %v2829, %v2828
        %v2845 = vpack.c.b16 %v2831, %v2830
        %v2846 = vpack.c.b16 %v2833, %v2832
        %v2847 = vpack.c.b16 %v2835, %v2834
        %v2848 = vpack.c.b16 %v2837, %v2836
        %v2849 = vpack.c.b16 %v2839, %v2838
        %v2850 = vpack.c.b16 %v2841, %v2840
        %v2851 = vpack.c.b16 %v2843, %v2842
        %2860 = vmatprep.subr.bf16.mxu0 0
        %2861 = vmatpush1.bf16.xpose.msra.mxu0 %v2844
        %2862 = vmatprep.subr.bf16.mxu0 0
        %2863 = vmatpush1.bf16.xpose.msra.mxu0 %v2845
        %2864 = vmatprep.subr.bf16.mxu0 0
        %2865 = vmatpush1.bf16.xpose.msra.mxu0 %v2846
        %2866 = vmatprep.subr.bf16.mxu0 0
        %2867 = vmatpush1.bf16.xpose.msra.mxu0 %v2847
        %2868 = vmatprep.subr.bf16.mxu0 0
        %2869 = vmatpush1.bf16.xpose.msra.mxu0 %v2848
        %2870 = vmatprep.subr.bf16.mxu0 0
        %2871 = vmatpush1.bf16.xpose.msra.mxu0 %v2849
        %2872 = vmatprep.subr.bf16.mxu0 0
        %2873 = vmatpush1.bf16.xpose.msra.mxu0 %v2850
        %2874 = vmatprep.subr.bf16.mxu0 0
        %2875 = vmatpush1.bf16.xpose.msra.mxu0 %v2851
        %2876 = vmatprep.subr.bf16.mxu0 0
        %2877 = vmatpush1.bf16.xpose.msra.mxu0 0
        %2878 = vmatprep.subr.bf16.mxu0 0
        %2879 = vmatpush1.bf16.xpose.msra.mxu0 0
        %2880 = vmatprep.subr.bf16.mxu0 0
        %2881 = vmatpush1.bf16.xpose.msra.mxu0 0
        %2882 = vmatprep.subr.bf16.mxu0 0
        %2883 = vmatpush1.bf16.xpose.msra.mxu0 0
        %2884 = vmatprep.subr.bf16.mxu0 0
        %2885 = vmatpush1.bf16.xpose.msra.mxu0 0
        %2886 = vmatprep.subr.bf16.mxu0 0
        %2887 = vmatpush1.bf16.xpose.msra.mxu0 0
        %2888 = vmatprep.subr.bf16.mxu0 0
        %2889 = vmatpush1.bf16.xpose.msra.mxu0 0
        %2890 = vmatprep.subr.bf16.mxu0 0
        %2891 = vmatpush1.bf16.xpose.msra.mxu0 0
        %2892 = vmatprep.mubr.bf16.mxu0 0
        %2893 = vmatmul.mubr.bf16.gmra.mrb[0].mxu0 %v1513
        %v2894 = vpop.f32.mrb[0].mxu0
        %v2895 = vadd.f32 %v2345, %v2894
        %v2896 = vpop.f32.mrb[0].mxu0
        %v2897 = vpop.f32.mrb[0].mxu0
        %v2898 = vpop.f32.mrb[0].mxu0
        %2899 = vdwg.mxu0
        %v2916 = vunpack.c.l.b16 %v1636
        %v2917 = vunpack.c.l.b16 %v1637
        %v2918 = vunpack.c.l.b16 %v1638
        %v2919 = vunpack.c.l.b16 %v1639
        %v2920 = vunpack.c.l.b16 %v1640
        %v2921 = vunpack.c.l.b16 %v1641
        %v2922 = vunpack.c.l.b16 %v1642
        %v2923 = vunpack.c.l.b16 %v1643
        %v2924 = vunpack.c.l.b16 %v1644
        %v2925 = vunpack.c.l.b16 %v1645
        %v2926 = vunpack.c.l.b16 %v1646
        %v2927 = vunpack.c.l.b16 %v1647
        %v2928 = vunpack.c.l.b16 %v1648
        %v2929 = vunpack.c.l.b16 %v1649
        %v2930 = vunpack.c.l.b16 %v1650
        %v2931 = vunpack.c.l.b16 %v1651
        %v2932 = vpack.c.b16 %v2917, %v2916
        %v2933 = vpack.c.b16 %v2919, %v2918
        %v2934 = vpack.c.b16 %v2921, %v2920
        %v2935 = vpack.c.b16 %v2923, %v2922
        %v2936 = vpack.c.b16 %v2925, %v2924
        %v2937 = vpack.c.b16 %v2927, %v2926
        %v2938 = vpack.c.b16 %v2929, %v2928
        %v2939 = vpack.c.b16 %v2931, %v2930
        %2948 = vmatprep.subr.bf16.mxu0 0
        %2949 = vmatpush1.bf16.xpose.msra.mxu0 %v2932
        %2950 = vmatprep.subr.bf16.mxu0 0
        %2951 = vmatpush1.bf16.xpose.msra.mxu0 %v2933
        %2952 = vmatprep.subr.bf16.mxu0 0
        %2953 = vmatpush1.bf16.xpose.msra.mxu0 %v2934
        %2954 = vmatprep.subr.bf16.mxu0 0
        %2955 = vmatpush1.bf16.xpose.msra.mxu0 %v2935
        %2956 = vmatprep.subr.bf16.mxu0 0
        %2957 = vmatpush1.bf16.xpose.msra.mxu0 %v2936
        %2958 = vmatprep.subr.bf16.mxu0 0
        %2959 = vmatpush1.bf16.xpose.msra.mxu0 %v2937
        %2960 = vmatprep.subr.bf16.mxu0 0
        %2961 = vmatpush1.bf16.xpose.msra.mxu0 %v2938
        %2962 = vmatprep.subr.bf16.mxu0 0
        %2963 = vmatpush1.bf16.xpose.msra.mxu0 %v2939
        %2964 = vmatprep.subr.bf16.mxu0 0
        %2965 = vmatpush1.bf16.xpose.msra.mxu0 0
        %2966 = vmatprep.subr.bf16.mxu0 0
        %2967 = vmatpush1.bf16.xpose.msra.mxu0 0
        %2968 = vmatprep.subr.bf16.mxu0 0
        %2969 = vmatpush1.bf16.xpose.msra.mxu0 0
        %2970 = vmatprep.subr.bf16.mxu0 0
        %2971 = vmatpush1.bf16.xpose.msra.mxu0 0
        %2972 = vmatprep.subr.bf16.mxu0 0
        %2973 = vmatpush1.bf16.xpose.msra.mxu0 0
        %2974 = vmatprep.subr.bf16.mxu0 0
        %2975 = vmatpush1.bf16.xpose.msra.mxu0 0
        %2976 = vmatprep.subr.bf16.mxu0 0
        %2977 = vmatpush1.bf16.xpose.msra.mxu0 0
        %2978 = vmatprep.subr.bf16.mxu0 0
        %2979 = vmatpush1.bf16.xpose.msra.mxu0 0
        %2980 = vmatprep.mubr.bf16.mxu0 0
        %2981 = vmatmul.mubr.bf16.gmra.mrb[0].mxu0 %v1514
        %v2982 = vpop.f32.mrb[0].mxu0
        %v2983 = vadd.f32 %v2346, %v2982
        %v2984 = vpop.f32.mrb[0].mxu0
        %v2985 = vpop.f32.mrb[0].mxu0
        %v2986 = vpop.f32.mrb[0].mxu0
        %2987 = vdwg.mxu0
        %v3004 = vunpack.c.l.b16 %v1652
        %v3005 = vunpack.c.l.b16 %v1653
        %v3006 = vunpack.c.l.b16 %v1654
        %v3007 = vunpack.c.l.b16 %v1655
        %v3008 = vunpack.c.l.b16 %v1656
        %v3009 = vunpack.c.l.b16 %v1657
        %v3010 = vunpack.c.l.b16 %v1658
        %v3011 = vunpack.c.l.b16 %v1659
        %v3012 = vunpack.c.l.b16 %v1660
        %v3013 = vunpack.c.l.b16 %v1661
        %v3014 = vunpack.c.l.b16 %v1662
        %v3015 = vunpack.c.l.b16 %v1663
        %v3016 = vunpack.c.l.b16 %v1664
        %v3017 = vunpack.c.l.b16 %v1665
        %v3018 = vunpack.c.l.b16 %v1666
        %v3019 = vunpack.c.l.b16 %v1667
        %v3020 = vpack.c.b16 %v3005, %v3004
        %v3021 = vpack.c.b16 %v3007, %v3006
        %v3022 = vpack.c.b16 %v3009, %v3008
        %v3023 = vpack.c.b16 %v3011, %v3010
        %v3024 = vpack.c.b16 %v3013, %v3012
        %v3025 = vpack.c.b16 %v3015, %v3014
        %v3026 = vpack.c.b16 %v3017, %v3016
        %v3027 = vpack.c.b16 %v3019, %v3018
        %3036 = vmatprep.subr.bf16.mxu0 0
        %3037 = vmatpush1.bf16.xpose.msra.mxu0 %v3020
        %3038 = vmatprep.subr.bf16.mxu0 0
        %3039 = vmatpush1.bf16.xpose.msra.mxu0 %v3021
        %3040 = vmatprep.subr.bf16.mxu0 0
        %3041 = vmatpush1.bf16.xpose.msra.mxu0 %v3022
        %3042 = vmatprep.subr.bf16.mxu0 0
        %3043 = vmatpush1.bf16.xpose.msra.mxu0 %v3023
        %3044 = vmatprep.subr.bf16.mxu0 0
        %3045 = vmatpush1.bf16.xpose.msra.mxu0 %v3024
        %3046 = vmatprep.subr.bf16.mxu0 0
        %3047 = vmatpush1.bf16.xpose.msra.mxu0 %v3025
        %3048 = vmatprep.subr.bf16.mxu0 0
        %3049 = vmatpush1.bf16.xpose.msra.mxu0 %v3026
        %3050 = vmatprep.subr.bf16.mxu0 0
        %3051 = vmatpush1.bf16.xpose.msra.mxu0 %v3027
        %3052 = vmatprep.subr.bf16.mxu0 0
        %3053 = vmatpush1.bf16.xpose.msra.mxu0 0
        %3054 = vmatprep.subr.bf16.mxu0 0
        %3055 = vmatpush1.bf16.xpose.msra.mxu0 0
        %3056 = vmatprep.subr.bf16.mxu0 0
        %3057 = vmatpush1.bf16.xpose.msra.mxu0 0
        %3058 = vmatprep.subr.bf16.mxu0 0
        %3059 = vmatpush1.bf16.xpose.msra.mxu0 0
        %3060 = vmatprep.subr.bf16.mxu0 0
        %3061 = vmatpush1.bf16.xpose.msra.mxu0 0
        %3062 = vmatprep.subr.bf16.mxu0 0
        %3063 = vmatpush1.bf16.xpose.msra.mxu0 0
        %3064 = vmatprep.subr.bf16.mxu0 0
        %3065 = vmatpush1.bf16.xpose.msra.mxu0 0
        %3066 = vmatprep.subr.bf16.mxu0 0
        %3067 = vmatpush1.bf16.xpose.msra.mxu0 0
        %3068 = vmatprep.mubr.bf16.mxu0 0
        %3069 = vmatmul.mubr.bf16.gmra.mrb[0].mxu0 %v1515
        %v3070 = vpop.f32.mrb[0].mxu0
        %v3071 = vadd.f32 %v2347, %v3070
        %v3072 = vpop.f32.mrb[0].mxu0
        %v3073 = vpop.f32.mrb[0].mxu0
        %v3074 = vpop.f32.mrb[0].mxu0
        %3075 = vdwg.mxu0
        %v3092 = vunpack.c.l.b16 %v1668
        %v3093 = vunpack.c.l.b16 %v1669
        %v3094 = vunpack.c.l.b16 %v1670
        %v3095 = vunpack.c.l.b16 %v1671
        %v3096 = vunpack.c.l.b16 %v1672
        %v3097 = vunpack.c.l.b16 %v1673
        %v3098 = vunpack.c.l.b16 %v1674
        %v3099 = vunpack.c.l.b16 %v1675
        %v3100 = vunpack.c.l.b16 %v1676
        %v3101 = vunpack.c.l.b16 %v1677
        %v3102 = vunpack.c.l.b16 %v1678
        %v3103 = vunpack.c.l.b16 %v1679
        %v3104 = vunpack.c.l.b16 %v1680
        %v3105 = vunpack.c.l.b16 %v1681
        %v3106 = vunpack.c.l.b16 %v1682
        %v3107 = vunpack.c.l.b16 %v1683
        %v3108 = vpack.c.b16 %v3093, %v3092
        %v3109 = vpack.c.b16 %v3095, %v3094
        %v3110 = vpack.c.b16 %v3097, %v3096
        %v3111 = vpack.c.b16 %v3099, %v3098
        %v3112 = vpack.c.b16 %v3101, %v3100
        %v3113 = vpack.c.b16 %v3103, %v3102
        %v3114 = vpack.c.b16 %v3105, %v3104
        %v3115 = vpack.c.b16 %v3107, %v3106
        %3124 = vmatprep.subr.bf16.mxu0 0
        %3125 = vmatpush1.bf16.xpose.msra.mxu0 %v3108
        %3126 = vmatprep.subr.bf16.mxu0 0
        %3127 = vmatpush1.bf16.xpose.msra.mxu0 %v3109
        %3128 = vmatprep.subr.bf16.mxu0 0
        %3129 = vmatpush1.bf16.xpose.msra.mxu0 %v3110
        %3130 = vmatprep.subr.bf16.mxu0 0
        %3131 = vmatpush1.bf16.xpose.msra.mxu0 %v3111
        %3132 = vmatprep.subr.bf16.mxu0 0
        %3133 = vmatpush1.bf16.xpose.msra.mxu0 %v3112
        %3134 = vmatprep.subr.bf16.mxu0 0
        %3135 = vmatpush1.bf16.xpose.msra.mxu0 %v3113
        %3136 = vmatprep.subr.bf16.mxu0 0
        %3137 = vmatpush1.bf16.xpose.msra.mxu0 %v3114
        %3138 = vmatprep.subr.bf16.mxu0 0
        %3139 = vmatpush1.bf16.xpose.msra.mxu0 %v3115
        %3140 = vmatprep.subr.bf16.mxu0 0
        %3141 = vmatpush1.bf16.xpose.msra.mxu0 0
        %3142 = vmatprep.subr.bf16.mxu0 0
        %3143 = vmatpush1.bf16.xpose.msra.mxu0 0
        %3144 = vmatprep.subr.bf16.mxu0 0
        %3145 = vmatpush1.bf16.xpose.msra.mxu0 0
        %3146 = vmatprep.subr.bf16.mxu0 0
        %3147 = vmatpush1.bf16.xpose.msra.mxu0 0
        %3148 = vmatprep.subr.bf16.mxu0 0
        %3149 = vmatpush1.bf16.xpose.msra.mxu0 0
        %3150 = vmatprep.subr.bf16.mxu0 0
        %3151 = vmatpush1.bf16.xpose.msra.mxu0 0
        %3152 = vmatprep.subr.bf16.mxu0 0
        %3153 = vmatpush1.bf16.xpose.msra.mxu0 0
        %3154 = vmatprep.subr.bf16.mxu0 0
        %3155 = vmatpush1.bf16.xpose.msra.mxu0 0
        %3156 = vmatprep.mubr.bf16.mxu0 0
        %3157 = vmatmul.mubr.bf16.gmra.mrb[0].mxu0 %v1516
        %v3158 = vpop.f32.mrb[0].mxu0
        %v3159 = vadd.f32 %v2348, %v3158
        %v3160 = vpop.f32.mrb[0].mxu0
        %v3161 = vpop.f32.mrb[0].mxu0
        %v3162 = vpop.f32.mrb[0].mxu0
        %3163 = vdwg.mxu0
        %v3180 = vunpack.c.l.b16 %v1684
        %v3181 = vunpack.c.l.b16 %v1685
        %v3182 = vunpack.c.l.b16 %v1686
        %v3183 = vunpack.c.l.b16 %v1687
        %v3184 = vunpack.c.l.b16 %v1688
        %v3185 = vunpack.c.l.b16 %v1689
        %v3186 = vunpack.c.l.b16 %v1690
        %v3187 = vunpack.c.l.b16 %v1691
        %v3188 = vunpack.c.l.b16 %v1692
        %v3189 = vunpack.c.l.b16 %v1693
        %v3190 = vunpack.c.l.b16 %v1694
        %v3191 = vunpack.c.l.b16 %v1695
        %v3192 = vunpack.c.l.b16 %v1696
        %v3193 = vunpack.c.l.b16 %v1697
        %v3194 = vunpack.c.l.b16 %v1698
        %v3195 = vunpack.c.l.b16 %v1699
        %v3196 = vpack.c.b16 %v3181, %v3180
        %v3197 = vpack.c.b16 %v3183, %v3182
        %v3198 = vpack.c.b16 %v3185, %v3184
        %v3199 = vpack.c.b16 %v3187, %v3186
        %v3200 = vpack.c.b16 %v3189, %v3188
        %v3201 = vpack.c.b16 %v3191, %v3190
        %v3202 = vpack.c.b16 %v3193, %v3192
        %v3203 = vpack.c.b16 %v3195, %v3194
        %3212 = vmatprep.subr.bf16.mxu0 0
        %3213 = vmatpush1.bf16.xpose.msra.mxu0 %v3196
        %3214 = vmatprep.subr.bf16.mxu0 0
        %3215 = vmatpush1.bf16.xpose.msra.mxu0 %v3197
        %3216 = vmatprep.subr.bf16.mxu0 0
        %3217 = vmatpush1.bf16.xpose.msra.mxu0 %v3198
        %3218 = vmatprep.subr.bf16.mxu0 0
        %3219 = vmatpush1.bf16.xpose.msra.mxu0 %v3199
        %3220 = vmatprep.subr.bf16.mxu0 0
        %3221 = vmatpush1.bf16.xpose.msra.mxu0 %v3200
        %3222 = vmatprep.subr.bf16.mxu0 0
        %3223 = vmatpush1.bf16.xpose.msra.mxu0 %v3201
        %3224 = vmatprep.subr.bf16.mxu0 0
        %3225 = vmatpush1.bf16.xpose.msra.mxu0 %v3202
        %3226 = vmatprep.subr.bf16.mxu0 0
        %3227 = vmatpush1.bf16.xpose.msra.mxu0 %v3203
        %3228 = vmatprep.subr.bf16.mxu0 0
        %3229 = vmatpush1.bf16.xpose.msra.mxu0 0
        %3230 = vmatprep.subr.bf16.mxu0 0
        %3231 = vmatpush1.bf16.xpose.msra.mxu0 0
        %3232 = vmatprep.subr.bf16.mxu0 0
        %3233 = vmatpush1.bf16.xpose.msra.mxu0 0
        %3234 = vmatprep.subr.bf16.mxu0 0
        %3235 = vmatpush1.bf16.xpose.msra.mxu0 0
        %3236 = vmatprep.subr.bf16.mxu0 0
        %3237 = vmatpush1.bf16.xpose.msra.mxu0 0
        %3238 = vmatprep.subr.bf16.mxu0 0
        %3239 = vmatpush1.bf16.xpose.msra.mxu0 0
        %3240 = vmatprep.subr.bf16.mxu0 0
        %3241 = vmatpush1.bf16.xpose.msra.mxu0 0
        %3242 = vmatprep.subr.bf16.mxu0 0
        %3243 = vmatpush1.bf16.xpose.msra.mxu0 0
        %3244 = vmatprep.mubr.bf16.mxu0 0
        %3245 = vmatmul.mubr.bf16.gmra.mrb[0].mxu0 %v1517
        %v3246 = vpop.f32.mrb[0].mxu0
        %v3247 = vadd.f32 %v2349, %v3246
        %v3248 = vpop.f32.mrb[0].mxu0
        %v3249 = vpop.f32.mrb[0].mxu0
        %v3250 = vpop.f32.mrb[0].mxu0
        %3251 = vdwg.mxu0
        %v3268 = vunpack.c.l.b16 %v1700
        %v3269 = vunpack.c.l.b16 %v1701
        %v3270 = vunpack.c.l.b16 %v1702
        %v3271 = vunpack.c.l.b16 %v1703
        %v3272 = vunpack.c.l.b16 %v1704
        %v3273 = vunpack.c.l.b16 %v1705
        %v3274 = vunpack.c.l.b16 %v1706
        %v3275 = vunpack.c.l.b16 %v1707
        %v3276 = vunpack.c.l.b16 %v1708
        %v3277 = vunpack.c.l.b16 %v1709
        %v3278 = vunpack.c.l.b16 %v1710
        %v3279 = vunpack.c.l.b16 %v1711
        %v3280 = vunpack.c.l.b16 %v1712
        %v3281 = vunpack.c.l.b16 %v1713
        %v3282 = vunpack.c.l.b16 %v1714
        %v3283 = vunpack.c.l.b16 %v1715
        %v3284 = vpack.c.b16 %v3269, %v3268
        %v3285 = vpack.c.b16 %v3271, %v3270
        %v3286 = vpack.c.b16 %v3273, %v3272
        %v3287 = vpack.c.b16 %v3275, %v3274
        %v3288 = vpack.c.b16 %v3277, %v3276
        %v3289 = vpack.c.b16 %v3279, %v3278
        %v3290 = vpack.c.b16 %v3281, %v3280
        %v3291 = vpack.c.b16 %v3283, %v3282
        %3300 = vmatprep.subr.bf16.mxu0 0
        %3301 = vmatpush1.bf16.xpose.msra.mxu0 %v3284
        %3302 = vmatprep.subr.bf16.mxu0 0
        %3303 = vmatpush1.bf16.xpose.msra.mxu0 %v3285
        %3304 = vmatprep.subr.bf16.mxu0 0
        %3305 = vmatpush1.bf16.xpose.msra.mxu0 %v3286
        %3306 = vmatprep.subr.bf16.mxu0 0
        %3307 = vmatpush1.bf16.xpose.msra.mxu0 %v3287
        %3308 = vmatprep.subr.bf16.mxu0 0
        %3309 = vmatpush1.bf16.xpose.msra.mxu0 %v3288
        %3310 = vmatprep.subr.bf16.mxu0 0
        %3311 = vmatpush1.bf16.xpose.msra.mxu0 %v3289
        %3312 = vmatprep.subr.bf16.mxu0 0
        %3313 = vmatpush1.bf16.xpose.msra.mxu0 %v3290
        %3314 = vmatprep.subr.bf16.mxu0 0
        %3315 = vmatpush1.bf16.xpose.msra.mxu0 %v3291
        %3316 = vmatprep.subr.bf16.mxu0 0
        %3317 = vmatpush1.bf16.xpose.msra.mxu0 0
        %3318 = vmatprep.subr.bf16.mxu0 0
        %3319 = vmatpush1.bf16.xpose.msra.mxu0 0
        %3320 = vmatprep.subr.bf16.mxu0 0
        %3321 = vmatpush1.bf16.xpose.msra.mxu0 0
        %3322 = vmatprep.subr.bf16.mxu0 0
        %3323 = vmatpush1.bf16.xpose.msra.mxu0 0
        %3324 = vmatprep.subr.bf16.mxu0 0
        %3325 = vmatpush1.bf16.xpose.msra.mxu0 0
        %3326 = vmatprep.subr.bf16.mxu0 0
        %3327 = vmatpush1.bf16.xpose.msra.mxu0 0
        %3328 = vmatprep.subr.bf16.mxu0 0
        %3329 = vmatpush1.bf16.xpose.msra.mxu0 0
        %3330 = vmatprep.subr.bf16.mxu0 0
        %3331 = vmatpush1.bf16.xpose.msra.mxu0 0
        %3332 = vmatprep.mubr.bf16.mxu0 0
        %3333 = vmatmul.mubr.bf16.gmra.mrb[0].mxu0 %v1518
        %v3334 = vpop.f32.mrb[0].mxu0
        %v3335 = vadd.f32 %v2350, %v3334
        %v3336 = vpop.f32.mrb[0].mxu0
        %v3337 = vpop.f32.mrb[0].mxu0
        %v3338 = vpop.f32.mrb[0].mxu0
        %3339 = vdwg.mxu0
        %v3356 = vunpack.c.l.b16 %v1716
        %v3357 = vunpack.c.l.b16 %v1717
        %v3358 = vunpack.c.l.b16 %v1718
        %v3359 = vunpack.c.l.b16 %v1719
        %v3360 = vunpack.c.l.b16 %v1720
        %v3361 = vunpack.c.l.b16 %v1721
        %v3362 = vunpack.c.l.b16 %v1722
        %v3363 = vunpack.c.l.b16 %v1723
        %v3364 = vunpack.c.l.b16 %v1724
        %v3365 = vunpack.c.l.b16 %v1725
        %v3366 = vunpack.c.l.b16 %v1726
        %v3367 = vunpack.c.l.b16 %v1727
        %v3368 = vunpack.c.l.b16 %v1728
        %v3369 = vunpack.c.l.b16 %v1729
        %v3370 = vunpack.c.l.b16 %v1730
        %v3371 = vunpack.c.l.b16 %v1731
        %v3372 = vpack.c.b16 %v3357, %v3356
        %v3373 = vpack.c.b16 %v3359, %v3358
        %v3374 = vpack.c.b16 %v3361, %v3360
        %v3375 = vpack.c.b16 %v3363, %v3362
        %v3376 = vpack.c.b16 %v3365, %v3364
        %v3377 = vpack.c.b16 %v3367, %v3366
        %v3378 = vpack.c.b16 %v3369, %v3368
        %v3379 = vpack.c.b16 %v3371, %v3370
        %3388 = vmatprep.subr.bf16.mxu0 0
        %3389 = vmatpush1.bf16.xpose.msra.mxu0 %v3372
        %3390 = vmatprep.subr.bf16.mxu0 0
        %3391 = vmatpush1.bf16.xpose.msra.mxu0 %v3373
        %3392 = vmatprep.subr.bf16.mxu0 0
        %3393 = vmatpush1.bf16.xpose.msra.mxu0 %v3374
        %3394 = vmatprep.subr.bf16.mxu0 0
        %3395 = vmatpush1.bf16.xpose.msra.mxu0 %v3375
        %3396 = vmatprep.subr.bf16.mxu0 0
        %3397 = vmatpush1.bf16.xpose.msra.mxu0 %v3376
        %3398 = vmatprep.subr.bf16.mxu0 0
        %3399 = vmatpush1.bf16.xpose.msra.mxu0 %v3377
        %3400 = vmatprep.subr.bf16.mxu0 0
        %3401 = vmatpush1.bf16.xpose.msra.mxu0 %v3378
        %3402 = vmatprep.subr.bf16.mxu0 0
        %3403 = vmatpush1.bf16.xpose.msra.mxu0 %v3379
        %3404 = vmatprep.subr.bf16.mxu0 0
        %3405 = vmatpush1.bf16.xpose.msra.mxu0 0
        %3406 = vmatprep.subr.bf16.mxu0 0
        %3407 = vmatpush1.bf16.xpose.msra.mxu0 0
        %3408 = vmatprep.subr.bf16.mxu0 0
        %3409 = vmatpush1.bf16.xpose.msra.mxu0 0
        %3410 = vmatprep.subr.bf16.mxu0 0
        %3411 = vmatpush1.bf16.xpose.msra.mxu0 0
        %3412 = vmatprep.subr.bf16.mxu0 0
        %3413 = vmatpush1.bf16.xpose.msra.mxu0 0
        %3414 = vmatprep.subr.bf16.mxu0 0
        %3415 = vmatpush1.bf16.xpose.msra.mxu0 0
        %3416 = vmatprep.subr.bf16.mxu0 0
        %3417 = vmatpush1.bf16.xpose.msra.mxu0 0
        %3418 = vmatprep.subr.bf16.mxu0 0
        %3419 = vmatpush1.bf16.xpose.msra.mxu0 0
        %3420 = vmatprep.mubr.bf16.mxu0 0
        %3421 = vmatmul.mubr.bf16.gmra.mrb[0].mxu0 %v1519
        %v3422 = vpop.f32.mrb[0].mxu0
        %v3423 = vadd.f32 %v2351, %v3422
        %v3424 = vpop.f32.mrb[0].mxu0
        %v3425 = vpop.f32.mrb[0].mxu0
        %v3426 = vpop.f32.mrb[0].mxu0
        %3427 = vdwg.mxu0
        %v3444 = vunpack.c.l.b16 %v1732
        %v3445 = vunpack.c.l.b16 %v1733
        %v3446 = vunpack.c.l.b16 %v1734
        %v3447 = vunpack.c.l.b16 %v1735
        %v3448 = vunpack.c.l.b16 %v1736
        %v3449 = vunpack.c.l.b16 %v1737
        %v3450 = vunpack.c.l.b16 %v1738
        %v3451 = vunpack.c.l.b16 %v1739
        %v3452 = vunpack.c.l.b16 %v1740
        %v3453 = vunpack.c.l.b16 %v1741
        %v3454 = vunpack.c.l.b16 %v1742
        %v3455 = vunpack.c.l.b16 %v1743
        %v3456 = vunpack.c.l.b16 %v1744
        %v3457 = vunpack.c.l.b16 %v1745
        %v3458 = vunpack.c.l.b16 %v1746
        %v3459 = vunpack.c.l.b16 %v1747
        %v3460 = vpack.c.b16 %v3445, %v3444
        %v3461 = vpack.c.b16 %v3447, %v3446
        %v3462 = vpack.c.b16 %v3449, %v3448
        %v3463 = vpack.c.b16 %v3451, %v3450
        %v3464 = vpack.c.b16 %v3453, %v3452
        %v3465 = vpack.c.b16 %v3455, %v3454
        %v3466 = vpack.c.b16 %v3457, %v3456
        %v3467 = vpack.c.b16 %v3459, %v3458
        %3476 = vmatprep.subr.bf16.mxu0 0
        %3477 = vmatpush1.bf16.xpose.msra.mxu0 %v3460
        %3478 = vmatprep.subr.bf16.mxu0 0
        %3479 = vmatpush1.bf16.xpose.msra.mxu0 %v3461
        %3480 = vmatprep.subr.bf16.mxu0 0
        %3481 = vmatpush1.bf16.xpose.msra.mxu0 %v3462
        %3482 = vmatprep.subr.bf16.mxu0 0
        %3483 = vmatpush1.bf16.xpose.msra.mxu0 %v3463
        %3484 = vmatprep.subr.bf16.mxu0 0
        %3485 = vmatpush1.bf16.xpose.msra.mxu0 %v3464
        %3486 = vmatprep.subr.bf16.mxu0 0
        %3487 = vmatpush1.bf16.xpose.msra.mxu0 %v3465
        %3488 = vmatprep.subr.bf16.mxu0 0
        %3489 = vmatpush1.bf16.xpose.msra.mxu0 %v3466
        %3490 = vmatprep.subr.bf16.mxu0 0
        %3491 = vmatpush1.bf16.xpose.msra.mxu0 %v3467
        %3492 = vmatprep.subr.bf16.mxu0 0
        %3493 = vmatpush1.bf16.xpose.msra.mxu0 0
        %3494 = vmatprep.subr.bf16.mxu0 0
        %3495 = vmatpush1.bf16.xpose.msra.mxu0 0
        %3496 = vmatprep.subr.bf16.mxu0 0
        %3497 = vmatpush1.bf16.xpose.msra.mxu0 0
        %3498 = vmatprep.subr.bf16.mxu0 0
        %3499 = vmatpush1.bf16.xpose.msra.mxu0 0
        %3500 = vmatprep.subr.bf16.mxu0 0
        %3501 = vmatpush1.bf16.xpose.msra.mxu0 0
        %3502 = vmatprep.subr.bf16.mxu0 0
        %3503 = vmatpush1.bf16.xpose.msra.mxu0 0
        %3504 = vmatprep.subr.bf16.mxu0 0
        %3505 = vmatpush1.bf16.xpose.msra.mxu0 0
        %3506 = vmatprep.subr.bf16.mxu0 0
        %3507 = vmatpush1.bf16.xpose.msra.mxu0 0
        %3508 = vmatprep.mubr.bf16.mxu0 0
        %3509 = vmatmul.mubr.bf16.gmra.mrb[0].mxu0 %v1520
        %v3510 = vpop.f32.mrb[0].mxu0
        %v3511 = vadd.f32 %v2352, %v3510
        %v3512 = vpop.f32.mrb[0].mxu0
        %v3513 = vpop.f32.mrb[0].mxu0
        %v3514 = vpop.f32.mrb[0].mxu0
        %3515 = vdwg.mxu0
        %v3532 = vunpack.c.l.b16 %v1748
        %v3533 = vunpack.c.l.b16 %v1749
        %v3534 = vunpack.c.l.b16 %v1750
        %v3535 = vunpack.c.l.b16 %v1751
        %v3536 = vunpack.c.l.b16 %v1752
        %v3537 = vunpack.c.l.b16 %v1753
        %v3538 = vunpack.c.l.b16 %v1754
        %v3539 = vunpack.c.l.b16 %v1755
        %v3540 = vunpack.c.l.b16 %v1756
        %v3541 = vunpack.c.l.b16 %v1757
        %v3542 = vunpack.c.l.b16 %v1758
        %v3543 = vunpack.c.l.b16 %v1759
        %v3544 = vunpack.c.l.b16 %v1760
        %v3545 = vunpack.c.l.b16 %v1761
        %v3546 = vunpack.c.l.b16 %v1762
        %v3547 = vunpack.c.l.b16 %v1763
        %v3548 = vpack.c.b16 %v3533, %v3532
        %v3549 = vpack.c.b16 %v3535, %v3534
        %v3550 = vpack.c.b16 %v3537, %v3536
        %v3551 = vpack.c.b16 %v3539, %v3538
        %v3552 = vpack.c.b16 %v3541, %v3540
        %v3553 = vpack.c.b16 %v3543, %v3542
        %v3554 = vpack.c.b16 %v3545, %v3544
        %v3555 = vpack.c.b16 %v3547, %v3546
        %3564 = vmatprep.subr.bf16.mxu0 0
        %3565 = vmatpush1.bf16.xpose.msra.mxu0 %v3548
        %3566 = vmatprep.subr.bf16.mxu0 0
        %3567 = vmatpush1.bf16.xpose.msra.mxu0 %v3549
        %3568 = vmatprep.subr.bf16.mxu0 0
        %3569 = vmatpush1.bf16.xpose.msra.mxu0 %v3550
        %3570 = vmatprep.subr.bf16.mxu0 0
        %3571 = vmatpush1.bf16.xpose.msra.mxu0 %v3551
        %3572 = vmatprep.subr.bf16.mxu0 0
        %3573 = vmatpush1.bf16.xpose.msra.mxu0 %v3552
        %3574 = vmatprep.subr.bf16.mxu0 0
        %3575 = vmatpush1.bf16.xpose.msra.mxu0 %v3553
        %3576 = vmatprep.subr.bf16.mxu0 0
        %3577 = vmatpush1.bf16.xpose.msra.mxu0 %v3554
        %3578 = vmatprep.subr.bf16.mxu0 0
        %3579 = vmatpush1.bf16.xpose.msra.mxu0 %v3555
        %3580 = vmatprep.subr.bf16.mxu0 0
        %3581 = vmatpush1.bf16.xpose.msra.mxu0 0
        %3582 = vmatprep.subr.bf16.mxu0 0
        %3583 = vmatpush1.bf16.xpose.msra.mxu0 0
        %3584 = vmatprep.subr.bf16.mxu0 0
        %3585 = vmatpush1.bf16.xpose.msra.mxu0 0
        %3586 = vmatprep.subr.bf16.mxu0 0
        %3587 = vmatpush1.bf16.xpose.msra.mxu0 0
        %3588 = vmatprep.subr.bf16.mxu0 0
        %3589 = vmatpush1.bf16.xpose.msra.mxu0 0
        %3590 = vmatprep.subr.bf16.mxu0 0
        %3591 = vmatpush1.bf16.xpose.msra.mxu0 0
        %3592 = vmatprep.subr.bf16.mxu0 0
        %3593 = vmatpush1.bf16.xpose.msra.mxu0 0
        %3594 = vmatprep.subr.bf16.mxu0 0
        %3595 = vmatpush1.bf16.xpose.msra.mxu0 0
        %3596 = vmatprep.mubr.bf16.mxu0 0
        %3597 = vmatmul.mubr.bf16.gmra.mrb[0].mxu0 %v1521
        %v3598 = vpop.f32.mrb[0].mxu0
        %v3599 = vadd.f32 %v2353, %v3598
        %v3600 = vpop.f32.mrb[0].mxu0
        %v3601 = vpop.f32.mrb[0].mxu0
        %v3602 = vpop.f32.mrb[0].mxu0
        %3603 = vdwg.mxu0
        %v3620 = vunpack.c.l.b16 %v1764
        %v3621 = vunpack.c.l.b16 %v1765
        %v3622 = vunpack.c.l.b16 %v1766
        %v3623 = vunpack.c.l.b16 %v1767
        %v3624 = vunpack.c.l.b16 %v1768
        %v3625 = vunpack.c.l.b16 %v1769
        %v3626 = vunpack.c.l.b16 %v1770
        %v3627 = vunpack.c.l.b16 %v1771
        %v3628 = vunpack.c.l.b16 %v1772
        %v3629 = vunpack.c.l.b16 %v1773
        %v3630 = vunpack.c.l.b16 %v1774
        %v3631 = vunpack.c.l.b16 %v1775
        %v3632 = vunpack.c.l.b16 %v1776
        %v3633 = vunpack.c.l.b16 %v1777
        %v3634 = vunpack.c.l.b16 %v1778
        %v3635 = vunpack.c.l.b16 %v1779
        %v3636 = vpack.c.b16 %v3621, %v3620
        %v3637 = vpack.c.b16 %v3623, %v3622
        %v3638 = vpack.c.b16 %v3625, %v3624
        %v3639 = vpack.c.b16 %v3627, %v3626
        %v3640 = vpack.c.b16 %v3629, %v3628
        %v3641 = vpack.c.b16 %v3631, %v3630
        %v3642 = vpack.c.b16 %v3633, %v3632
        %v3643 = vpack.c.b16 %v3635, %v3634
        %3652 = vmatprep.subr.bf16.mxu0 0
        %3653 = vmatpush1.bf16.xpose.msra.mxu0 %v3636
        %3654 = vmatprep.subr.bf16.mxu0 0
        %3655 = vmatpush1.bf16.xpose.msra.mxu0 %v3637
        %3656 = vmatprep.subr.bf16.mxu0 0
        %3657 = vmatpush1.bf16.xpose.msra.mxu0 %v3638
        %3658 = vmatprep.subr.bf16.mxu0 0
        %3659 = vmatpush1.bf16.xpose.msra.mxu0 %v3639
        %3660 = vmatprep.subr.bf16.mxu0 0
        %3661 = vmatpush1.bf16.xpose.msra.mxu0 %v3640
        %3662 = vmatprep.subr.bf16.mxu0 0
        %3663 = vmatpush1.bf16.xpose.msra.mxu0 %v3641
        %3664 = vmatprep.subr.bf16.mxu0 0
        %3665 = vmatpush1.bf16.xpose.msra.mxu0 %v3642
        %3666 = vmatprep.subr.bf16.mxu0 0
        %3667 = vmatpush1.bf16.xpose.msra.mxu0 %v3643
        %3668 = vmatprep.subr.bf16.mxu0 0
        %3669 = vmatpush1.bf16.xpose.msra.mxu0 0
        %3670 = vmatprep.subr.bf16.mxu0 0
        %3671 = vmatpush1.bf16.xpose.msra.mxu0 0
        %3672 = vmatprep.subr.bf16.mxu0 0
        %3673 = vmatpush1.bf16.xpose.msra.mxu0 0
        %3674 = vmatprep.subr.bf16.mxu0 0
        %3675 = vmatpush1.bf16.xpose.msra.mxu0 0
        %3676 = vmatprep.subr.bf16.mxu0 0
        %3677 = vmatpush1.bf16.xpose.msra.mxu0 0
        %3678 = vmatprep.subr.bf16.mxu0 0
        %3679 = vmatpush1.bf16.xpose.msra.mxu0 0
        %3680 = vmatprep.subr.bf16.mxu0 0
        %3681 = vmatpush1.bf16.xpose.msra.mxu0 0
        %3682 = vmatprep.subr.bf16.mxu0 0
        %3683 = vmatpush1.bf16.xpose.msra.mxu0 0
        %3684 = vmatprep.mubr.bf16.mxu0 0
        %3685 = vmatmul.mubr.bf16.gmra.mrb[0].mxu0 %v1522
        %v3686 = vpop.f32.mrb[0].mxu0
        %v3687 = vadd.f32 %v2354, %v3686
        %v3688 = vpop.f32.mrb[0].mxu0
        %v3689 = vpop.f32.mrb[0].mxu0
        %v3690 = vpop.f32.mrb[0].mxu0
        %3691 = vdwg.mxu0
        %v3708 = vunpack.c.l.b16 %v1780
        %v3709 = vunpack.c.l.b16 %v1781
        %v3710 = vunpack.c.l.b16 %v1782
        %v3711 = vunpack.c.l.b16 %v1783
        %v3712 = vunpack.c.l.b16 %v1784
        %v3713 = vunpack.c.l.b16 %v1785
        %v3714 = vunpack.c.l.b16 %v1786
        %v3715 = vunpack.c.l.b16 %v1787
        %v3716 = vunpack.c.l.b16 %v1788
        %v3717 = vunpack.c.l.b16 %v1789
        %v3718 = vunpack.c.l.b16 %v1790
        %v3719 = vunpack.c.l.b16 %v1791
        %v3720 = vunpack.c.l.b16 %v1792
        %v3721 = vunpack.c.l.b16 %v1793
        %v3722 = vunpack.c.l.b16 %v1794
        %v3723 = vunpack.c.l.b16 %v1795
        %v3724 = vpack.c.b16 %v3709, %v3708
        %v3725 = vpack.c.b16 %v3711, %v3710
        %v3726 = vpack.c.b16 %v3713, %v3712
        %v3727 = vpack.c.b16 %v3715, %v3714
        %v3728 = vpack.c.b16 %v3717, %v3716
        %v3729 = vpack.c.b16 %v3719, %v3718
        %v3730 = vpack.c.b16 %v3721, %v3720
        %v3731 = vpack.c.b16 %v3723, %v3722
        %3740 = vmatprep.subr.bf16.mxu0 0
        %3741 = vmatpush1.bf16.xpose.msra.mxu0 %v3724
        %3742 = vmatprep.subr.bf16.mxu0 0
        %3743 = vmatpush1.bf16.xpose.msra.mxu0 %v3725
        %3744 = vmatprep.subr.bf16.mxu0 0
        %3745 = vmatpush1.bf16.xpose.msra.mxu0 %v3726
        %3746 = vmatprep.subr.bf16.mxu0 0
        %3747 = vmatpush1.bf16.xpose.msra.mxu0 %v3727
        %3748 = vmatprep.subr.bf16.mxu0 0
        %3749 = vmatpush1.bf16.xpose.msra.mxu0 %v3728
        %3750 = vmatprep.subr.bf16.mxu0 0
        %3751 = vmatpush1.bf16.xpose.msra.mxu0 %v3729
        %3752 = vmatprep.subr.bf16.mxu0 0
        %3753 = vmatpush1.bf16.xpose.msra.mxu0 %v3730
        %3754 = vmatprep.subr.bf16.mxu0 0
        %3755 = vmatpush1.bf16.xpose.msra.mxu0 %v3731
        %3756 = vmatprep.subr.bf16.mxu0 0
        %3757 = vmatpush1.bf16.xpose.msra.mxu0 0
        %3758 = vmatprep.subr.bf16.mxu0 0
        %3759 = vmatpush1.bf16.xpose.msra.mxu0 0
        %3760 = vmatprep.subr.bf16.mxu0 0
        %3761 = vmatpush1.bf16.xpose.msra.mxu0 0
        %3762 = vmatprep.subr.bf16.mxu0 0
        %3763 = vmatpush1.bf16.xpose.msra.mxu0 0
        %3764 = vmatprep.subr.bf16.mxu0 0
        %3765 = vmatpush1.bf16.xpose.msra.mxu0 0
        %3766 = vmatprep.subr.bf16.mxu0 0
        %3767 = vmatpush1.bf16.xpose.msra.mxu0 0
        %3768 = vmatprep.subr.bf16.mxu0 0
        %3769 = vmatpush1.bf16.xpose.msra.mxu0 0
        %3770 = vmatprep.subr.bf16.mxu0 0
        %3771 = vmatpush1.bf16.xpose.msra.mxu0 0
        %3772 = vmatprep.mubr.bf16.mxu0 0
        %3773 = vmatmul.mubr.bf16.gmra.mrb[0].mxu0 %v1523
        %v3774 = vpop.f32.mrb[0].mxu0
        %v3775 = vadd.f32 %v2355, %v3774
        %v3776 = vpop.f32.mrb[0].mxu0
        %v3777 = vpop.f32.mrb[0].mxu0
        %v3778 = vpop.f32.mrb[0].mxu0
        %3779 = vdwg.mxu0
        %v3796 = vunpack.c.l.b16 %v1796
        %v3797 = vunpack.c.l.b16 %v1797
        %v3798 = vunpack.c.l.b16 %v1798
        %v3799 = vunpack.c.l.b16 %v1799
        %v3800 = vunpack.c.l.b16 %v1800
        %v3801 = vunpack.c.l.b16 %v1801
        %v3802 = vunpack.c.l.b16 %v1802
        %v3803 = vunpack.c.l.b16 %v1803
        %v3804 = vunpack.c.l.b16 %v1804
        %v3805 = vunpack.c.l.b16 %v1805
        %v3806 = vunpack.c.l.b16 %v1806
        %v3807 = vunpack.c.l.b16 %v1807
        %v3808 = vunpack.c.l.b16 %v1808
        %v3809 = vunpack.c.l.b16 %v1809
        %v3810 = vunpack.c.l.b16 %v1810
        %v3811 = vunpack.c.l.b16 %v1811
        %v3812 = vpack.c.b16 %v3797, %v3796
        %v3813 = vpack.c.b16 %v3799, %v3798
        %v3814 = vpack.c.b16 %v3801, %v3800
        %v3815 = vpack.c.b16 %v3803, %v3802
        %v3816 = vpack.c.b16 %v3805, %v3804
        %v3817 = vpack.c.b16 %v3807, %v3806
        %v3818 = vpack.c.b16 %v3809, %v3808
        %v3819 = vpack.c.b16 %v3811, %v3810
        %3828 = vmatprep.subr.bf16.mxu0 0
        %3829 = vmatpush1.bf16.xpose.msra.mxu0 %v3812
        %3830 = vmatprep.subr.bf16.mxu0 0
        %3831 = vmatpush1.bf16.xpose.msra.mxu0 %v3813
        %3832 = vmatprep.subr.bf16.mxu0 0
        %3833 = vmatpush1.bf16.xpose.msra.mxu0 %v3814
        %3834 = vmatprep.subr.bf16.mxu0 0
        %3835 = vmatpush1.bf16.xpose.msra.mxu0 %v3815
        %3836 = vmatprep.subr.bf16.mxu0 0
        %3837 = vmatpush1.bf16.xpose.msra.mxu0 %v3816
        %3838 = vmatprep.subr.bf16.mxu0 0
        %3839 = vmatpush1.bf16.xpose.msra.mxu0 %v3817
        %3840 = vmatprep.subr.bf16.mxu0 0
        %3841 = vmatpush1.bf16.xpose.msra.mxu0 %v3818
        %3842 = vmatprep.subr.bf16.mxu0 0
        %3843 = vmatpush1.bf16.xpose.msra.mxu0 %v3819
        %3844 = vmatprep.subr.bf16.mxu0 0
        %3845 = vmatpush1.bf16.xpose.msra.mxu0 0
        %3846 = vmatprep.subr.bf16.mxu0 0
        %3847 = vmatpush1.bf16.xpose.msra.mxu0 0
        %3848 = vmatprep.subr.bf16.mxu0 0
        %3849 = vmatpush1.bf16.xpose.msra.mxu0 0
        %3850 = vmatprep.subr.bf16.mxu0 0
        %3851 = vmatpush1.bf16.xpose.msra.mxu0 0
        %3852 = vmatprep.subr.bf16.mxu0 0
        %3853 = vmatpush1.bf16.xpose.msra.mxu0 0
        %3854 = vmatprep.subr.bf16.mxu0 0
        %3855 = vmatpush1.bf16.xpose.msra.mxu0 0
        %3856 = vmatprep.subr.bf16.mxu0 0
        %3857 = vmatpush1.bf16.xpose.msra.mxu0 0
        %3858 = vmatprep.subr.bf16.mxu0 0
        %3859 = vmatpush1.bf16.xpose.msra.mxu0 0
        %3860 = vmatprep.mubr.bf16.mxu0 0
        %3861 = vmatmul.mubr.bf16.gmra.mrb[0].mxu0 %v1524
        %v3862 = vpop.f32.mrb[0].mxu0
        %v3863 = vadd.f32 %v2356, %v3862
        %v3864 = vpop.f32.mrb[0].mxu0
        %v3865 = vpop.f32.mrb[0].mxu0
        %v3866 = vpop.f32.mrb[0].mxu0
        %3867 = vdwg.mxu0
        %v3884 = vunpack.c.l.b16 %v1812
        %v3885 = vunpack.c.l.b16 %v1813
        %v3886 = vunpack.c.l.b16 %v1814
        %v3887 = vunpack.c.l.b16 %v1815
        %v3888 = vunpack.c.l.b16 %v1816
        %v3889 = vunpack.c.l.b16 %v1817
        %v3890 = vunpack.c.l.b16 %v1818
        %v3891 = vunpack.c.l.b16 %v1819
        %v3892 = vunpack.c.l.b16 %v1820
        %v3893 = vunpack.c.l.b16 %v1821
        %v3894 = vunpack.c.l.b16 %v1822
        %v3895 = vunpack.c.l.b16 %v1823
        %v3896 = vunpack.c.l.b16 %v1824
        %v3897 = vunpack.c.l.b16 %v1825
        %v3898 = vunpack.c.l.b16 %v1826
        %v3899 = vunpack.c.l.b16 %v1827
        %v3900 = vpack.c.b16 %v3885, %v3884
        %v3901 = vpack.c.b16 %v3887, %v3886
        %v3902 = vpack.c.b16 %v3889, %v3888
        %v3903 = vpack.c.b16 %v3891, %v3890
        %v3904 = vpack.c.b16 %v3893, %v3892
        %v3905 = vpack.c.b16 %v3895, %v3894
        %v3906 = vpack.c.b16 %v3897, %v3896
        %v3907 = vpack.c.b16 %v3899, %v3898
        %3916 = vmatprep.subr.bf16.mxu0 0
        %3917 = vmatpush1.bf16.xpose.msra.mxu0 %v3900
        %3918 = vmatprep.subr.bf16.mxu0 0
        %3919 = vmatpush1.bf16.xpose.msra.mxu0 %v3901
        %3920 = vmatprep.subr.bf16.mxu0 0
        %3921 = vmatpush1.bf16.xpose.msra.mxu0 %v3902
        %3922 = vmatprep.subr.bf16.mxu0 0
        %3923 = vmatpush1.bf16.xpose.msra.mxu0 %v3903
        %3924 = vmatprep.subr.bf16.mxu0 0
        %3925 = vmatpush1.bf16.xpose.msra.mxu0 %v3904
        %3926 = vmatprep.subr.bf16.mxu0 0
        %3927 = vmatpush1.bf16.xpose.msra.mxu0 %v3905
        %3928 = vmatprep.subr.bf16.mxu0 0
        %3929 = vmatpush1.bf16.xpose.msra.mxu0 %v3906
        %3930 = vmatprep.subr.bf16.mxu0 0
        %3931 = vmatpush1.bf16.xpose.msra.mxu0 %v3907
        %3932 = vmatprep.subr.bf16.mxu0 0
        %3933 = vmatpush1.bf16.xpose.msra.mxu0 0
        %3934 = vmatprep.subr.bf16.mxu0 0
        %3935 = vmatpush1.bf16.xpose.msra.mxu0 0
        %3936 = vmatprep.subr.bf16.mxu0 0
        %3937 = vmatpush1.bf16.xpose.msra.mxu0 0
        %3938 = vmatprep.subr.bf16.mxu0 0
        %3939 = vmatpush1.bf16.xpose.msra.mxu0 0
        %3940 = vmatprep.subr.bf16.mxu0 0
        %3941 = vmatpush1.bf16.xpose.msra.mxu0 0
        %3942 = vmatprep.subr.bf16.mxu0 0
        %3943 = vmatpush1.bf16.xpose.msra.mxu0 0
        %3944 = vmatprep.subr.bf16.mxu0 0
        %3945 = vmatpush1.bf16.xpose.msra.mxu0 0
        %3946 = vmatprep.subr.bf16.mxu0 0
        %3947 = vmatpush1.bf16.xpose.msra.mxu0 0
        %3948 = vmatprep.mubr.bf16.mxu0 0
        %3949 = vmatmul.mubr.bf16.gmra.mrb[0].mxu0 %v1525
        %v3950 = vpop.f32.mrb[0].mxu0
        %v3951 = vadd.f32 %v2357, %v3950
        %v3952 = vpop.f32.mrb[0].mxu0
        %v3953 = vpop.f32.mrb[0].mxu0
        %v3954 = vpop.f32.mrb[0].mxu0
        %3955 = vdwg.mxu0
        %v3972 = vunpack.c.l.b16 %v1828
        %v3973 = vunpack.c.l.b16 %v1829
        %v3974 = vunpack.c.l.b16 %v1830
        %v3975 = vunpack.c.l.b16 %v1831
        %v3976 = vunpack.c.l.b16 %v1832
        %v3977 = vunpack.c.l.b16 %v1833
        %v3978 = vunpack.c.l.b16 %v1834
        %v3979 = vunpack.c.l.b16 %v1835
        %v3980 = vunpack.c.l.b16 %v1836
        %v3981 = vunpack.c.l.b16 %v1837
        %v3982 = vunpack.c.l.b16 %v1838
        %v3983 = vunpack.c.l.b16 %v1839
        %v3984 = vunpack.c.l.b16 %v1840
        %v3985 = vunpack.c.l.b16 %v1841
        %v3986 = vunpack.c.l.b16 %v1842
        %v3987 = vunpack.c.l.b16 %v1843
        %v3988 = vpack.c.b16 %v3973, %v3972
        %v3989 = vpack.c.b16 %v3975, %v3974
        %v3990 = vpack.c.b16 %v3977, %v3976
        %v3991 = vpack.c.b16 %v3979, %v3978
        %v3992 = vpack.c.b16 %v3981, %v3980
        %v3993 = vpack.c.b16 %v3983, %v3982
        %v3994 = vpack.c.b16 %v3985, %v3984
        %v3995 = vpack.c.b16 %v3987, %v3986
        %4004 = vmatprep.subr.bf16.mxu0 0
        %4005 = vmatpush1.bf16.xpose.msra.mxu0 %v3988
        %4006 = vmatprep.subr.bf16.mxu0 0
        %4007 = vmatpush1.bf16.xpose.msra.mxu0 %v3989
        %4008 = vmatprep.subr.bf16.mxu0 0
        %4009 = vmatpush1.bf16.xpose.msra.mxu0 %v3990
        %4010 = vmatprep.subr.bf16.mxu0 0
        %4011 = vmatpush1.bf16.xpose.msra.mxu0 %v3991
        %4012 = vmatprep.subr.bf16.mxu0 0
        %4013 = vmatpush1.bf16.xpose.msra.mxu0 %v3992
        %4014 = vmatprep.subr.bf16.mxu0 0
        %4015 = vmatpush1.bf16.xpose.msra.mxu0 %v3993
        %4016 = vmatprep.subr.bf16.mxu0 0
        %4017 = vmatpush1.bf16.xpose.msra.mxu0 %v3994
        %4018 = vmatprep.subr.bf16.mxu0 0
        %4019 = vmatpush1.bf16.xpose.msra.mxu0 %v3995
        %4020 = vmatprep.subr.bf16.mxu0 0
        %4021 = vmatpush1.bf16.xpose.msra.mxu0 0
        %4022 = vmatprep.subr.bf16.mxu0 0
        %4023 = vmatpush1.bf16.xpose.msra.mxu0 0
        %4024 = vmatprep.subr.bf16.mxu0 0
        %4025 = vmatpush1.bf16.xpose.msra.mxu0 0
        %4026 = vmatprep.subr.bf16.mxu0 0
        %4027 = vmatpush1.bf16.xpose.msra.mxu0 0
        %4028 = vmatprep.subr.bf16.mxu0 0
        %4029 = vmatpush1.bf16.xpose.msra.mxu0 0
        %4030 = vmatprep.subr.bf16.mxu0 0
        %4031 = vmatpush1.bf16.xpose.msra.mxu0 0
        %4032 = vmatprep.subr.bf16.mxu0 0
        %4033 = vmatpush1.bf16.xpose.msra.mxu0 0
        %4034 = vmatprep.subr.bf16.mxu0 0
        %4035 = vmatpush1.bf16.xpose.msra.mxu0 0
        %4036 = vmatprep.mubr.bf16.mxu0 0
        %4037 = vmatmul.mubr.bf16.gmra.mrb[0].mxu0 %v1526
        %v4038 = vpop.f32.mrb[0].mxu0
        %v4039 = vadd.f32 %v2358, %v4038
        %v4040 = vpop.f32.mrb[0].mxu0
        %v4041 = vpop.f32.mrb[0].mxu0
        %v4042 = vpop.f32.mrb[0].mxu0
        %4043 = vdwg.mxu0
        %v4060 = vunpack.c.l.b16 %v1844
        %v4061 = vunpack.c.l.b16 %v1845
        %v4062 = vunpack.c.l.b16 %v1846
        %v4063 = vunpack.c.l.b16 %v1847
        %v4064 = vunpack.c.l.b16 %v1848
        %v4065 = vunpack.c.l.b16 %v1849
        %v4066 = vunpack.c.l.b16 %v1850
        %v4067 = vunpack.c.l.b16 %v1851
        %v4068 = vunpack.c.l.b16 %v1852
        %v4069 = vunpack.c.l.b16 %v1853
        %v4070 = vunpack.c.l.b16 %v1854
        %v4071 = vunpack.c.l.b16 %v1855
        %v4072 = vunpack.c.l.b16 %v1856
        %v4073 = vunpack.c.l.b16 %v1857
        %v4074 = vunpack.c.l.b16 %v1858
        %v4075 = vunpack.c.l.b16 %v1859
        %v4076 = vpack.c.b16 %v4061, %v4060
        %v4077 = vpack.c.b16 %v4063, %v4062
        %v4078 = vpack.c.b16 %v4065, %v4064
        %v4079 = vpack.c.b16 %v4067, %v4066
        %v4080 = vpack.c.b16 %v4069, %v4068
        %v4081 = vpack.c.b16 %v4071, %v4070
        %v4082 = vpack.c.b16 %v4073, %v4072
        %v4083 = vpack.c.b16 %v4075, %v4074
        %4092 = vmatprep.subr.bf16.mxu0 0
        %4093 = vmatpush1.bf16.xpose.msra.mxu0 %v4076
        %4094 = vmatprep.subr.bf16.mxu0 0
        %4095 = vmatpush1.bf16.xpose.msra.mxu0 %v4077
        %4096 = vmatprep.subr.bf16.mxu0 0
        %4097 = vmatpush1.bf16.xpose.msra.mxu0 %v4078
        %4098 = vmatprep.subr.bf16.mxu0 0
        %4099 = vmatpush1.bf16.xpose.msra.mxu0 %v4079
        %4100 = vmatprep.subr.bf16.mxu0 0
        %4101 = vmatpush1.bf16.xpose.msra.mxu0 %v4080
        %4102 = vmatprep.subr.bf16.mxu0 0
        %4103 = vmatpush1.bf16.xpose.msra.mxu0 %v4081
        %4104 = vmatprep.subr.bf16.mxu0 0
        %4105 = vmatpush1.bf16.xpose.msra.mxu0 %v4082
        %4106 = vmatprep.subr.bf16.mxu0 0
        %4107 = vmatpush1.bf16.xpose.msra.mxu0 %v4083
        %4108 = vmatprep.subr.bf16.mxu0 0
        %4109 = vmatpush1.bf16.xpose.msra.mxu0 0
        %4110 = vmatprep.subr.bf16.mxu0 0
        %4111 = vmatpush1.bf16.xpose.msra.mxu0 0
        %4112 = vmatprep.subr.bf16.mxu0 0
        %4113 = vmatpush1.bf16.xpose.msra.mxu0 0
        %4114 = vmatprep.subr.bf16.mxu0 0
        %4115 = vmatpush1.bf16.xpose.msra.mxu0 0
        %4116 = vmatprep.subr.bf16.mxu0 0
        %4117 = vmatpush1.bf16.xpose.msra.mxu0 0
        %4118 = vmatprep.subr.bf16.mxu0 0
        %4119 = vmatpush1.bf16.xpose.msra.mxu0 0
        %4120 = vmatprep.subr.bf16.mxu0 0
        %4121 = vmatpush1.bf16.xpose.msra.mxu0 0
        %4122 = vmatprep.subr.bf16.mxu0 0
        %4123 = vmatpush1.bf16.xpose.msra.mxu0 0
        %4124 = vmatprep.mubr.bf16.mxu0 0
        %4125 = vmatmul.mubr.bf16.gmra.mrb[0].mxu0 %v1527
        %v4126 = vpop.f32.mrb[0].mxu0
        %v4127 = vadd.f32 %v2359, %v4126
        %v4128 = vpop.f32.mrb[0].mxu0
        %v4129 = vpop.f32.mrb[0].mxu0
        %v4130 = vpop.f32.mrb[0].mxu0
        %4131 = vdwg.mxu0
        %v4148 = vunpack.c.l.b16 %v1860
        %v4149 = vunpack.c.l.b16 %v1861
        %v4150 = vunpack.c.l.b16 %v1862
        %v4151 = vunpack.c.l.b16 %v1863
        %v4152 = vunpack.c.l.b16 %v1864
        %v4153 = vunpack.c.l.b16 %v1865
        %v4154 = vunpack.c.l.b16 %v1866
        %v4155 = vunpack.c.l.b16 %v1867
        %v4156 = vunpack.c.l.b16 %v1868
        %v4157 = vunpack.c.l.b16 %v1869
        %v4158 = vunpack.c.l.b16 %v1870
        %v4159 = vunpack.c.l.b16 %v1871
        %v4160 = vunpack.c.l.b16 %v1872
        %v4161 = vunpack.c.l.b16 %v1873
        %v4162 = vunpack.c.l.b16 %v1874
        %v4163 = vunpack.c.l.b16 %v1875
        %v4164 = vpack.c.b16 %v4149, %v4148
        %v4165 = vpack.c.b16 %v4151, %v4150
        %v4166 = vpack.c.b16 %v4153, %v4152
        %v4167 = vpack.c.b16 %v4155, %v4154
        %v4168 = vpack.c.b16 %v4157, %v4156
        %v4169 = vpack.c.b16 %v4159, %v4158
        %v4170 = vpack.c.b16 %v4161, %v4160
        %v4171 = vpack.c.b16 %v4163, %v4162
        %4180 = vmatprep.subr.bf16.mxu0 0
        %4181 = vmatpush1.bf16.xpose.msra.mxu0 %v4164
        %4182 = vmatprep.subr.bf16.mxu0 0
        %4183 = vmatpush1.bf16.xpose.msra.mxu0 %v4165
        %4184 = vmatprep.subr.bf16.mxu0 0
        %4185 = vmatpush1.bf16.xpose.msra.mxu0 %v4166
        %4186 = vmatprep.subr.bf16.mxu0 0
        %4187 = vmatpush1.bf16.xpose.msra.mxu0 %v4167
        %4188 = vmatprep.subr.bf16.mxu0 0
        %4189 = vmatpush1.bf16.xpose.msra.mxu0 %v4168
        %4190 = vmatprep.subr.bf16.mxu0 0
        %4191 = vmatpush1.bf16.xpose.msra.mxu0 %v4169
        %4192 = vmatprep.subr.bf16.mxu0 0
        %4193 = vmatpush1.bf16.xpose.msra.mxu0 %v4170
        %4194 = vmatprep.subr.bf16.mxu0 0
        %4195 = vmatpush1.bf16.xpose.msra.mxu0 %v4171
        %4196 = vmatprep.subr.bf16.mxu0 0
        %4197 = vmatpush1.bf16.xpose.msra.mxu0 0
        %4198 = vmatprep.subr.bf16.mxu0 0
        %4199 = vmatpush1.bf16.xpose.msra.mxu0 0
        %4200 = vmatprep.subr.bf16.mxu0 0
        %4201 = vmatpush1.bf16.xpose.msra.mxu0 0
        %4202 = vmatprep.subr.bf16.mxu0 0
        %4203 = vmatpush1.bf16.xpose.msra.mxu0 0
        %4204 = vmatprep.subr.bf16.mxu0 0
        %4205 = vmatpush1.bf16.xpose.msra.mxu0 0
        %4206 = vmatprep.subr.bf16.mxu0 0
        %4207 = vmatpush1.bf16.xpose.msra.mxu0 0
        %4208 = vmatprep.subr.bf16.mxu0 0
        %4209 = vmatpush1.bf16.xpose.msra.mxu0 0
        %4210 = vmatprep.subr.bf16.mxu0 0
        %4211 = vmatpush1.bf16.xpose.msra.mxu0 0
        %4212 = vmatprep.mubr.bf16.mxu0 0
        %4213 = vmatmul.mubr.bf16.gmra.mrb[0].mxu0 %v1528
        %v4214 = vpop.f32.mrb[0].mxu0
        %v4215 = vadd.f32 %v2360, %v4214
        %v4216 = vpop.f32.mrb[0].mxu0
        %v4217 = vpop.f32.mrb[0].mxu0
        %v4218 = vpop.f32.mrb[0].mxu0
        %4219 = vdwg.mxu0
        %v4236 = vunpack.c.l.b16 %v1876
        %v4237 = vunpack.c.l.b16 %v1877
        %v4238 = vunpack.c.l.b16 %v1878
        %v4239 = vunpack.c.l.b16 %v1879
        %v4240 = vunpack.c.l.b16 %v1880
        %v4241 = vunpack.c.l.b16 %v1881
        %v4242 = vunpack.c.l.b16 %v1882
        %v4243 = vunpack.c.l.b16 %v1883
        %v4244 = vunpack.c.l.b16 %v1884
        %v4245 = vunpack.c.l.b16 %v1885
        %v4246 = vunpack.c.l.b16 %v1886
        %v4247 = vunpack.c.l.b16 %v1887
        %v4248 = vunpack.c.l.b16 %v1888
        %v4249 = vunpack.c.l.b16 %v1889
        %v4250 = vunpack.c.l.b16 %v1890
        %v4251 = vunpack.c.l.b16 %v1891
        %v4252 = vpack.c.b16 %v4237, %v4236
        %v4253 = vpack.c.b16 %v4239, %v4238
        %v4254 = vpack.c.b16 %v4241, %v4240
        %v4255 = vpack.c.b16 %v4243, %v4242
        %v4256 = vpack.c.b16 %v4245, %v4244
        %v4257 = vpack.c.b16 %v4247, %v4246
        %v4258 = vpack.c.b16 %v4249, %v4248
        %v4259 = vpack.c.b16 %v4251, %v4250
        %4268 = vmatprep.subr.bf16.mxu0 0
        %4269 = vmatpush1.bf16.xpose.msra.mxu0 %v4252
        %4270 = vmatprep.subr.bf16.mxu0 0
        %4271 = vmatpush1.bf16.xpose.msra.mxu0 %v4253
        %4272 = vmatprep.subr.bf16.mxu0 0
        %4273 = vmatpush1.bf16.xpose.msra.mxu0 %v4254
        %4274 = vmatprep.subr.bf16.mxu0 0
        %4275 = vmatpush1.bf16.xpose.msra.mxu0 %v4255
        %4276 = vmatprep.subr.bf16.mxu0 0
        %4277 = vmatpush1.bf16.xpose.msra.mxu0 %v4256
        %4278 = vmatprep.subr.bf16.mxu0 0
        %4279 = vmatpush1.bf16.xpose.msra.mxu0 %v4257
        %4280 = vmatprep.subr.bf16.mxu0 0
        %4281 = vmatpush1.bf16.xpose.msra.mxu0 %v4258
        %4282 = vmatprep.subr.bf16.mxu0 0
        %4283 = vmatpush1.bf16.xpose.msra.mxu0 %v4259
        %4284 = vmatprep.subr.bf16.mxu0 0
        %4285 = vmatpush1.bf16.xpose.msra.mxu0 0
        %4286 = vmatprep.subr.bf16.mxu0 0
        %4287 = vmatpush1.bf16.xpose.msra.mxu0 0
        %4288 = vmatprep.subr.bf16.mxu0 0
        %4289 = vmatpush1.bf16.xpose.msra.mxu0 0
        %4290 = vmatprep.subr.bf16.mxu0 0
        %4291 = vmatpush1.bf16.xpose.msra.mxu0 0
        %4292 = vmatprep.subr.bf16.mxu0 0
        %4293 = vmatpush1.bf16.xpose.msra.mxu0 0
        %4294 = vmatprep.subr.bf16.mxu0 0
        %4295 = vmatpush1.bf16.xpose.msra.mxu0 0
        %4296 = vmatprep.subr.bf16.mxu0 0
        %4297 = vmatpush1.bf16.xpose.msra.mxu0 0
        %4298 = vmatprep.subr.bf16.mxu0 0
        %4299 = vmatpush1.bf16.xpose.msra.mxu0 0
        %4300 = vmatprep.mubr.bf16.mxu0 0
        %4301 = vmatmul.mubr.bf16.gmra.mrb[0].mxu0 %v1529
        %v4302 = vpop.f32.mrb[0].mxu0
        %v4303 = vadd.f32 %v2361, %v4302
        %v4304 = vpop.f32.mrb[0].mxu0
        %v4305 = vpop.f32.mrb[0].mxu0
        %v4306 = vpop.f32.mrb[0].mxu0
        %4307 = vdwg.mxu0
        %v4324 = vunpack.c.l.b16 %v1892
        %v4325 = vunpack.c.l.b16 %v1893
        %v4326 = vunpack.c.l.b16 %v1894
        %v4327 = vunpack.c.l.b16 %v1895
        %v4328 = vunpack.c.l.b16 %v1896
        %v4329 = vunpack.c.l.b16 %v1897
        %v4330 = vunpack.c.l.b16 %v1898
        %v4331 = vunpack.c.l.b16 %v1899
        %v4332 = vunpack.c.l.b16 %v1900
        %v4333 = vunpack.c.l.b16 %v1901
        %v4334 = vunpack.c.l.b16 %v1902
        %v4335 = vunpack.c.l.b16 %v1903
        %v4336 = vunpack.c.l.b16 %v1904
        %v4337 = vunpack.c.l.b16 %v1905
        %v4338 = vunpack.c.l.b16 %v1906
        %v4339 = vunpack.c.l.b16 %v1907
        %v4340 = vpack.c.b16 %v4325, %v4324
        %v4341 = vpack.c.b16 %v4327, %v4326
        %v4342 = vpack.c.b16 %v4329, %v4328
        %v4343 = vpack.c.b16 %v4331, %v4330
        %v4344 = vpack.c.b16 %v4333, %v4332
        %v4345 = vpack.c.b16 %v4335, %v4334
        %v4346 = vpack.c.b16 %v4337, %v4336
        %v4347 = vpack.c.b16 %v4339, %v4338
        %4356 = vmatprep.subr.bf16.mxu0 0
        %4357 = vmatpush1.bf16.xpose.msra.mxu0 %v4340
        %4358 = vmatprep.subr.bf16.mxu0 0
        %4359 = vmatpush1.bf16.xpose.msra.mxu0 %v4341
        %4360 = vmatprep.subr.bf16.mxu0 0
        %4361 = vmatpush1.bf16.xpose.msra.mxu0 %v4342
        %4362 = vmatprep.subr.bf16.mxu0 0
        %4363 = vmatpush1.bf16.xpose.msra.mxu0 %v4343
        %4364 = vmatprep.subr.bf16.mxu0 0
        %4365 = vmatpush1.bf16.xpose.msra.mxu0 %v4344
        %4366 = vmatprep.subr.bf16.mxu0 0
        %4367 = vmatpush1.bf16.xpose.msra.mxu0 %v4345
        %4368 = vmatprep.subr.bf16.mxu0 0
        %4369 = vmatpush1.bf16.xpose.msra.mxu0 %v4346
        %4370 = vmatprep.subr.bf16.mxu0 0
        %4371 = vmatpush1.bf16.xpose.msra.mxu0 %v4347
        %4372 = vmatprep.subr.bf16.mxu0 0
        %4373 = vmatpush1.bf16.xpose.msra.mxu0 0
        %4374 = vmatprep.subr.bf16.mxu0 0
        %4375 = vmatpush1.bf16.xpose.msra.mxu0 0
        %4376 = vmatprep.subr.bf16.mxu0 0
        %4377 = vmatpush1.bf16.xpose.msra.mxu0 0
        %4378 = vmatprep.subr.bf16.mxu0 0
        %4379 = vmatpush1.bf16.xpose.msra.mxu0 0
        %4380 = vmatprep.subr.bf16.mxu0 0
        %4381 = vmatpush1.bf16.xpose.msra.mxu0 0
        %4382 = vmatprep.subr.bf16.mxu0 0
        %4383 = vmatpush1.bf16.xpose.msra.mxu0 0
        %4384 = vmatprep.subr.bf16.mxu0 0
        %4385 = vmatpush1.bf16.xpose.msra.mxu0 0
        %4386 = vmatprep.subr.bf16.mxu0 0
        %4387 = vmatpush1.bf16.xpose.msra.mxu0 0
        %4388 = vmatprep.mubr.bf16.mxu0 0
        %4389 = vmatmul.mubr.bf16.gmra.mrb[0].mxu0 %v1530
        %v4390 = vpop.f32.mrb[0].mxu0
        %v4391 = vadd.f32 %v2362, %v4390
        %v4392 = vpop.f32.mrb[0].mxu0
        %v4393 = vpop.f32.mrb[0].mxu0
        %v4394 = vpop.f32.mrb[0].mxu0
        %4395 = vdwg.mxu0
        %v4412 = vunpack.c.l.b16 %v1908
        %v4413 = vunpack.c.l.b16 %v1909
        %v4414 = vunpack.c.l.b16 %v1910
        %v4415 = vunpack.c.l.b16 %v1911
        %v4416 = vunpack.c.l.b16 %v1912
        %v4417 = vunpack.c.l.b16 %v1913
        %v4418 = vunpack.c.l.b16 %v1914
        %v4419 = vunpack.c.l.b16 %v1915
        %v4420 = vunpack.c.l.b16 %v1916
        %v4421 = vunpack.c.l.b16 %v1917
        %v4422 = vunpack.c.l.b16 %v1918
        %v4423 = vunpack.c.l.b16 %v1919
        %v4424 = vunpack.c.l.b16 %v1920
        %v4425 = vunpack.c.l.b16 %v1921
        %v4426 = vunpack.c.l.b16 %v1922
        %v4427 = vunpack.c.l.b16 %v1923
        %v4428 = vpack.c.b16 %v4413, %v4412
        %v4429 = vpack.c.b16 %v4415, %v4414
        %v4430 = vpack.c.b16 %v4417, %v4416
        %v4431 = vpack.c.b16 %v4419, %v4418
        %v4432 = vpack.c.b16 %v4421, %v4420
        %v4433 = vpack.c.b16 %v4423, %v4422
        %v4434 = vpack.c.b16 %v4425, %v4424
        %v4435 = vpack.c.b16 %v4427, %v4426
        %4444 = vmatprep.subr.bf16.mxu0 0
        %4445 = vmatpush1.bf16.xpose.msra.mxu0 %v4428
        %4446 = vmatprep.subr.bf16.mxu0 0
        %4447 = vmatpush1.bf16.xpose.msra.mxu0 %v4429
        %4448 = vmatprep.subr.bf16.mxu0 0
        %4449 = vmatpush1.bf16.xpose.msra.mxu0 %v4430
        %4450 = vmatprep.subr.bf16.mxu0 0
        %4451 = vmatpush1.bf16.xpose.msra.mxu0 %v4431
        %4452 = vmatprep.subr.bf16.mxu0 0
        %4453 = vmatpush1.bf16.xpose.msra.mxu0 %v4432
        %4454 = vmatprep.subr.bf16.mxu0 0
        %4455 = vmatpush1.bf16.xpose.msra.mxu0 %v4433
        %4456 = vmatprep.subr.bf16.mxu0 0
        %4457 = vmatpush1.bf16.xpose.msra.mxu0 %v4434
        %4458 = vmatprep.subr.bf16.mxu0 0
        %4459 = vmatpush1.bf16.xpose.msra.mxu0 %v4435
        %4460 = vmatprep.subr.bf16.mxu0 0
        %4461 = vmatpush1.bf16.xpose.msra.mxu0 0
        %4462 = vmatprep.subr.bf16.mxu0 0
        %4463 = vmatpush1.bf16.xpose.msra.mxu0 0
        %4464 = vmatprep.subr.bf16.mxu0 0
        %4465 = vmatpush1.bf16.xpose.msra.mxu0 0
        %4466 = vmatprep.subr.bf16.mxu0 0
        %4467 = vmatpush1.bf16.xpose.msra.mxu0 0
        %4468 = vmatprep.subr.bf16.mxu0 0
        %4469 = vmatpush1.bf16.xpose.msra.mxu0 0
        %4470 = vmatprep.subr.bf16.mxu0 0
        %4471 = vmatpush1.bf16.xpose.msra.mxu0 0
        %4472 = vmatprep.subr.bf16.mxu0 0
        %4473 = vmatpush1.bf16.xpose.msra.mxu0 0
        %4474 = vmatprep.subr.bf16.mxu0 0
        %4475 = vmatpush1.bf16.xpose.msra.mxu0 0
        %4476 = vmatprep.mubr.bf16.mxu0 0
        %4477 = vmatmul.mubr.bf16.gmra.mrb[0].mxu0 %v1531
        %v4478 = vpop.f32.mrb[0].mxu0
        %v4479 = vadd.f32 %v2363, %v4478
        %v4480 = vpop.f32.mrb[0].mxu0
        %v4481 = vpop.f32.mrb[0].mxu0
        %v4482 = vpop.f32.mrb[0].mxu0
        %4483 = vdwg.mxu0
        %v4500 = vunpack.c.l.b16 %v1924
        %v4501 = vunpack.c.l.b16 %v1925
        %v4502 = vunpack.c.l.b16 %v1926
        %v4503 = vunpack.c.l.b16 %v1927
        %v4504 = vunpack.c.l.b16 %v1928
        %v4505 = vunpack.c.l.b16 %v1929
        %v4506 = vunpack.c.l.b16 %v1930
        %v4507 = vunpack.c.l.b16 %v1931
        %v4508 = vunpack.c.l.b16 %v1932
        %v4509 = vunpack.c.l.b16 %v1933
        %v4510 = vunpack.c.l.b16 %v1934
        %v4511 = vunpack.c.l.b16 %v1935
        %v4512 = vunpack.c.l.b16 %v1936
        %v4513 = vunpack.c.l.b16 %v1937
        %v4514 = vunpack.c.l.b16 %v1938
        %v4515 = vunpack.c.l.b16 %v1939
        %v4516 = vpack.c.b16 %v4501, %v4500
        %v4517 = vpack.c.b16 %v4503, %v4502
        %v4518 = vpack.c.b16 %v4505, %v4504
        %v4519 = vpack.c.b16 %v4507, %v4506
        %v4520 = vpack.c.b16 %v4509, %v4508
        %v4521 = vpack.c.b16 %v4511, %v4510
        %v4522 = vpack.c.b16 %v4513, %v4512
        %v4523 = vpack.c.b16 %v4515, %v4514
        %4532 = vmatprep.subr.bf16.mxu0 0
        %4533 = vmatpush1.bf16.xpose.msra.mxu0 %v4516
        %4534 = vmatprep.subr.bf16.mxu0 0
        %4535 = vmatpush1.bf16.xpose.msra.mxu0 %v4517
        %4536 = vmatprep.subr.bf16.mxu0 0
        %4537 = vmatpush1.bf16.xpose.msra.mxu0 %v4518
        %4538 = vmatprep.subr.bf16.mxu0 0
        %4539 = vmatpush1.bf16.xpose.msra.mxu0 %v4519
        %4540 = vmatprep.subr.bf16.mxu0 0
        %4541 = vmatpush1.bf16.xpose.msra.mxu0 %v4520
        %4542 = vmatprep.subr.bf16.mxu0 0
        %4543 = vmatpush1.bf16.xpose.msra.mxu0 %v4521
        %4544 = vmatprep.subr.bf16.mxu0 0
        %4545 = vmatpush1.bf16.xpose.msra.mxu0 %v4522
        %4546 = vmatprep.subr.bf16.mxu0 0
        %4547 = vmatpush1.bf16.xpose.msra.mxu0 %v4523
        %4548 = vmatprep.subr.bf16.mxu0 0
        %4549 = vmatpush1.bf16.xpose.msra.mxu0 0
        %4550 = vmatprep.subr.bf16.mxu0 0
        %4551 = vmatpush1.bf16.xpose.msra.mxu0 0
        %4552 = vmatprep.subr.bf16.mxu0 0
        %4553 = vmatpush1.bf16.xpose.msra.mxu0 0
        %4554 = vmatprep.subr.bf16.mxu0 0
        %4555 = vmatpush1.bf16.xpose.msra.mxu0 0
        %4556 = vmatprep.subr.bf16.mxu0 0
        %4557 = vmatpush1.bf16.xpose.msra.mxu0 0
        %4558 = vmatprep.subr.bf16.mxu0 0
        %4559 = vmatpush1.bf16.xpose.msra.mxu0 0
        %4560 = vmatprep.subr.bf16.mxu0 0
        %4561 = vmatpush1.bf16.xpose.msra.mxu0 0
        %4562 = vmatprep.subr.bf16.mxu0 0
        %4563 = vmatpush1.bf16.xpose.msra.mxu0 0
        %4564 = vmatprep.mubr.bf16.mxu0 0
        %4565 = vmatmul.mubr.bf16.gmra.mrb[0].mxu0 %v1532
        %v4566 = vpop.f32.mrb[0].mxu0
        %v4567 = vadd.f32 %v2364, %v4566
        %v4568 = vpop.f32.mrb[0].mxu0
        %v4569 = vpop.f32.mrb[0].mxu0
        %v4570 = vpop.f32.mrb[0].mxu0
        %4571 = vdwg.mxu0
        %v4588 = vunpack.c.l.b16 %v1940
        %v4589 = vunpack.c.l.b16 %v1941
        %v4590 = vunpack.c.l.b16 %v1942
        %v4591 = vunpack.c.l.b16 %v1943
        %v4592 = vunpack.c.l.b16 %v1944
        %v4593 = vunpack.c.l.b16 %v1945
        %v4594 = vunpack.c.l.b16 %v1946
        %v4595 = vunpack.c.l.b16 %v1947
        %v4596 = vunpack.c.l.b16 %v1948
        %v4597 = vunpack.c.l.b16 %v1949
        %v4598 = vunpack.c.l.b16 %v1950
        %v4599 = vunpack.c.l.b16 %v1951
        %v4600 = vunpack.c.l.b16 %v1952
        %v4601 = vunpack.c.l.b16 %v1953
        %v4602 = vunpack.c.l.b16 %v1954
        %v4603 = vunpack.c.l.b16 %v1955
        %v4604 = vpack.c.b16 %v4589, %v4588
        %v4605 = vpack.c.b16 %v4591, %v4590
        %v4606 = vpack.c.b16 %v4593, %v4592
        %v4607 = vpack.c.b16 %v4595, %v4594
        %v4608 = vpack.c.b16 %v4597, %v4596
        %v4609 = vpack.c.b16 %v4599, %v4598
        %v4610 = vpack.c.b16 %v4601, %v4600
        %v4611 = vpack.c.b16 %v4603, %v4602
        %4620 = vmatprep.subr.bf16.mxu0 0
        %4621 = vmatpush1.bf16.xpose.msra.mxu0 %v4604
        %4622 = vmatprep.subr.bf16.mxu0 0
        %4623 = vmatpush1.bf16.xpose.msra.mxu0 %v4605
        %4624 = vmatprep.subr.bf16.mxu0 0
        %4625 = vmatpush1.bf16.xpose.msra.mxu0 %v4606
        %4626 = vmatprep.subr.bf16.mxu0 0
        %4627 = vmatpush1.bf16.xpose.msra.mxu0 %v4607
        %4628 = vmatprep.subr.bf16.mxu0 0
        %4629 = vmatpush1.bf16.xpose.msra.mxu0 %v4608
        %4630 = vmatprep.subr.bf16.mxu0 0
        %4631 = vmatpush1.bf16.xpose.msra.mxu0 %v4609
        %4632 = vmatprep.subr.bf16.mxu0 0
        %4633 = vmatpush1.bf16.xpose.msra.mxu0 %v4610
        %4634 = vmatprep.subr.bf16.mxu0 0
        %4635 = vmatpush1.bf16.xpose.msra.mxu0 %v4611
        %4636 = vmatprep.subr.bf16.mxu0 0
        %4637 = vmatpush1.bf16.xpose.msra.mxu0 0
        %4638 = vmatprep.subr.bf16.mxu0 0
        %4639 = vmatpush1.bf16.xpose.msra.mxu0 0
        %4640 = vmatprep.subr.bf16.mxu0 0
        %4641 = vmatpush1.bf16.xpose.msra.mxu0 0
        %4642 = vmatprep.subr.bf16.mxu0 0
        %4643 = vmatpush1.bf16.xpose.msra.mxu0 0
        %4644 = vmatprep.subr.bf16.mxu0 0
        %4645 = vmatpush1.bf16.xpose.msra.mxu0 0
        %4646 = vmatprep.subr.bf16.mxu0 0
        %4647 = vmatpush1.bf16.xpose.msra.mxu0 0
        %4648 = vmatprep.subr.bf16.mxu0 0
        %4649 = vmatpush1.bf16.xpose.msra.mxu0 0
        %4650 = vmatprep.subr.bf16.mxu0 0
        %4651 = vmatpush1.bf16.xpose.msra.mxu0 0
        %4652 = vmatprep.mubr.bf16.mxu0 0
        %4653 = vmatmul.mubr.bf16.gmra.mrb[0].mxu0 %v1533
        %v4654 = vpop.f32.mrb[0].mxu0
        %v4655 = vadd.f32 %v2365, %v4654
        %v4656 = vpop.f32.mrb[0].mxu0
        %v4657 = vpop.f32.mrb[0].mxu0
        %v4658 = vpop.f32.mrb[0].mxu0
        %4659 = vdwg.mxu0
        %v4676 = vunpack.c.l.b16 %v1956
        %v4677 = vunpack.c.l.b16 %v1957
        %v4678 = vunpack.c.l.b16 %v1958
        %v4679 = vunpack.c.l.b16 %v1959
        %v4680 = vunpack.c.l.b16 %v1960
        %v4681 = vunpack.c.l.b16 %v1961
        %v4682 = vunpack.c.l.b16 %v1962
        %v4683 = vunpack.c.l.b16 %v1963
        %v4684 = vunpack.c.l.b16 %v1964
        %v4685 = vunpack.c.l.b16 %v1965
        %v4686 = vunpack.c.l.b16 %v1966
        %v4687 = vunpack.c.l.b16 %v1967
        %v4688 = vunpack.c.l.b16 %v1968
        %v4689 = vunpack.c.l.b16 %v1969
        %v4690 = vunpack.c.l.b16 %v1970
        %v4691 = vunpack.c.l.b16 %v1971
        %v4692 = vpack.c.b16 %v4677, %v4676
        %v4693 = vpack.c.b16 %v4679, %v4678
        %v4694 = vpack.c.b16 %v4681, %v4680
        %v4695 = vpack.c.b16 %v4683, %v4682
        %v4696 = vpack.c.b16 %v4685, %v4684
        %v4697 = vpack.c.b16 %v4687, %v4686
        %v4698 = vpack.c.b16 %v4689, %v4688
        %v4699 = vpack.c.b16 %v4691, %v4690
        %4708 = vmatprep.subr.bf16.mxu0 0
        %4709 = vmatpush1.bf16.xpose.msra.mxu0 %v4692
        %4710 = vmatprep.subr.bf16.mxu0 0
        %4711 = vmatpush1.bf16.xpose.msra.mxu0 %v4693
        %4712 = vmatprep.subr.bf16.mxu0 0
        %4713 = vmatpush1.bf16.xpose.msra.mxu0 %v4694
        %4714 = vmatprep.subr.bf16.mxu0 0
        %4715 = vmatpush1.bf16.xpose.msra.mxu0 %v4695
        %4716 = vmatprep.subr.bf16.mxu0 0
        %4717 = vmatpush1.bf16.xpose.msra.mxu0 %v4696
        %4718 = vmatprep.subr.bf16.mxu0 0
        %4719 = vmatpush1.bf16.xpose.msra.mxu0 %v4697
        %4720 = vmatprep.subr.bf16.mxu0 0
        %4721 = vmatpush1.bf16.xpose.msra.mxu0 %v4698
        %4722 = vmatprep.subr.bf16.mxu0 0
        %4723 = vmatpush1.bf16.xpose.msra.mxu0 %v4699
        %4724 = vmatprep.subr.bf16.mxu0 0
        %4725 = vmatpush1.bf16.xpose.msra.mxu0 0
        %4726 = vmatprep.subr.bf16.mxu0 0
        %4727 = vmatpush1.bf16.xpose.msra.mxu0 0
        %4728 = vmatprep.subr.bf16.mxu0 0
        %4729 = vmatpush1.bf16.xpose.msra.mxu0 0
        %4730 = vmatprep.subr.bf16.mxu0 0
        %4731 = vmatpush1.bf16.xpose.msra.mxu0 0
        %4732 = vmatprep.subr.bf16.mxu0 0
        %4733 = vmatpush1.bf16.xpose.msra.mxu0 0
        %4734 = vmatprep.subr.bf16.mxu0 0
        %4735 = vmatpush1.bf16.xpose.msra.mxu0 0
        %4736 = vmatprep.subr.bf16.mxu0 0
        %4737 = vmatpush1.bf16.xpose.msra.mxu0 0
        %4738 = vmatprep.subr.bf16.mxu0 0
        %4739 = vmatpush1.bf16.xpose.msra.mxu0 0
        %4740 = vmatprep.mubr.bf16.mxu0 0
        %4741 = vmatmul.mubr.bf16.gmra.mrb[0].mxu0 %v1534
        %v4742 = vpop.f32.mrb[0].mxu0
        %v4743 = vadd.f32 %v2366, %v4742
        %v4744 = vpop.f32.mrb[0].mxu0
        %v4745 = vpop.f32.mrb[0].mxu0
        %v4746 = vpop.f32.mrb[0].mxu0
        %4747 = vdwg.mxu0
        %v4764 = vunpack.c.l.b16 %v1972
        %v4765 = vunpack.c.l.b16 %v1973
        %v4766 = vunpack.c.l.b16 %v1974
        %v4767 = vunpack.c.l.b16 %v1975
        %v4768 = vunpack.c.l.b16 %v1976
        %v4769 = vunpack.c.l.b16 %v1977
        %v4770 = vunpack.c.l.b16 %v1978
        %v4771 = vunpack.c.l.b16 %v1979
        %v4772 = vunpack.c.l.b16 %v1980
        %v4773 = vunpack.c.l.b16 %v1981
        %v4774 = vunpack.c.l.b16 %v1982
        %v4775 = vunpack.c.l.b16 %v1983
        %v4776 = vunpack.c.l.b16 %v1984
        %v4777 = vunpack.c.l.b16 %v1985
        %v4778 = vunpack.c.l.b16 %v1986
        %v4779 = vunpack.c.l.b16 %v1987
        %v4780 = vpack.c.b16 %v4765, %v4764
        %v4781 = vpack.c.b16 %v4767, %v4766
        %v4782 = vpack.c.b16 %v4769, %v4768
        %v4783 = vpack.c.b16 %v4771, %v4770
        %v4784 = vpack.c.b16 %v4773, %v4772
        %v4785 = vpack.c.b16 %v4775, %v4774
        %v4786 = vpack.c.b16 %v4777, %v4776
        %v4787 = vpack.c.b16 %v4779, %v4778
        %4796 = vmatprep.subr.bf16.mxu0 0
        %4797 = vmatpush1.bf16.xpose.msra.mxu0 %v4780
        %4798 = vmatprep.subr.bf16.mxu0 0
        %4799 = vmatpush1.bf16.xpose.msra.mxu0 %v4781
        %4800 = vmatprep.subr.bf16.mxu0 0
        %4801 = vmatpush1.bf16.xpose.msra.mxu0 %v4782
        %4802 = vmatprep.subr.bf16.mxu0 0
        %4803 = vmatpush1.bf16.xpose.msra.mxu0 %v4783
        %4804 = vmatprep.subr.bf16.mxu0 0
        %4805 = vmatpush1.bf16.xpose.msra.mxu0 %v4784
        %4806 = vmatprep.subr.bf16.mxu0 0
        %4807 = vmatpush1.bf16.xpose.msra.mxu0 %v4785
        %4808 = vmatprep.subr.bf16.mxu0 0
        %4809 = vmatpush1.bf16.xpose.msra.mxu0 %v4786
        %4810 = vmatprep.subr.bf16.mxu0 0
        %4811 = vmatpush1.bf16.xpose.msra.mxu0 %v4787
        %4812 = vmatprep.subr.bf16.mxu0 0
        %4813 = vmatpush1.bf16.xpose.msra.mxu0 0
        %4814 = vmatprep.subr.bf16.mxu0 0
        %4815 = vmatpush1.bf16.xpose.msra.mxu0 0
        %4816 = vmatprep.subr.bf16.mxu0 0
        %4817 = vmatpush1.bf16.xpose.msra.mxu0 0
        %4818 = vmatprep.subr.bf16.mxu0 0
        %4819 = vmatpush1.bf16.xpose.msra.mxu0 0
        %4820 = vmatprep.subr.bf16.mxu0 0
        %4821 = vmatpush1.bf16.xpose.msra.mxu0 0
        %4822 = vmatprep.subr.bf16.mxu0 0
        %4823 = vmatpush1.bf16.xpose.msra.mxu0 0
        %4824 = vmatprep.subr.bf16.mxu0 0
        %4825 = vmatpush1.bf16.xpose.msra.mxu0 0
        %4826 = vmatprep.subr.bf16.mxu0 0
        %4827 = vmatpush1.bf16.xpose.msra.mxu0 0
        %4828 = vmatprep.mubr.bf16.mxu0 0
        %4829 = vmatmul.mubr.bf16.gmra.mrb[0].mxu0 %v1535
        %v4830 = vpop.f32.mrb[0].mxu0
        %v4831 = vadd.f32 %v2367, %v4830
        %v4832 = vpop.f32.mrb[0].mxu0
        %v4833 = vpop.f32.mrb[0].mxu0
        %v4834 = vpop.f32.mrb[0].mxu0
        %4835 = vdwg.mxu0
        %v4852 = vunpack.c.l.b16 %v1988
        %v4853 = vunpack.c.l.b16 %v1989
        %v4854 = vunpack.c.l.b16 %v1990
        %v4855 = vunpack.c.l.b16 %v1991
        %v4856 = vunpack.c.l.b16 %v1992
        %v4857 = vunpack.c.l.b16 %v1993
        %v4858 = vunpack.c.l.b16 %v1994
        %v4859 = vunpack.c.l.b16 %v1995
        %v4860 = vunpack.c.l.b16 %v1996
        %v4861 = vunpack.c.l.b16 %v1997
        %v4862 = vunpack.c.l.b16 %v1998
        %v4863 = vunpack.c.l.b16 %v1999
        %v4864 = vunpack.c.l.b16 %v2000
        %v4865 = vunpack.c.l.b16 %v2001
        %v4866 = vunpack.c.l.b16 %v2002
        %v4867 = vunpack.c.l.b16 %v2003
        %v4868 = vpack.c.b16 %v4853, %v4852
        %v4869 = vpack.c.b16 %v4855, %v4854
        %v4870 = vpack.c.b16 %v4857, %v4856
        %v4871 = vpack.c.b16 %v4859, %v4858
        %v4872 = vpack.c.b16 %v4861, %v4860
        %v4873 = vpack.c.b16 %v4863, %v4862
        %v4874 = vpack.c.b16 %v4865, %v4864
        %v4875 = vpack.c.b16 %v4867, %v4866
        %4884 = vmatprep.subr.bf16.mxu0 0
        %4885 = vmatpush1.bf16.xpose.msra.mxu0 %v4868
        %4886 = vmatprep.subr.bf16.mxu0 0
        %4887 = vmatpush1.bf16.xpose.msra.mxu0 %v4869
        %4888 = vmatprep.subr.bf16.mxu0 0
        %4889 = vmatpush1.bf16.xpose.msra.mxu0 %v4870
        %4890 = vmatprep.subr.bf16.mxu0 0
        %4891 = vmatpush1.bf16.xpose.msra.mxu0 %v4871
        %4892 = vmatprep.subr.bf16.mxu0 0
        %4893 = vmatpush1.bf16.xpose.msra.mxu0 %v4872
        %4894 = vmatprep.subr.bf16.mxu0 0
        %4895 = vmatpush1.bf16.xpose.msra.mxu0 %v4873
        %4896 = vmatprep.subr.bf16.mxu0 0
        %4897 = vmatpush1.bf16.xpose.msra.mxu0 %v4874
        %4898 = vmatprep.subr.bf16.mxu0 0
        %4899 = vmatpush1.bf16.xpose.msra.mxu0 %v4875
        %4900 = vmatprep.subr.bf16.mxu0 0
        %4901 = vmatpush1.bf16.xpose.msra.mxu0 0
        %4902 = vmatprep.subr.bf16.mxu0 0
        %4903 = vmatpush1.bf16.xpose.msra.mxu0 0
        %4904 = vmatprep.subr.bf16.mxu0 0
        %4905 = vmatpush1.bf16.xpose.msra.mxu0 0
        %4906 = vmatprep.subr.bf16.mxu0 0
        %4907 = vmatpush1.bf16.xpose.msra.mxu0 0
        %4908 = vmatprep.subr.bf16.mxu0 0
        %4909 = vmatpush1.bf16.xpose.msra.mxu0 0
        %4910 = vmatprep.subr.bf16.mxu0 0
        %4911 = vmatpush1.bf16.xpose.msra.mxu0 0
        %4912 = vmatprep.subr.bf16.mxu0 0
        %4913 = vmatpush1.bf16.xpose.msra.mxu0 0
        %4914 = vmatprep.subr.bf16.mxu0 0
        %4915 = vmatpush1.bf16.xpose.msra.mxu0 0
        %4916 = vmatprep.mubr.bf16.mxu0 0
        %4917 = vmatmul.mubr.bf16.gmra.mrb[0].mxu0 %v1536
        %v4918 = vpop.f32.mrb[0].mxu0
        %v4919 = vadd.f32 %v2368, %v4918
        %v4920 = vpop.f32.mrb[0].mxu0
        %v4921 = vpop.f32.mrb[0].mxu0
        %v4922 = vpop.f32.mrb[0].mxu0
        %4923 = vdwg.mxu0
        %v4940 = vunpack.c.l.b16 %v2004
        %v4941 = vunpack.c.l.b16 %v2005
        %v4942 = vunpack.c.l.b16 %v2006
        %v4943 = vunpack.c.l.b16 %v2007
        %v4944 = vunpack.c.l.b16 %v2008
        %v4945 = vunpack.c.l.b16 %v2009
        %v4946 = vunpack.c.l.b16 %v2010
        %v4947 = vunpack.c.l.b16 %v2011
        %v4948 = vunpack.c.l.b16 %v2012
        %v4949 = vunpack.c.l.b16 %v2013
        %v4950 = vunpack.c.l.b16 %v2014
        %v4951 = vunpack.c.l.b16 %v2015
        %v4952 = vunpack.c.l.b16 %v2016
        %v4953 = vunpack.c.l.b16 %v2017
        %v4954 = vunpack.c.l.b16 %v2018
        %v4955 = vunpack.c.l.b16 %v2019
        %v4956 = vpack.c.b16 %v4941, %v4940
        %v4957 = vpack.c.b16 %v4943, %v4942
        %v4958 = vpack.c.b16 %v4945, %v4944
        %v4959 = vpack.c.b16 %v4947, %v4946
        %v4960 = vpack.c.b16 %v4949, %v4948
        %v4961 = vpack.c.b16 %v4951, %v4950
        %v4962 = vpack.c.b16 %v4953, %v4952
        %v4963 = vpack.c.b16 %v4955, %v4954
        %4972 = vmatprep.subr.bf16.mxu0 0
        %4973 = vmatpush1.bf16.xpose.msra.mxu0 %v4956
        %4974 = vmatprep.subr.bf16.mxu0 0
        %4975 = vmatpush1.bf16.xpose.msra.mxu0 %v4957
        %4976 = vmatprep.subr.bf16.mxu0 0
        %4977 = vmatpush1.bf16.xpose.msra.mxu0 %v4958
        %4978 = vmatprep.subr.bf16.mxu0 0
        %4979 = vmatpush1.bf16.xpose.msra.mxu0 %v4959
        %4980 = vmatprep.subr.bf16.mxu0 0
        %4981 = vmatpush1.bf16.xpose.msra.mxu0 %v4960
        %4982 = vmatprep.subr.bf16.mxu0 0
        %4983 = vmatpush1.bf16.xpose.msra.mxu0 %v4961
        %4984 = vmatprep.subr.bf16.mxu0 0
        %4985 = vmatpush1.bf16.xpose.msra.mxu0 %v4962
        %4986 = vmatprep.subr.bf16.mxu0 0
        %4987 = vmatpush1.bf16.xpose.msra.mxu0 %v4963
        %4988 = vmatprep.subr.bf16.mxu0 0
        %4989 = vmatpush1.bf16.xpose.msra.mxu0 0
        %4990 = vmatprep.subr.bf16.mxu0 0
        %4991 = vmatpush1.bf16.xpose.msra.mxu0 0
        %4992 = vmatprep.subr.bf16.mxu0 0
        %4993 = vmatpush1.bf16.xpose.msra.mxu0 0
        %4994 = vmatprep.subr.bf16.mxu0 0
        %4995 = vmatpush1.bf16.xpose.msra.mxu0 0
        %4996 = vmatprep.subr.bf16.mxu0 0
        %4997 = vmatpush1.bf16.xpose.msra.mxu0 0
        %4998 = vmatprep.subr.bf16.mxu0 0
        %4999 = vmatpush1.bf16.xpose.msra.mxu0 0
        %5000 = vmatprep.subr.bf16.mxu0 0
        %5001 = vmatpush1.bf16.xpose.msra.mxu0 0
        %5002 = vmatprep.subr.bf16.mxu0 0
        %5003 = vmatpush1.bf16.xpose.msra.mxu0 0
        %5004 = vmatprep.mubr.bf16.mxu0 0
        %5005 = vmatmul.mubr.bf16.gmra.mrb[0].mxu0 %v1537
        %v5006 = vpop.f32.mrb[0].mxu0
        %v5007 = vadd.f32 %v2369, %v5006
        %v5008 = vpop.f32.mrb[0].mxu0
        %v5009 = vpop.f32.mrb[0].mxu0
        %v5010 = vpop.f32.mrb[0].mxu0
        %5011 = vdwg.mxu0
        %v5028 = vunpack.c.l.b16 %v2020
        %v5029 = vunpack.c.l.b16 %v2021
        %v5030 = vunpack.c.l.b16 %v2022
        %v5031 = vunpack.c.l.b16 %v2023
        %v5032 = vunpack.c.l.b16 %v2024
        %v5033 = vunpack.c.l.b16 %v2025
        %v5034 = vunpack.c.l.b16 %v2026
        %v5035 = vunpack.c.l.b16 %v2027
        %v5036 = vunpack.c.l.b16 %v2028
        %v5037 = vunpack.c.l.b16 %v2029
        %v5038 = vunpack.c.l.b16 %v2030
        %v5039 = vunpack.c.l.b16 %v2031
        %v5040 = vunpack.c.l.b16 %v2032
        %v5041 = vunpack.c.l.b16 %v2033
        %v5042 = vunpack.c.l.b16 %v2034
        %v5043 = vunpack.c.l.b16 %v2035
        %v5044 = vpack.c.b16 %v5029, %v5028
        %v5045 = vpack.c.b16 %v5031, %v5030
        %v5046 = vpack.c.b16 %v5033, %v5032
        %v5047 = vpack.c.b16 %v5035, %v5034
        %v5048 = vpack.c.b16 %v5037, %v5036
        %v5049 = vpack.c.b16 %v5039, %v5038
        %v5050 = vpack.c.b16 %v5041, %v5040
        %v5051 = vpack.c.b16 %v5043, %v5042
        %5060 = vmatprep.subr.bf16.mxu0 0
        %5061 = vmatpush1.bf16.xpose.msra.mxu0 %v5044
        %5062 = vmatprep.subr.bf16.mxu0 0
        %5063 = vmatpush1.bf16.xpose.msra.mxu0 %v5045
        %5064 = vmatprep.subr.bf16.mxu0 0
        %5065 = vmatpush1.bf16.xpose.msra.mxu0 %v5046
        %5066 = vmatprep.subr.bf16.mxu0 0
        %5067 = vmatpush1.bf16.xpose.msra.mxu0 %v5047
        %5068 = vmatprep.subr.bf16.mxu0 0
        %5069 = vmatpush1.bf16.xpose.msra.mxu0 %v5048
        %5070 = vmatprep.subr.bf16.mxu0 0
        %5071 = vmatpush1.bf16.xpose.msra.mxu0 %v5049
        %5072 = vmatprep.subr.bf16.mxu0 0
        %5073 = vmatpush1.bf16.xpose.msra.mxu0 %v5050
        %5074 = vmatprep.subr.bf16.mxu0 0
        %5075 = vmatpush1.bf16.xpose.msra.mxu0 %v5051
        %5076 = vmatprep.subr.bf16.mxu0 0
        %5077 = vmatpush1.bf16.xpose.msra.mxu0 0
        %5078 = vmatprep.subr.bf16.mxu0 0
        %5079 = vmatpush1.bf16.xpose.msra.mxu0 0
        %5080 = vmatprep.subr.bf16.mxu0 0
        %5081 = vmatpush1.bf16.xpose.msra.mxu0 0
        %5082 = vmatprep.subr.bf16.mxu0 0
        %5083 = vmatpush1.bf16.xpose.msra.mxu0 0
        %5084 = vmatprep.subr.bf16.mxu0 0
        %5085 = vmatpush1.bf16.xpose.msra.mxu0 0
        %5086 = vmatprep.subr.bf16.mxu0 0
        %5087 = vmatpush1.bf16.xpose.msra.mxu0 0
        %5088 = vmatprep.subr.bf16.mxu0 0
        %5089 = vmatpush1.bf16.xpose.msra.mxu0 0
        %5090 = vmatprep.subr.bf16.mxu0 0
        %5091 = vmatpush1.bf16.xpose.msra.mxu0 0
        %5092 = vmatprep.mubr.bf16.mxu0 0
        %5093 = vmatmul.mubr.bf16.gmra.mrb[0].mxu0 %v1538
        %v5094 = vpop.f32.mrb[0].mxu0
        %v5095 = vadd.f32 %v2370, %v5094
        %v5096 = vpop.f32.mrb[0].mxu0
        %v5097 = vpop.f32.mrb[0].mxu0
        %v5098 = vpop.f32.mrb[0].mxu0
        %5099 = vdwg.mxu0
        %v5116 = vunpack.c.l.b16 %v2036
        %v5117 = vunpack.c.l.b16 %v2037
        %v5118 = vunpack.c.l.b16 %v2038
        %v5119 = vunpack.c.l.b16 %v2039
        %v5120 = vunpack.c.l.b16 %v2040
        %v5121 = vunpack.c.l.b16 %v2041
        %v5122 = vunpack.c.l.b16 %v2042
        %v5123 = vunpack.c.l.b16 %v2043
        %v5124 = vunpack.c.l.b16 %v2044
        %v5125 = vunpack.c.l.b16 %v2045
        %v5126 = vunpack.c.l.b16 %v2046
        %v5127 = vunpack.c.l.b16 %v2047
        %v5128 = vunpack.c.l.b16 %v2048
        %v5129 = vunpack.c.l.b16 %v2049
        %v5130 = vunpack.c.l.b16 %v2050
        %v5131 = vunpack.c.l.b16 %v2051
        %v5132 = vpack.c.b16 %v5117, %v5116
        %v5133 = vpack.c.b16 %v5119, %v5118
        %v5134 = vpack.c.b16 %v5121, %v5120
        %v5135 = vpack.c.b16 %v5123, %v5122
        %v5136 = vpack.c.b16 %v5125, %v5124
        %v5137 = vpack.c.b16 %v5127, %v5126
        %v5138 = vpack.c.b16 %v5129, %v5128
        %v5139 = vpack.c.b16 %v5131, %v5130
        %5148 = vmatprep.subr.bf16.mxu0 0
        %5149 = vmatpush1.bf16.xpose.msra.mxu0 %v5132
        %5150 = vmatprep.subr.bf16.mxu0 0
        %5151 = vmatpush1.bf16.xpose.msra.mxu0 %v5133
        %5152 = vmatprep.subr.bf16.mxu0 0
        %5153 = vmatpush1.bf16.xpose.msra.mxu0 %v5134
        %5154 = vmatprep.subr.bf16.mxu0 0
        %5155 = vmatpush1.bf16.xpose.msra.mxu0 %v5135
        %5156 = vmatprep.subr.bf16.mxu0 0
        %5157 = vmatpush1.bf16.xpose.msra.mxu0 %v5136
        %5158 = vmatprep.subr.bf16.mxu0 0
        %5159 = vmatpush1.bf16.xpose.msra.mxu0 %v5137
        %5160 = vmatprep.subr.bf16.mxu0 0
        %5161 = vmatpush1.bf16.xpose.msra.mxu0 %v5138
        %5162 = vmatprep.subr.bf16.mxu0 0
        %5163 = vmatpush1.bf16.xpose.msra.mxu0 %v5139
        %5164 = vmatprep.subr.bf16.mxu0 0
        %5165 = vmatpush1.bf16.xpose.msra.mxu0 0
        %5166 = vmatprep.subr.bf16.mxu0 0
        %5167 = vmatpush1.bf16.xpose.msra.mxu0 0
        %5168 = vmatprep.subr.bf16.mxu0 0
        %5169 = vmatpush1.bf16.xpose.msra.mxu0 0
        %5170 = vmatprep.subr.bf16.mxu0 0
        %5171 = vmatpush1.bf16.xpose.msra.mxu0 0
        %5172 = vmatprep.subr.bf16.mxu0 0
        %5173 = vmatpush1.bf16.xpose.msra.mxu0 0
        %5174 = vmatprep.subr.bf16.mxu0 0
        %5175 = vmatpush1.bf16.xpose.msra.mxu0 0
        %5176 = vmatprep.subr.bf16.mxu0 0
        %5177 = vmatpush1.bf16.xpose.msra.mxu0 0
        %5178 = vmatprep.subr.bf16.mxu0 0
        %5179 = vmatpush1.bf16.xpose.msra.mxu0 0
        %5180 = vmatprep.mubr.bf16.mxu0 0
        %5181 = vmatmul.mubr.bf16.gmra.mrb[0].mxu0 %v1539
        %v5182 = vpop.f32.mrb[0].mxu0
        %v5183 = vadd.f32 %v2371, %v5182
        %v5184 = vpop.f32.mrb[0].mxu0
        %v5185 = vpop.f32.mrb[0].mxu0
        %v5186 = vpop.f32.mrb[0].mxu0
        %5187 = vdwg.mxu0
        %v5188 = vmul.f32 %v2455, %v2455
        %v5189 = vmul.f32 %v2543, %v2543
        %v5190 = vmul.f32 %v2631, %v2631
        %v5191 = vmul.f32 %v2719, %v2719
        %v5192 = vmul.f32 %v2807, %v2807
        %v5193 = vmul.f32 %v2895, %v2895
        %v5194 = vmul.f32 %v2983, %v2983
        %v5195 = vmul.f32 %v3071, %v3071
        %v5196 = vmul.f32 %v3159, %v3159
        %v5197 = vmul.f32 %v3247, %v3247
        %v5198 = vmul.f32 %v3335, %v3335
        %v5199 = vmul.f32 %v3423, %v3423
        %v5200 = vmul.f32 %v3511, %v3511
        %v5201 = vmul.f32 %v3599, %v3599
        %v5202 = vmul.f32 %v3687, %v3687
        %v5203 = vmul.f32 %v3775, %v3775
        %v5204 = vmul.f32 %v3863, %v3863
        %v5205 = vmul.f32 %v3951, %v3951
        %v5206 = vmul.f32 %v4039, %v4039
        %v5207 = vmul.f32 %v4127, %v4127
        %v5208 = vmul.f32 %v4215, %v4215
        %v5209 = vmul.f32 %v4303, %v4303
        %v5210 = vmul.f32 %v4391, %v4391
        %v5211 = vmul.f32 %v4479, %v4479
        %v5212 = vmul.f32 %v4567, %v4567
        %v5213 = vmul.f32 %v4655, %v4655
        %v5214 = vmul.f32 %v4743, %v4743
        %v5215 = vmul.f32 %v4831, %v4831
        %v5216 = vmul.f32 %v4919, %v4919
        %v5217 = vmul.f32 %v5007, %v5007
        %v5218 = vmul.f32 %v5095, %v5095
        %v5219 = vmul.f32 %v5183, %v5183
        %v5220 = vmul.f32 %v2455, %v5188
        %v5221 = vmul.f32 %v2543, %v5189
        %v5222 = vmul.f32 %v2631, %v5190
        %v5223 = vmul.f32 %v2719, %v5191
        %v5224 = vmul.f32 %v2807, %v5192
        %v5225 = vmul.f32 %v2895, %v5193
        %v5226 = vmul.f32 %v2983, %v5194
        %v5227 = vmul.f32 %v3071, %v5195
        %v5228 = vmul.f32 %v3159, %v5196
        %v5229 = vmul.f32 %v3247, %v5197
        %v5230 = vmul.f32 %v3335, %v5198
        %v5231 = vmul.f32 %v3423, %v5199
        %v5232 = vmul.f32 %v3511, %v5200
        %v5233 = vmul.f32 %v3599, %v5201
        %v5234 = vmul.f32 %v3687, %v5202
        %v5235 = vmul.f32 %v3775, %v5203
        %v5236 = vmul.f32 %v3863, %v5204
        %v5237 = vmul.f32 %v3951, %v5205
        %v5238 = vmul.f32 %v4039, %v5206
        %v5239 = vmul.f32 %v4127, %v5207
        %v5240 = vmul.f32 %v4215, %v5208
        %v5241 = vmul.f32 %v4303, %v5209
        %v5242 = vmul.f32 %v4391, %v5210
        %v5243 = vmul.f32 %v4479, %v5211
        %v5244 = vmul.f32 %v4567, %v5212
        %v5245 = vmul.f32 %v4655, %v5213
        %v5246 = vmul.f32 %v4743, %v5214
        %v5247 = vmul.f32 %v4831, %v5215
        %v5248 = vmul.f32 %v4919, %v5216
        %v5249 = vmul.f32 %v5007, %v5217
        %v5250 = vmul.f32 %v5095, %v5218
        %v5251 = vmul.f32 %v5183, %v5219
        %v5252 = vmul.f32 %v5220, 0.044715
        %v5253 = vmul.f32 %v5221, 0.044715
        %v5254 = vmul.f32 %v5222, 0.044715
        %v5255 = vmul.f32 %v5223, 0.044715
        %v5256 = vmul.f32 %v5224, 0.044715
        %v5257 = vmul.f32 %v5225, 0.044715
        %v5258 = vmul.f32 %v5226, 0.044715
        %v5259 = vmul.f32 %v5227, 0.044715
        %v5260 = vmul.f32 %v5228, 0.044715
        %v5261 = vmul.f32 %v5229, 0.044715
        %v5262 = vmul.f32 %v5230, 0.044715
        %v5263 = vmul.f32 %v5231, 0.044715
        %v5264 = vmul.f32 %v5232, 0.044715
        %v5265 = vmul.f32 %v5233, 0.044715
        %v5266 = vmul.f32 %v5234, 0.044715
        %v5267 = vmul.f32 %v5235, 0.044715
        %v5268 = vmul.f32 %v5236, 0.044715
        %v5269 = vmul.f32 %v5237, 0.044715
        %v5270 = vmul.f32 %v5238, 0.044715
        %v5271 = vmul.f32 %v5239, 0.044715
        %v5272 = vmul.f32 %v5240, 0.044715
        %v5273 = vmul.f32 %v5241, 0.044715
        %v5274 = vmul.f32 %v5242, 0.044715
        %v5275 = vmul.f32 %v5243, 0.044715
        %v5276 = vmul.f32 %v5244, 0.044715
        %v5277 = vmul.f32 %v5245, 0.044715
        %v5278 = vmul.f32 %v5246, 0.044715
        %v5279 = vmul.f32 %v5247, 0.044715
        %v5280 = vmul.f32 %v5248, 0.044715
        %v5281 = vmul.f32 %v5249, 0.044715
        %v5282 = vmul.f32 %v5250, 0.044715
        %v5283 = vmul.f32 %v5251, 0.044715
        %v5284 = vadd.f32 %v2455, %v5252
        %v5285 = vadd.f32 %v2543, %v5253
        %v5286 = vadd.f32 %v2631, %v5254
        %v5287 = vadd.f32 %v2719, %v5255
        %v5288 = vadd.f32 %v2807, %v5256
        %v5289 = vadd.f32 %v2895, %v5257
        %v5290 = vadd.f32 %v2983, %v5258
        %v5291 = vadd.f32 %v3071, %v5259
        %v5292 = vadd.f32 %v3159, %v5260
        %v5293 = vadd.f32 %v3247, %v5261
        %v5294 = vadd.f32 %v3335, %v5262
        %v5295 = vadd.f32 %v3423, %v5263
        %v5296 = vadd.f32 %v3511, %v5264
        %v5297 = vadd.f32 %v3599, %v5265
        %v5298 = vadd.f32 %v3687, %v5266
        %v5299 = vadd.f32 %v3775, %v5267
        %v5300 = vadd.f32 %v3863, %v5268
        %v5301 = vadd.f32 %v3951, %v5269
        %v5302 = vadd.f32 %v4039, %v5270
        %v5303 = vadd.f32 %v4127, %v5271
        %v5304 = vadd.f32 %v4215, %v5272
        %v5305 = vadd.f32 %v4303, %v5273
        %v5306 = vadd.f32 %v4391, %v5274
        %v5307 = vadd.f32 %v4479, %v5275
        %v5308 = vadd.f32 %v4567, %v5276
        %v5309 = vadd.f32 %v4655, %v5277
        %v5310 = vadd.f32 %v4743, %v5278
        %v5311 = vadd.f32 %v4831, %v5279
        %v5312 = vadd.f32 %v4919, %v5280
        %v5313 = vadd.f32 %v5007, %v5281
        %v5314 = vadd.f32 %v5095, %v5282
        %v5315 = vadd.f32 %v5183, %v5283
        %v5316 = vmul.f32 %v5284, 0.7978846
        %v5317 = vmul.f32 %v5285, 0.7978846
        %v5318 = vmul.f32 %v5286, 0.7978846
        %v5319 = vmul.f32 %v5287, 0.7978846
        %v5320 = vmul.f32 %v5288, 0.7978846
        %v5321 = vmul.f32 %v5289, 0.7978846
        %v5322 = vmul.f32 %v5290, 0.7978846
        %v5323 = vmul.f32 %v5291, 0.7978846
        %v5324 = vmul.f32 %v5292, 0.7978846
        %v5325 = vmul.f32 %v5293, 0.7978846
        %v5326 = vmul.f32 %v5294, 0.7978846
        %v5327 = vmul.f32 %v5295, 0.7978846
        %v5328 = vmul.f32 %v5296, 0.7978846
        %v5329 = vmul.f32 %v5297, 0.7978846
        %v5330 = vmul.f32 %v5298, 0.7978846
        %v5331 = vmul.f32 %v5299, 0.7978846
        %v5332 = vmul.f32 %v5300, 0.7978846
        %v5333 = vmul.f32 %v5301, 0.7978846
        %v5334 = vmul.f32 %v5302, 0.7978846
        %v5335 = vmul.f32 %v5303, 0.7978846
        %v5336 = vmul.f32 %v5304, 0.7978846
        %v5337 = vmul.f32 %v5305, 0.7978846
        %v5338 = vmul.f32 %v5306, 0.7978846
        %v5339 = vmul.f32 %v5307, 0.7978846
        %v5340 = vmul.f32 %v5308, 0.7978846
        %v5341 = vmul.f32 %v5309, 0.7978846
        %v5342 = vmul.f32 %v5310, 0.7978846
        %v5343 = vmul.f32 %v5311, 0.7978846
        %v5344 = vmul.f32 %v5312, 0.7978846
        %v5345 = vmul.f32 %v5313, 0.7978846
        %v5346 = vmul.f32 %v5314, 0.7978846
        %v5347 = vmul.f32 %v5315, 0.7978846
        %v5348 = vtanh.pop %v5316
        %v5349 = vtanh.pop %v5317
        %v5350 = vtanh.pop %v5318
        %v5351 = vtanh.pop %v5319
        %v5352 = vtanh.pop %v5320
        %v5353 = vtanh.pop %v5321
        %v5354 = vtanh.pop %v5322
        %v5355 = vtanh.pop %v5323
        %v5356 = vtanh.pop %v5324
        %v5357 = vtanh.pop %v5325
        %v5358 = vtanh.pop %v5326
        %v5359 = vtanh.pop %v5327
        %v5360 = vtanh.pop %v5328
        %v5361 = vtanh.pop %v5329
        %v5362 = vtanh.pop %v5330
        %v5363 = vtanh.pop %v5331
        %v5364 = vtanh.pop %v5332
        %v5365 = vtanh.pop %v5333
        %v5366 = vtanh.pop %v5334
        %v5367 = vtanh.pop %v5335
        %v5368 = vtanh.pop %v5336
        %v5369 = vtanh.pop %v5337
        %v5370 = vtanh.pop %v5338
        %v5371 = vtanh.pop %v5339
        %v5372 = vtanh.pop %v5340
        %v5373 = vtanh.pop %v5341
        %v5374 = vtanh.pop %v5342
        %v5375 = vtanh.pop %v5343
        %v5376 = vtanh.pop %v5344
        %v5377 = vtanh.pop %v5345
        %v5378 = vtanh.pop %v5346
        %v5379 = vtanh.pop %v5347
        %v5380 = vadd.f32 %v5348, 1.0
        %v5381 = vadd.f32 %v5349, 1.0
        %v5382 = vadd.f32 %v5350, 1.0
        %v5383 = vadd.f32 %v5351, 1.0
        %v5384 = vadd.f32 %v5352, 1.0
        %v5385 = vadd.f32 %v5353, 1.0
        %v5386 = vadd.f32 %v5354, 1.0
        %v5387 = vadd.f32 %v5355, 1.0
        %v5388 = vadd.f32 %v5356, 1.0
        %v5389 = vadd.f32 %v5357, 1.0
        %v5390 = vadd.f32 %v5358, 1.0
        %v5391 = vadd.f32 %v5359, 1.0
        %v5392 = vadd.f32 %v5360, 1.0
        %v5393 = vadd.f32 %v5361, 1.0
        %v5394 = vadd.f32 %v5362, 1.0
        %v5395 = vadd.f32 %v5363, 1.0
        %v5396 = vadd.f32 %v5364, 1.0
        %v5397 = vadd.f32 %v5365, 1.0
        %v5398 = vadd.f32 %v5366, 1.0
        %v5399 = vadd.f32 %v5367, 1.0
        %v5400 = vadd.f32 %v5368, 1.0
        %v5401 = vadd.f32 %v5369, 1.0
        %v5402 = vadd.f32 %v5370, 1.0
        %v5403 = vadd.f32 %v5371, 1.0
        %v5404 = vadd.f32 %v5372, 1.0
        %v5405 = vadd.f32 %v5373, 1.0
        %v5406 = vadd.f32 %v5374, 1.0
        %v5407 = vadd.f32 %v5375, 1.0
        %v5408 = vadd.f32 %v5376, 1.0
        %v5409 = vadd.f32 %v5377, 1.0
        %v5410 = vadd.f32 %v5378, 1.0
        %v5411 = vadd.f32 %v5379, 1.0
        %v5412 = vmul.f32 %v5380, 0.5
        %v5413 = vmul.f32 %v5381, 0.5
        %v5414 = vmul.f32 %v5382, 0.5
        %v5415 = vmul.f32 %v5383, 0.5
        %v5416 = vmul.f32 %v5384, 0.5
        %v5417 = vmul.f32 %v5385, 0.5
        %v5418 = vmul.f32 %v5386, 0.5
        %v5419 = vmul.f32 %v5387, 0.5
        %v5420 = vmul.f32 %v5388, 0.5
        %v5421 = vmul.f32 %v5389, 0.5
        %v5422 = vmul.f32 %v5390, 0.5
        %v5423 = vmul.f32 %v5391, 0.5
        %v5424 = vmul.f32 %v5392, 0.5
        %v5425 = vmul.f32 %v5393, 0.5
        %v5426 = vmul.f32 %v5394, 0.5
        %v5427 = vmul.f32 %v5395, 0.5
        %v5428 = vmul.f32 %v5396, 0.5
        %v5429 = vmul.f32 %v5397, 0.5
        %v5430 = vmul.f32 %v5398, 0.5
        %v5431 = vmul.f32 %v5399, 0.5
        %v5432 = vmul.f32 %v5400, 0.5
        %v5433 = vmul.f32 %v5401, 0.5
        %v5434 = vmul.f32 %v5402, 0.5
        %v5435 = vmul.f32 %v5403, 0.5
        %v5436 = vmul.f32 %v5404, 0.5
        %v5437 = vmul.f32 %v5405, 0.5
        %v5438 = vmul.f32 %v5406, 0.5
        %v5439 = vmul.f32 %v5407, 0.5
        %v5440 = vmul.f32 %v5408, 0.5
        %v5441 = vmul.f32 %v5409, 0.5
        %v5442 = vmul.f32 %v5410, 0.5
        %v5443 = vmul.f32 %v5411, 0.5
        %v5444 = vmul.f32 %v2455, %v5412
        %v5445 = vmul.f32 %v2543, %v5413
        %v5446 = vmul.f32 %v2631, %v5414
        %v5447 = vmul.f32 %v2719, %v5415
        %v5448 = vmul.f32 %v2807, %v5416
        %v5449 = vmul.f32 %v2895, %v5417
        %v5450 = vmul.f32 %v2983, %v5418
        %v5451 = vmul.f32 %v3071, %v5419
        %v5452 = vmul.f32 %v3159, %v5420
        %v5453 = vmul.f32 %v3247, %v5421
        %v5454 = vmul.f32 %v3335, %v5422
        %v5455 = vmul.f32 %v3423, %v5423
        %v5456 = vmul.f32 %v3511, %v5424
        %v5457 = vmul.f32 %v3599, %v5425
        %v5458 = vmul.f32 %v3687, %v5426
        %v5459 = vmul.f32 %v3775, %v5427
        %v5460 = vmul.f32 %v3863, %v5428
        %v5461 = vmul.f32 %v3951, %v5429
        %v5462 = vmul.f32 %v4039, %v5430
        %v5463 = vmul.f32 %v4127, %v5431
        %v5464 = vmul.f32 %v4215, %v5432
        %v5465 = vmul.f32 %v4303, %v5433
        %v5466 = vmul.f32 %v4391, %v5434
        %v5467 = vmul.f32 %v4479, %v5435
        %v5468 = vmul.f32 %v4567, %v5436
        %v5469 = vmul.f32 %v4655, %v5437
        %v5470 = vmul.f32 %v4743, %v5438
        %v5471 = vmul.f32 %v4831, %v5439
        %v5472 = vmul.f32 %v4919, %v5440
        %v5473 = vmul.f32 %v5007, %v5441
        %v5474 = vmul.f32 %v5095, %v5442
        %v5475 = vmul.f32 %v5183, %v5443
        %v5476 = vpack.c.bf16 %v5444, %v5444
        %v5477 = vpack.c.bf16 %v5445, %v5445
        %v5478 = vpack.c.bf16 %v5446, %v5446
        %v5479 = vpack.c.bf16 %v5447, %v5447
        %v5480 = vpack.c.bf16 %v5448, %v5448
        %v5481 = vpack.c.bf16 %v5449, %v5449
        %v5482 = vpack.c.bf16 %v5450, %v5450
        %v5483 = vpack.c.bf16 %v5451, %v5451
        %v5484 = vpack.c.bf16 %v5452, %v5452
        %v5485 = vpack.c.bf16 %v5453, %v5453
        %v5486 = vpack.c.bf16 %v5454, %v5454
        %v5487 = vpack.c.bf16 %v5455, %v5455
        %v5488 = vpack.c.bf16 %v5456, %v5456
        %v5489 = vpack.c.bf16 %v5457, %v5457
        %v5490 = vpack.c.bf16 %v5458, %v5458
        %v5491 = vpack.c.bf16 %v5459, %v5459
        %v5492 = vpack.c.bf16 %v5460, %v5460
        %v5493 = vpack.c.bf16 %v5461, %v5461
        %v5494 = vpack.c.bf16 %v5462, %v5462
        %v5495 = vpack.c.bf16 %v5463, %v5463
        %v5496 = vpack.c.bf16 %v5464, %v5464
        %v5497 = vpack.c.bf16 %v5465, %v5465
        %v5498 = vpack.c.bf16 %v5466, %v5466
        %v5499 = vpack.c.bf16 %v5467, %v5467
        %v5500 = vpack.c.bf16 %v5468, %v5468
        %v5501 = vpack.c.bf16 %v5469, %v5469
        %v5502 = vpack.c.bf16 %v5470, %v5470
        %v5503 = vpack.c.bf16 %v5471, %v5471
        %v5504 = vpack.c.bf16 %v5472, %v5472
        %v5505 = vpack.c.bf16 %v5473, %v5473
        %v5506 = vpack.c.bf16 %v5474, %v5474
        %v5507 = vpack.c.bf16 %v5475, %v5475
        %5508 = vst [vmem:[%s284] sm:$0x1] %v5476
        %5509 = vst [vmem:[%s284 + $0x1] sm:$0x1] %v5477
        %5510 = vst [vmem:[%s284 + $0x2] sm:$0x1] %v5478
        %5511 = vst [vmem:[%s284 + $0x3] sm:$0x1] %v5479
        %5512 = vst [vmem:[%s284 + $0x4] sm:$0x1] %v5480
        %5513 = vst [vmem:[%s284 + $0x5] sm:$0x1] %v5481
        %5514 = vst [vmem:[%s284 + $0x6] sm:$0x1] %v5482
        %5515 = vst [vmem:[%s284 + $0x7] sm:$0x1] %v5483
        %5516 = vst [vmem:[%s284 + $0x8] sm:$0x1] %v5484
        %5517 = vst [vmem:[%s284 + $0x9] sm:$0x1] %v5485
        %5518 = vst [vmem:[%s284 + $0xa] sm:$0x1] %v5486
        %5519 = vst [vmem:[%s284 + $0xb] sm:$0x1] %v5487
        %5520 = vst [vmem:[%s284 + $0xc] sm:$0x1] %v5488
        %5521 = vst [vmem:[%s284 + $0xd] sm:$0x1] %v5489
        %5522 = vst [vmem:[%s284 + $0xe] sm:$0x1] %v5490
        %5523 = vst [vmem:[%s284 + $0xf] sm:$0x1] %v5491
        %5524 = vst [vmem:[%s284 + $0x10] sm:$0x1] %v5492
        %5525 = vst [vmem:[%s284 + $0x11] sm:$0x1] %v5493
        %5526 = vst [vmem:[%s284 + $0x12] sm:$0x1] %v5494
        %5527 = vst [vmem:[%s284 + $0x13] sm:$0x1] %v5495
        %5528 = vst [vmem:[%s284 + $0x14] sm:$0x1] %v5496
        %5529 = vst [vmem:[%s284 + $0x15] sm:$0x1] %v5497
        %5530 = vst [vmem:[%s284 + $0x16] sm:$0x1] %v5498
        %5531 = vst [vmem:[%s284 + $0x17] sm:$0x1] %v5499
        %5532 = vst [vmem:[%s284 + $0x18] sm:$0x1] %v5500
        %5533 = vst [vmem:[%s284 + $0x19] sm:$0x1] %v5501
        %5534 = vst [vmem:[%s284 + $0x1a] sm:$0x1] %v5502
        %5535 = vst [vmem:[%s284 + $0x1b] sm:$0x1] %v5503
        %5536 = vst [vmem:[%s284 + $0x1c] sm:$0x1] %v5504
        %5537 = vst [vmem:[%s284 + $0x1d] sm:$0x1] %v5505
        %5538 = vst [vmem:[%s284 + $0x1e] sm:$0x1] %v5506
        %5539 = vst [vmem:[%s284 + $0x1f] sm:$0x1] %v5507
        %s5540 = sand.u32 %s127, 1
        %s5541 = scalar_lea.sflag [#allocation4], %s5540
        %s5542 = sand.u32 %s127, 1
        %s5543 = smul.addr %s5542, 32
        %s5544 = scalar_lea.vmem [#allocation10], %s5543
        // Predicated region
        $region53: #{s4block_forward.2} parent=35 // pred_check
          %p5545 = pneg %p137
        $region54: #{s4block_forward.2} parent=35 // pred_check_branch
          %5547 = sbr.rel (%p5545) target = $region56
        $region55: #{s4block_forward.2} parent=35 // pred_region
          %s5549 = ssub.s32 512, 512
          %5550 = vsyncadd %s5541, %s5549
          %s5551 = smul.addr %s25, 32
          %s5552 = smul.addr %s5551, 16
          %s5553 = scalar_lea.hbm %s4, %s5552
          %s5554 = sshll.u32 %s5544, 4
          %s5555 = int_to_ptr.vmem [resolvable:$true] %s5554
          %5560 = dma.vmem_to_hbm [thread:$0]  %s5555, 512, %s5553, %s5541, 16, 16, 1
        $region56: #{s4block_forward.2} parent=35 // pred_fallthru
          _
      $region36: #{s4block_forward.2} parent=5 // pred_fallthru
        _
      %p5561 = scmp.le.s32.totalorder 2, %s20
      // Predicated region
      $region57: #{s4block_forward.2} parent=5 // pred_check
        %p5562 = pneg %p5561
      $region58: #{s4block_forward.2} parent=5 // pred_check_branch
        %5564 = sbr.rel (%p5562) target = $region60
      $region59: #{s4block_forward.2} parent=5 // pred_region
        %s5565 = ssub.s32 %s20, 2
        // Predicated region
        $region61: #{s4block_forward.2} parent=59 // pred_check
          %p5566 = pneg %p143
        $region62: #{s4block_forward.2} parent=59 // pred_check_branch
          %5568 = sbr.rel (%p5566) target = $region64
        $region63: #{s4block_forward.2} parent=59 // pred_region
          %s5569 = sand.u32 %s128, 1
          %s5570 = scalar_lea.sflag [#allocation4], %s5569
          %s5571 = sand.u32 %s128, 1
          %s5572 = smul.addr %s5571, 32
          %s5573 = scalar_lea.vmem [#allocation10], %s5572
          %5574 = dma.done %s5570, 512
        $region64: #{s4block_forward.2} parent=59 // pred_fallthru
          _
      $region60: #{s4block_forward.2} parent=5 // pred_fallthru
        _
    $region6: #{s4block_forward.2} parent=1 // loop_footer
      %s24 = sadd.s32 1, %s20
    $region7: #{s4block_forward.2} parent=1 // loop_footer_branch
      %19 = sbr.rel target = $region3
    $region8: #{s4block_forward.2} parent=1 // loop_exit
      _
    %5575 = vsyncpa [#allocation3], 1
    %s5576 = scalar_lea.sflag [#allocation3], 1
    %5577 = vsyncpa %s5576, 1
    %5578 = vsyncpa [#allocation6], 1
    %s5579 = scalar_lea.sflag [#allocation6], 1
    %5580 = vsyncpa %s5579, 1
    %5581 = vsyncpa [#allocation9], 1
    %5582 = vsyncpa [#allocation4], 1
    %s5583 = scalar_lea.sflag [#allocation4], 1
    %5584 = vsyncpa %s5583, 1

</llo_original>
